<compile_context>
chip_gen: v6e
topology: v6e:2x2x1
jax: 0.10.0
libtpu: 0.0.40
codegen_flags: <defaults>
</compile_context>

<pallas_src>
import jax
import jax.numpy as jnp
import numpy as np
from jax.experimental import pallas as pl
from jax.experimental.pallas import tpu as pltpu


def _lstm_lm_kernel(x_ref, wih_ref, whh_ref, b_ref, wout_ref, bout_ref,
                    out_ref, acts_scr, gates_scr):
    T, Bp, _ = x_ref.shape
    L = wih_ref.shape[0]
    H = whh_ref.shape[1]

    # Layer 0 consumes the embedded tokens; later layers consume the previous
    # layer's hidden states, written back into the same (T, Bp, H) scratch.
    acts_scr[...] = x_ref[...]

    # Fully unroll short sequences (LLO gets the whole dependence chain);
    # fall back to a modest unroll factor for long ones.
    unroll = True if T <= 32 else 8

    for l in range(L):  # static unroll over layers
        # (1) Non-recurrent input projection + bias for ALL timesteps in one
        #     big MXU matmul (M = T*Bp rows) -- completely off the serial path.
        x_all = acts_scr[...].reshape(T * Bp, H)
        g_all = jnp.dot(x_all, wih_ref[l],
                        preferred_element_type=jnp.float32) + b_ref[l]
        gates_scr[...] = g_all.reshape(T, Bp, 4 * H)

        whh_l = whh_ref[l]  # (H, 4H) bf16, resident across the whole scan

        # (2) Sequential recurrence: only h_prev @ W_hh + gate nonlinearities
        #     per step; h/c are loop carries (vregs), not VMEM scratch.
        #     Gate slices are lane-aligned because H is a multiple of 128.
        def step(t, carry):
            h_bf, c = carry  # h in bf16 (MXU operand), c in f32
            g = gates_scr[t] + jnp.dot(h_bf, whh_l,
                                       preferred_element_type=jnp.float32)
            i_g = jax.nn.sigmoid(g[:, 0 * H:1 * H])
            f_g = jax.nn.sigmoid(g[:, 1 * H:2 * H])
            g_g = jnp.tanh(g[:, 2 * H:3 * H])
            o_g = jax.nn.sigmoid(g[:, 3 * H:4 * H])
            c_new = f_g * c + i_g * g_g
            h_new = o_g * jnp.tanh(c_new)
            h_bf_new = h_new.astype(jnp.bfloat16)
            acts_scr[t] = h_bf_new
            return h_bf_new, c_new

        h0_bf = jnp.zeros((Bp, H), jnp.bfloat16)
        c0 = jnp.zeros((Bp, H), jnp.float32)
        jax.lax.fori_loop(0, T, step, (h0_bf, c0), unroll=unroll)

    # (3) Logits head, hoisted out of the time loop: one lane-dense
    #     (T*Bp, H) @ (H, V) matmul + full unmasked store.
    # TODO(synk): for very large vocab, tile over V (or use a separate
    #             'parallel' pallas_call) instead of one monolithic matmul.
    h_all = acts_scr[...].reshape(T * Bp, H)
    logits = jnp.dot(h_all, wout_ref[...],
                     preferred_element_type=jnp.float32) + bout_ref[...]
    out_ref[...] = logits.reshape(out_ref.shape)


def _vmem_bytes_estimate(T, Bp, H, V, L):
    fourH = 4 * H
    total = 0
    total += T * Bp * H * 2                 # x_tm (bf16)
    total += L * H * fourH * 2              # wih (bf16)
    total += L * H * fourH * 2              # whh (bf16)
    total += L * fourH * 4                  # bias (f32)
    total += H * V * 2                      # wout (bf16)
    total += V * 4                          # bout (f32)
    total += T * Bp * V * 4                 # logits out (f32)
    total += T * Bp * H * 2                 # acts scratch (bf16)
    total += T * Bp * fourH * 4             # gates scratch (f32)
    return total


def rnn_lm_forward(tokens, x_lens, params):
    """Forward pass of RnnLm. Returns (logits (B, T, V), x_lens)."""
    emb = params["embedding"]          # (V, D) f32
    wih_t = params["wih_t"]            # (L, D, 4H)   (layer-0 input dim == D == H)
    whh_t = params["whh_t"]            # (L, H, 4H)
    b = params["b"]                    # (L, 4H)      (b_ih + b_hh pre-summed)
    wout_t = params["wout_t"]          # (D, V)
    bout = params["bout"]              # (1, V)

    B, T = tokens.shape
    L, D, fourH = wih_t.shape
    H = fourH // 4
    V = wout_t.shape[1]
    assert D == H, "RnnLm uses input_size == hidden_size == embedding_dim"
    assert H % 128 == 0 and V % 128 == 0, "lane-aligned gate slices / logits"

    # Glue: embedding lookup (gather) stays in plain JAX / XLA.
    x = emb[tokens]                    # (B, T, D) f32

    # Pad batch to the 8-row sublane granule and go time-major so the per-step
    # slice inside the kernel is a cheap leading-axis index.
    Bp = ((B + 7) // 8) * 8
    x = jnp.pad(x, ((0, Bp - B), (0, 0), (0, 0)))
    x_tm = jnp.transpose(x, (1, 0, 2)).astype(jnp.bfloat16)      # (T, Bp, D)

    wih_bf = wih_t.astype(jnp.bfloat16)
    whh_bf = whh_t.astype(jnp.bfloat16)
    wout_bf = wout_t.astype(jnp.bfloat16)
    b3 = b.reshape(L, 1, fourH).astype(jnp.float32)              # (L, 1, 4H)
    bout_f = bout.astype(jnp.float32)                            # (1, V)

    # Give Mosaic enough scoped VMEM for all resident buffers (with headroom),
    # but stay within the smallest physical VMEM across chips (v7x: 64 MiB/TC).
    need = _vmem_bytes_estimate(T, Bp, H, V, L)
    vmem_limit = int(min(max(2 * need, 32 << 20), 64 << 20))

    vmem = pl.BlockSpec(memory_space=pltpu.MemorySpace.VMEM)
    logits_tm = pl.pallas_call(
        _lstm_lm_kernel,
        out_shape=jax.ShapeDtypeStruct((T, Bp, V), jnp.float32),
        in_specs=[vmem, vmem, vmem, vmem, vmem, vmem],
        out_specs=vmem,
        scratch_shapes=[
            pltpu.VMEM((T, Bp, H), jnp.bfloat16),      # per-layer activations
            pltpu.VMEM((T, Bp, fourH), jnp.float32),   # precomputed input gates
        ],
        compiler_params=pltpu.CompilerParams(vmem_limit_bytes=vmem_limit),
    )(x_tm, wih_bf, whh_bf, b3, wout_bf, bout_f)

    logits = jnp.transpose(logits_tm[:, :B, :], (1, 0, 2))       # (B, T, V)
    return logits, x_lens


def init_params(key, num_symbols, embedding_dim, num_layers):
    """Deterministic synthetic parameters matching nn.Embedding/nn.LSTM/nn.Linear shapes."""
    V, D, H, L = num_symbols, embedding_dim, embedding_dim, num_layers
    ks = jax.random.split(key, 8)
    bound = 1.0 / np.sqrt(H)
    emb = jax.random.normal(ks[0], (V, D), jnp.float32)
    # PyTorch LSTM stores weight_ih_l{l}: (4H, in), weight_hh_l{l}: (4H, H);
    # we store their transposes for right-multiplication.
    wih_t = jax.random.uniform(ks[1], (L, D, 4 * H), jnp.float32, -bound, bound)
    whh_t = jax.random.uniform(ks[2], (L, H, 4 * H), jnp.float32, -bound, bound)
    b_ih = jax.random.uniform(ks[3], (L, 4 * H), jnp.float32, -bound, bound)
    b_hh = jax.random.uniform(ks[4], (L, 4 * H), jnp.float32, -bound, bound)
    wout_t = jax.random.uniform(ks[5], (D, V), jnp.float32, -bound, bound)
    bout = jax.random.uniform(ks[6], (1, V), jnp.float32, -bound, bound)
    return {
        "embedding": emb,
        "wih_t": wih_t,
        "whh_t": whh_t,
        "b": b_ih + b_hh,
        "wout_t": wout_t,
        "bout": bout,
    }


def _reference_forward(tokens, x_lens, params):
    """Pure-JAX f32 reference (lax.scan LSTM) for correctness checking."""
    emb = params["embedding"]
    wih_t, whh_t, b = params["wih_t"], params["whh_t"], params["b"]
    wout_t, bout = params["wout_t"], params["bout"]
    L, _, fourH = wih_t.shape
    H = fourH // 4
    x = emb[tokens].astype(jnp.float32)  # (B, T, D)
    B = x.shape[0]

    def layer_scan(x_seq, l):
        def step(carry, x_t):
            h, c = carry
            gates = (jnp.dot(x_t, wih_t[l], precision="highest")
                     + jnp.dot(h, whh_t[l], precision="highest") + b[l])
            i = jax.nn.sigmoid(gates[:, 0 * H:1 * H])
            f = jax.nn.sigmoid(gates[:, 1 * H:2 * H])
            g = jnp.tanh(gates[:, 2 * H:3 * H])
            o = jax.nn.sigmoid(gates[:, 3 * H:4 * H])
            c_new = f * c + i * g
            h_new = o * jnp.tanh(c_new)
            return (h_new, c_new), h_new

        init = (jnp.zeros((B, H), jnp.float32), jnp.zeros((B, H), jnp.float32))
        _, ys = jax.lax.scan(step, init, jnp.swapaxes(x_seq, 0, 1))
        return jnp.swapaxes(ys, 0, 1)

    for l in range(L):
        x = layer_scan(x, l)
    logits = jnp.dot(x, wout_t, precision="highest") + bout[0]
    return logits, x_lens


if __name__ == "__main__":
    B, T = 2, 8
    NUM_SYMBOLS = 128
    EMB_DIM = 128
    NUM_LAYERS = 3

    key = jax.random.PRNGKey(0)
    k_tok, k_par = jax.random.split(key)
    tokens = jax.random.randint(k_tok, (B, T), 0, NUM_SYMBOLS, dtype=jnp.int32)
    x_lens = jnp.array([T, T - 2], dtype=jnp.int32)
    params = init_params(k_par, NUM_SYMBOLS, EMB_DIM, NUM_LAYERS)

    logits, out_lens = jax.jit(rnn_lm_forward)(tokens, x_lens, params)
    logits = jax.block_until_ready(logits)

    ref_logits, _ = _reference_forward(tokens, x_lens, params)
    assert logits.shape == (B, T, NUM_SYMBOLS)
    assert out_lens.shape == (B,)
    # bf16 MXU operands with f32 accumulation vs f32 reference.
    np.testing.assert_allclose(np.asarray(logits), np.asarray(ref_logits),
                               atol=5e-2, rtol=5e-2)

    print("KERNEL_OK")
</pallas_src>

<mosaic_0001>
module attributes {stable_mosaic.version = 11 : i64} {
  func.func @_lstm_lm_kernel(%arg0: memref<8x8x128xbf16, #tpu.memory_space<vmem>>, %arg1: memref<3x128x512xbf16, #tpu.memory_space<vmem>>, %arg2: memref<3x128x512xbf16, #tpu.memory_space<vmem>>, %arg3: memref<3x1x512xf32, #tpu.memory_space<vmem>>, %arg4: memref<128x128xbf16, #tpu.memory_space<vmem>>, %arg5: memref<1x128xf32, #tpu.memory_space<vmem>>, %arg6: memref<8x8x128xf32, #tpu.memory_space<vmem>>, %arg7: memref<8x8x128xbf16, #tpu.memory_space<vmem>>, %arg8: memref<8x8x512xf32, #tpu.memory_space<vmem>>) attributes {dimension_semantics = [], scalar_prefetch = 0 : i64, scratch_operands = 2 : i64, tpu.core_type = #tpu.core_type<tc>} {
    %c0 = arith.constant 0 : index
    %c0_0 = arith.constant 0 : index
    %c0_1 = arith.constant 0 : index
    %0 = vector.load %arg0[%c0, %c0_0, %c0_1] : memref<8x8x128xbf16, #tpu.memory_space<vmem>>, vector<8x8x128xbf16>
    %c0_2 = arith.constant 0 : index
    %c0_3 = arith.constant 0 : index
    %c0_4 = arith.constant 0 : index
    %1 = vector.load %arg7[%c0_2, %c0_3, %c0_4] : memref<8x8x128xbf16, #tpu.memory_space<vmem>>, vector<8x8x128xbf16>
    tpu.vector_store %arg7[%c0_2, %c0_3, %c0_4], %0 {strides = array<i32>} : memref<8x8x128xbf16, #tpu.memory_space<vmem>>, vector<8x8x128xbf16>,
    %c0_5 = arith.constant 0 : index
    %c0_6 = arith.constant 0 : index
    %c0_7 = arith.constant 0 : index
    %2 = vector.load %arg7[%c0_5, %c0_6, %c0_7] : memref<8x8x128xbf16, #tpu.memory_space<vmem>>, vector<8x8x128xbf16>
    %3 = vector.shape_cast %2 : vector<8x8x128xbf16> to vector<64x128xbf16>
    %c0_8 = arith.constant 0 : index
    %c0_9 = arith.constant 0 : index
    %c0_10 = arith.constant 0 : index
    %4 = vector.load %arg1[%c0_8, %c0_9, %c0_10] : memref<3x128x512xbf16, #tpu.memory_space<vmem>>, vector<1x128x512xbf16>
    %5 = vector.shape_cast %4 : vector<1x128x512xbf16> to vector<128x512xbf16>
    %cst = arith.constant dense<0.000000e+00> : vector<64x512xf32>
    %6 = tpu.matmul %3, %5, %cst {dimension_numbers = #tpu.dot_dimension_numbers<[1], [0], [0], [1], [0, 0, 1, 1], [], []>} : vector<64x128xbf16>, vector<128x512xbf16>, vector<64x512xf32> -> vector<64x512xf32>
    %c0_11 = arith.constant 0 : index
    %c0_12 = arith.constant 0 : index
    %c0_13 = arith.constant 0 : index
    %7 = vector.load %arg3[%c0_11, %c0_12, %c0_13] : memref<3x1x512xf32, #tpu.memory_space<vmem>>, vector<1x1x512xf32>
    %8 = vector.shape_cast %7 : vector<1x1x512xf32> to vector<1x512xf32>
    %9 = vector.broadcast %8 : vector<1x512xf32> to vector<64x512xf32>
    %10 = arith.addf %6, %9 : vector<64x512xf32>
    %11 = vector.shape_cast %10 : vector<64x512xf32> to vector<8x8x512xf32>
    %c0_14 = arith.constant 0 : index
    %c0_15 = arith.constant 0 : index
    %c0_16 = arith.constant 0 : index
    %12 = vector.load %arg8[%c0_14, %c0_15, %c0_16] : memref<8x8x512xf32, #tpu.memory_space<vmem>>, vector<8x8x512xf32>
    tpu.vector_store %arg8[%c0_14, %c0_15, %c0_16], %11 {strides = array<i32>} : memref<8x8x512xf32, #tpu.memory_space<vmem>>, vector<8x8x512xf32>,
    %c0_17 = arith.constant 0 : index
    %c0_18 = arith.constant 0 : index
    %c0_19 = arith.constant 0 : index
    %13 = vector.load %arg2[%c0_17, %c0_18, %c0_19] : memref<3x128x512xbf16, #tpu.memory_space<vmem>>, vector<1x128x512xbf16>
    %14 = vector.shape_cast %13 : vector<1x128x512xbf16> to vector<128x512xbf16>
    %cst_20 = arith.constant 0.000000e+00 : bf16
    %15 = vector.broadcast %cst_20 : bf16 to vector<8x128xbf16>
    %cst_21 = arith.constant 0.000000e+00 : f32
    %16 = vector.broadcast %cst_21 : f32 to vector<8x128xf32>
    %c0_i32 = arith.constant 0 : i32
    %17 = arith.index_cast %c0_i32 : i32 to index
    %c0_22 = arith.constant 0 : index
    %c0_23 = arith.constant 0 : index
    %18 = vector.load %arg8[%17, %c0_22, %c0_23] : memref<8x8x512xf32, #tpu.memory_space<vmem>>, vector<1x8x512xf32>
    %19 = vector.shape_cast %18 : vector<1x8x512xf32> to vector<8x512xf32>
    %cst_24 = arith.constant dense<0.000000e+00> : vector<8x512xf32>
    %20 = tpu.matmul %15, %14, %cst_24 {dimension_numbers = #tpu.dot_dimension_numbers<[1], [0], [0], [1], [0, 0, 1, 1], [], []>} : vector<8x128xbf16>, vector<128x512xbf16>, vector<8x512xf32> -> vector<8x512xf32>
    %21 = arith.addf %19, %20 : vector<8x512xf32>
    %22 = vector.extract_strided_slice %21 {offsets = [0, 0], sizes = [8, 128], strides = [1, 1]} : vector<8x512xf32> to vector<8x128xf32>
    %23 = arith.negf %22 : vector<8x128xf32>
    %24 = math.exp %23 : vector<8x128xf32>
    %cst_25 = arith.constant 1.000000e+00 : f32
    %25 = vector.broadcast %cst_25 : f32 to vector<8x128xf32>
    %26 = arith.addf %25, %24 : vector<8x128xf32>
    %27 = arith.divf %25, %26 : vector<8x128xf32>
    %28 = vector.extract_strided_slice %21 {offsets = [0, 128], sizes = [8, 128], strides = [1, 1]} : vector<8x512xf32> to vector<8x128xf32>
    %29 = arith.negf %28 : vector<8x128xf32>
    %30 = math.exp %29 : vector<8x128xf32>
    %cst_26 = arith.constant 1.000000e+00 : f32
    %31 = vector.broadcast %cst_26 : f32 to vector<8x128xf32>
    %32 = arith.addf %31, %30 : vector<8x128xf32>
    %33 = arith.divf %31, %32 : vector<8x128xf32>
    %34 = vector.extract_strided_slice %21 {offsets = [0, 256], sizes = [8, 128], strides = [1, 1]} : vector<8x512xf32> to vector<8x128xf32>
    %35 = math.tanh %34 : vector<8x128xf32>
    %36 = vector.extract_strided_slice %21 {offsets = [0, 384], sizes = [8, 128], strides = [1, 1]} : vector<8x512xf32> to vector<8x128xf32>
    %37 = arith.negf %36 : vector<8x128xf32>
    %38 = math.exp %37 : vector<8x128xf32>
    %cst_27 = arith.constant 1.000000e+00 : f32
    %39 = vector.broadcast %cst_27 : f32 to vector<8x128xf32>
    %40 = arith.addf %39, %38 : vector<8x128xf32>
    %41 = arith.divf %39, %40 : vector<8x128xf32>
    %42 = arith.mulf %33, %16 : vector<8x128xf32>
    %43 = arith.mulf %27, %35 : vector<8x128xf32>
    %44 = arith.addf %42, %43 : vector<8x128xf32>
    %45 = math.tanh %44 : vector<8x128xf32>
    %46 = arith.mulf %41, %45 : vector<8x128xf32>
    %47 = arith.truncf %46 : vector<8x128xf32> to vector<8x128xbf16>
    %48 = arith.index_cast %c0_i32 : i32 to index
    %c0_28 = arith.constant 0 : index
    %c0_29 = arith.constant 0 : index
    %49 = vector.load %arg7[%48, %c0_28, %c0_29] : memref<8x8x128xbf16, #tpu.memory_space<vmem>>, vector<1x8x128xbf16>
    %50 = vector.shape_cast %49 : vector<1x8x128xbf16> to vector<8x128xbf16>
    %51 = vector.shape_cast %47 : vector<8x128xbf16> to vector<1x8x128xbf16>
    tpu.vector_store %arg7[%48, %c0_28, %c0_29], %51 {strides = array<i32>} : memref<8x8x128xbf16, #tpu.memory_space<vmem>>, vector<1x8x128xbf16>,
    %c1_i32 = arith.constant 1 : i32
    %52 = arith.index_cast %c1_i32 : i32 to index
    %c0_30 = arith.constant 0 : index
    %c0_31 = arith.constant 0 : index
    %53 = vector.load %arg8[%52, %c0_30, %c0_31] : memref<8x8x512xf32, #tpu.memory_space<vmem>>, vector<1x8x512xf32>
    %54 = vector.shape_cast %53 : vector<1x8x512xf32> to vector<8x512xf32>
    %cst_32 = arith.constant dense<0.000000e+00> : vector<8x512xf32>
    %55 = tpu.matmul %47, %14, %cst_32 {dimension_numbers = #tpu.dot_dimension_numbers<[1], [0], [0], [1], [0, 0, 1, 1], [], []>} : vector<8x128xbf16>, vector<128x512xbf16>, vector<8x512xf32> -> vector<8x512xf32>
    %56 = arith.addf %54, %55 : vector<8x512xf32>
    %57 = vector.extract_strided_slice %56 {offsets = [0, 0], sizes = [8, 128], strides = [1, 1]} : vector<8x512xf32> to vector<8x128xf32>
    %58 = arith.negf %57 : vector<8x128xf32>
    %59 = math.exp %58 : vector<8x128xf32>
    %cst_33 = arith.constant 1.000000e+00 : f32
    %60 = vector.broadcast %cst_33 : f32 to vector<8x128xf32>
    %61 = arith.addf %60, %59 : vector<8x128xf32>
    %62 = arith.divf %60, %61 : vector<8x128xf32>
    %63 = vector.extract_strided_slice %56 {offsets = [0, 128], sizes = [8, 128], strides = [1, 1]} : vector<8x512xf32> to vector<8x128xf32>
    %64 = arith.negf %63 : vector<8x128xf32>
    %65 = math.exp %64 : vector<8x128xf32>
    %cst_34 = arith.constant 1.000000e+00 : f32
    %66 = vector.broadcast %cst_34 : f32 to vector<8x128xf32>
    %67 = arith.addf %66, %65 : vector<8x128xf32>
    %68 = arith.divf %66, %67 : vector<8x128xf32>
    %69 = vector.extract_strided_slice %56 {offsets = [0, 256], sizes = [8, 128], strides = [1, 1]} : vector<8x512xf32> to vector<8x128xf32>
    %70 = math.tanh %69 : vector<8x128xf32>
    %71 = vector.extract_strided_slice %56 {offsets = [0, 384], sizes = [8, 128], strides = [1, 1]} : vector<8x512xf32> to vector<8x128xf32>
    %72 = arith.negf %71 : vector<8x128xf32>
    %73 = math.exp %72 : vector<8x128xf32>
    %cst_35 = arith.constant 1.000000e+00 : f32
    %74 = vector.broadcast %cst_35 : f32 to vector<8x128xf32>
    %75 = arith.addf %74, %73 : vector<8x128xf32>
    %76 = arith.divf %74, %75 : vector<8x128xf32>
    %77 = arith.mulf %68, %44 : vector<8x128xf32>
    %78 = arith.mulf %62, %70 : vector<8x128xf32>
    %79 = arith.addf %77, %78 : vector<8x128xf32>
    %80 = math.tanh %79 : vector<8x128xf32>
    %81 = arith.mulf %76, %80 : vector<8x128xf32>
    %82 = arith.truncf %81 : vector<8x128xf32> to vector<8x128xbf16>
    %83 = arith.index_cast %c1_i32 : i32 to index
    %c0_36 = arith.constant 0 : index
    %c0_37 = arith.constant 0 : index
    %84 = vector.load %arg7[%83, %c0_36, %c0_37] : memref<8x8x128xbf16, #tpu.memory_space<vmem>>, vector<1x8x128xbf16>
    %85 = vector.shape_cast %84 : vector<1x8x128xbf16> to vector<8x128xbf16>
    %86 = vector.shape_cast %82 : vector<8x128xbf16> to vector<1x8x128xbf16>
    tpu.vector_store %arg7[%83, %c0_36, %c0_37], %86 {strides = array<i32>} : memref<8x8x128xbf16, #tpu.memory_space<vmem>>, vector<1x8x128xbf16>,
    %c2_i32 = arith.constant 2 : i32
    %87 = arith.index_cast %c2_i32 : i32 to index
    %c0_38 = arith.constant 0 : index
    %c0_39 = arith.constant 0 : index
    %88 = vector.load %arg8[%87, %c0_38, %c0_39] : memref<8x8x512xf32, #tpu.memory_space<vmem>>, vector<1x8x512xf32>
    %89 = vector.shape_cast %88 : vector<1x8x512xf32> to vector<8x512xf32>
    %cst_40 = arith.constant dense<0.000000e+00> : vector<8x512xf32>
    %90 = tpu.matmul %82, %14, %cst_40 {dimension_numbers = #tpu.dot_dimension_numbers<[1], [0], [0], [1], [0, 0, 1, 1], [], []>} : vector<8x128xbf16>, vector<128x512xbf16>, vector<8x512xf32> -> vector<8x512xf32>
    %91 = arith.addf %89, %90 : vector<8x512xf32>
    %92 = vector.extract_strided_slice %91 {offsets = [0, 0], sizes = [8, 128], strides = [1, 1]} : vector<8x512xf32> to vector<8x128xf32>
    %93 = arith.negf %92 : vector<8x128xf32>
    %94 = math.exp %93 : vector<8x128xf32>
    %cst_41 = arith.constant 1.000000e+00 : f32
    %95 = vector.broadcast %cst_41 : f32 to vector<8x128xf32>
    %96 = arith.addf %95, %94 : vector<8x128xf32>
    %97 = arith.divf %95, %96 : vector<8x128xf32>
    %98 = vector.extract_strided_slice %91 {offsets = [0, 128], sizes = [8, 128], strides = [1, 1]} : vector<8x512xf32> to vector<8x128xf32>
    %99 = arith.negf %98 : vector<8x128xf32>
    %100 = math.exp %99 : vector<8x128xf32>
    %cst_42 = arith.constant 1.000000e+00 : f32
    %101 = vector.broadcast %cst_42 : f32 to vector<8x128xf32>
    %102 = arith.addf %101, %100 : vector<8x128xf32>
    %103 = arith.divf %101, %102 : vector<8x128xf32>
    %104 = vector.extract_strided_slice %91 {offsets = [0, 256], sizes = [8, 128], strides = [1, 1]} : vector<8x512xf32> to vector<8x128xf32>
    %105 = math.tanh %104 : vector<8x128xf32>
    %106 = vector.extract_strided_slice %91 {offsets = [0, 384], sizes = [8, 128], strides = [1, 1]} : vector<8x512xf32> to vector<8x128xf32>
    %107 = arith.negf %106 : vector<8x128xf32>
    %108 = math.exp %107 : vector<8x128xf32>
    %cst_43 = arith.constant 1.000000e+00 : f32
    %109 = vector.broadcast %cst_43 : f32 to vector<8x128xf32>
    %110 = arith.addf %109, %108 : vector<8x128xf32>
    %111 = arith.divf %109, %110 : vector<8x128xf32>
    %112 = arith.mulf %103, %79 : vector<8x128xf32>
    %113 = arith.mulf %97, %105 : vector<8x128xf32>
    %114 = arith.addf %112, %113 : vector<8x128xf32>
    %115 = math.tanh %114 : vector<8x128xf32>
    %116 = arith.mulf %111, %115 : vector<8x128xf32>
    %117 = arith.truncf %116 : vector<8x128xf32> to vector<8x128xbf16>
    %118 = arith.index_cast %c2_i32 : i32 to index
    %c0_44 = arith.constant 0 : index
    %c0_45 = arith.constant 0 : index
    %119 = vector.load %arg7[%118, %c0_44, %c0_45] : memref<8x8x128xbf16, #tpu.memory_space<vmem>>, vector<1x8x128xbf16>
    %120 = vector.shape_cast %119 : vector<1x8x128xbf16> to vector<8x128xbf16>
    %121 = vector.shape_cast %117 : vector<8x128xbf16> to vector<1x8x128xbf16>
    tpu.vector_store %arg7[%118, %c0_44, %c0_45], %121 {strides = array<i32>} : memref<8x8x128xbf16, #tpu.memory_space<vmem>>, vector<1x8x128xbf16>,
    %c3_i32 = arith.constant 3 : i32
    %122 = arith.index_cast %c3_i32 : i32 to index
    %c0_46 = arith.constant 0 : index
    %c0_47 = arith.constant 0 : index
    %123 = vector.load %arg8[%122, %c0_46, %c0_47] : memref<8x8x512xf32, #tpu.memory_space<vmem>>, vector<1x8x512xf32>
    %124 = vector.shape_cast %123 : vector<1x8x512xf32> to vector<8x512xf32>
    %cst_48 = arith.constant dense<0.000000e+00> : vector<8x512xf32>
    %125 = tpu.matmul %117, %14, %cst_48 {dimension_numbers = #tpu.dot_dimension_numbers<[1], [0], [0], [1], [0, 0, 1, 1], [], []>} : vector<8x128xbf16>, vector<128x512xbf16>, vector<8x512xf32> -> vector<8x512xf32>
    %126 = arith.addf %124, %125 : vector<8x512xf32>
    %127 = vector.extract_strided_slice %126 {offsets = [0, 0], sizes = [8, 128], strides = [1, 1]} : vector<8x512xf32> to vector<8x128xf32>
    %128 = arith.negf %127 : vector<8x128xf32>
    %129 = math.exp %128 : vector<8x128xf32>
    %cst_49 = arith.constant 1.000000e+00 : f32
    %130 = vector.broadcast %cst_49 : f32 to vector<8x128xf32>
    %131 = arith.addf %130, %129 : vector<8x128xf32>
    %132 = arith.divf %130, %131 : vector<8x128xf32>
    %133 = vector.extract_strided_slice %126 {offsets = [0, 128], sizes = [8, 128], strides = [1, 1]} : vector<8x512xf32> to vector<8x128xf32>
    %134 = arith.negf %133 : vector<8x128xf32>
    %135 = math.exp %134 : vector<8x128xf32>
    %cst_50 = arith.constant 1.000000e+00 : f32
    %136 = vector.broadcast %cst_50 : f32 to vector<8x128xf32>
    %137 = arith.addf %136, %135 : vector<8x128xf32>
    %138 = arith.divf %136, %137 : vector<8x128xf32>
    %139 = vector.extract_strided_slice %126 {offsets = [0, 256], sizes = [8, 128], strides = [1, 1]} : vector<8x512xf32> to vector<8x128xf32>
    %140 = math.tanh %139 : vector<8x128xf32>
    %141 = vector.extract_strided_slice %126 {offsets = [0, 384], sizes = [8, 128], strides = [1, 1]} : vector<8x512xf32> to vector<8x128xf32>
    %142 = arith.negf %141 : vector<8x128xf32>
    %143 = math.exp %142 : vector<8x128xf32>
    %cst_51 = arith.constant 1.000000e+00 : f32
    %144 = vector.broadcast %cst_51 : f32 to vector<8x128xf32>
    %145 = arith.addf %144, %143 : vector<8x128xf32>
    %146 = arith.divf %144, %145 : vector<8x128xf32>
    %147 = arith.mulf %138, %114 : vector<8x128xf32>
    %148 = arith.mulf %132, %140 : vector<8x128xf32>
    %149 = arith.addf %147, %148 : vector<8x128xf32>
    %150 = math.tanh %149 : vector<8x128xf32>
    %151 = arith.mulf %146, %150 : vector<8x128xf32>
    %152 = arith.truncf %151 : vector<8x128xf32> to vector<8x128xbf16>
    %153 = arith.index_cast %c3_i32 : i32 to index
    %c0_52 = arith.constant 0 : index
    %c0_53 = arith.constant 0 : index
    %154 = vector.load %arg7[%153, %c0_52, %c0_53] : memref<8x8x128xbf16, #tpu.memory_space<vmem>>, vector<1x8x128xbf16>
    %155 = vector.shape_cast %154 : vector<1x8x128xbf16> to vector<8x128xbf16>
    %156 = vector.shape_cast %152 : vector<8x128xbf16> to vector<1x8x128xbf16>
    tpu.vector_store %arg7[%153, %c0_52, %c0_53], %156 {strides = array<i32>} : memref<8x8x128xbf16, #tpu.memory_space<vmem>>, vector<1x8x128xbf16>,
    %c4_i32 = arith.constant 4 : i32
    %157 = arith.index_cast %c4_i32 : i32 to index
    %c0_54 = arith.constant 0 : index
    %c0_55 = arith.constant 0 : index
    %158 = vector.load %arg8[%157, %c0_54, %c0_55] : memref<8x8x512xf32, #tpu.memory_space<vmem>>, vector<1x8x512xf32>
    %159 = vector.shape_cast %158 : vector<1x8x512xf32> to vector<8x512xf32>
    %cst_56 = arith.constant dense<0.000000e+00> : vector<8x512xf32>
    %160 = tpu.matmul %152, %14, %cst_56 {dimension_numbers = #tpu.dot_dimension_numbers<[1], [0], [0], [1], [0, 0, 1, 1], [], []>} : vector<8x128xbf16>, vector<128x512xbf16>, vector<8x512xf32> -> vector<8x512xf32>
    %161 = arith.addf %159, %160 : vector<8x512xf32>
    %162 = vector.extract_strided_slice %161 {offsets = [0, 0], sizes = [8, 128], strides = [1, 1]} : vector<8x512xf32> to vector<8x128xf32>
    %163 = arith.negf %162 : vector<8x128xf32>
    %164 = math.exp %163 : vector<8x128xf32>
    %cst_57 = arith.constant 1.000000e+00 : f32
    %165 = vector.broadcast %cst_57 : f32 to vector<8x128xf32>
    %166 = arith.addf %165, %164 : vector<8x128xf32>
    %167 = arith.divf %165, %166 : vector<8x128xf32>
    %168 = vector.extract_strided_slice %161 {offsets = [0, 128], sizes = [8, 128], strides = [1, 1]} : vector<8x512xf32> to vector<8x128xf32>
    %169 = arith.negf %168 : vector<8x128xf32>
    %170 = math.exp %169 : vector<8x128xf32>
    %cst_58 = arith.constant 1.000000e+00 : f32
    %171 = vector.broadcast %cst_58 : f32 to vector<8x128xf32>
    %172 = arith.addf %171, %170 : vector<8x128xf32>
    %173 = arith.divf %171, %172 : vector<8x128xf32>
    %174 = vector.extract_strided_slice %161 {offsets = [0, 256], sizes = [8, 128], strides = [1, 1]} : vector<8x512xf32> to vector<8x128xf32>
    %175 = math.tanh %174 : vector<8x128xf32>
    %176 = vector.extract_strided_slice %161 {offsets = [0, 384], sizes = [8, 128], strides = [1, 1]} : vector<8x512xf32> to vector<8x128xf32>
    %177 = arith.negf %176 : vector<8x128xf32>
    %178 = math.exp %177 : vector<8x128xf32>
    %cst_59 = arith.constant 1.000000e+00 : f32
    %179 = vector.broadcast %cst_59 : f32 to vector<8x128xf32>
    %180 = arith.addf %179, %178 : vector<8x128xf32>
    %181 = arith.divf %179, %180 : vector<8x128xf32>
    %182 = arith.mulf %173, %149 : vector<8x128xf32>
    %183 = arith.mulf %167, %175 : vector<8x128xf32>
    %184 = arith.addf %182, %183 : vector<8x128xf32>
    %185 = math.tanh %184 : vector<8x128xf32>
    %186 = arith.mulf %181, %185 : vector<8x128xf32>
    %187 = arith.truncf %186 : vector<8x128xf32> to vector<8x128xbf16>
    %188 = arith.index_cast %c4_i32 : i32 to index
    %c0_60 = arith.constant 0 : index
    %c0_61 = arith.constant 0 : index
    %189 = vector.load %arg7[%188, %c0_60, %c0_61] : memref<8x8x128xbf16, #tpu.memory_space<vmem>>, vector<1x8x128xbf16>
    %190 = vector.shape_cast %189 : vector<1x8x128xbf16> to vector<8x128xbf16>
    %191 = vector.shape_cast %187 : vector<8x128xbf16> to vector<1x8x128xbf16>
    tpu.vector_store %arg7[%188, %c0_60, %c0_61], %191 {strides = array<i32>} : memref<8x8x128xbf16, #tpu.memory_space<vmem>>, vector<1x8x128xbf16>,
    %c5_i32 = arith.constant 5 : i32
    %192 = arith.index_cast %c5_i32 : i32 to index
    %c0_62 = arith.constant 0 : index
    %c0_63 = arith.constant 0 : index
    %193 = vector.load %arg8[%192, %c0_62, %c0_63] : memref<8x8x512xf32, #tpu.memory_space<vmem>>, vector<1x8x512xf32>
    %194 = vector.shape_cast %193 : vector<1x8x512xf32> to vector<8x512xf32>
    %cst_64 = arith.constant dense<0.000000e+00> : vector<8x512xf32>
    %195 = tpu.matmul %187, %14, %cst_64 {dimension_numbers = #tpu.dot_dimension_numbers<[1], [0], [0], [1], [0, 0, 1, 1], [], []>} : vector<8x128xbf16>, vector<128x512xbf16>, vector<8x512xf32> -> vector<8x512xf32>
    %196 = arith.addf %194, %195 : vector<8x512xf32>
    %197 = vector.extract_strided_slice %196 {offsets = [0, 0], sizes = [8, 128], strides = [1, 1]} : vector<8x512xf32> to vector<8x128xf32>
    %198 = arith.negf %197 : vector<8x128xf32>
    %199 = math.exp %198 : vector<8x128xf32>
    %cst_65 = arith.constant 1.000000e+00 : f32
    %200 = vector.broadcast %cst_65 : f32 to vector<8x128xf32>
    %201 = arith.addf %200, %199 : vector<8x128xf32>
    %202 = arith.divf %200, %201 : vector<8x128xf32>
    %203 = vector.extract_strided_slice %196 {offsets = [0, 128], sizes = [8, 128], strides = [1, 1]} : vector<8x512xf32> to vector<8x128xf32>
    %204 = arith.negf %203 : vector<8x128xf32>
    %205 = math.exp %204 : vector<8x128xf32>
    %cst_66 = arith.constant 1.000000e+00 : f32
    %206 = vector.broadcast %cst_66 : f32 to vector<8x128xf32>
    %207 = arith.addf %206, %205 : vector<8x128xf32>
    %208 = arith.divf %206, %207 : vector<8x128xf32>
    %209 = vector.extract_strided_slice %196 {offsets = [0, 256], sizes = [8, 128], strides = [1, 1]} : vector<8x512xf32> to vector<8x128xf32>
    %210 = math.tanh %209 : vector<8x128xf32>
    %211 = vector.extract_strided_slice %196 {offsets = [0, 384], sizes = [8, 128], strides = [1, 1]} : vector<8x512xf32> to vector<8x128xf32>
    %212 = arith.negf %211 : vector<8x128xf32>
    %213 = math.exp %212 : vector<8x128xf32>
    %cst_67 = arith.constant 1.000000e+00 : f32
    %214 = vector.broadcast %cst_67 : f32 to vector<8x128xf32>
    %215 = arith.addf %214, %213 : vector<8x128xf32>
    %216 = arith.divf %214, %215 : vector<8x128xf32>
    %217 = arith.mulf %208, %184 : vector<8x128xf32>
    %218 = arith.mulf %202, %210 : vector<8x128xf32>
    %219 = arith.addf %217, %218 : vector<8x128xf32>
    %220 = math.tanh %219 : vector<8x128xf32>
    %221 = arith.mulf %216, %220 : vector<8x128xf32>
    %222 = arith.truncf %221 : vector<8x128xf32> to vector<8x128xbf16>
    %223 = arith.index_cast %c5_i32 : i32 to index
    %c0_68 = arith.constant 0 : index
    %c0_69 = arith.constant 0 : index
    %224 = vector.load %arg7[%223, %c0_68, %c0_69] : memref<8x8x128xbf16, #tpu.memory_space<vmem>>, vector<1x8x128xbf16>
    %225 = vector.shape_cast %224 : vector<1x8x128xbf16> to vector<8x128xbf16>
    %226 = vector.shape_cast %222 : vector<8x128xbf16> to vector<1x8x128xbf16>
    tpu.vector_store %arg7[%223, %c0_68, %c0_69], %226 {strides = array<i32>} : memref<8x8x128xbf16, #tpu.memory_space<vmem>>, vector<1x8x128xbf16>,
    %c6_i32 = arith.constant 6 : i32
    %227 = arith.index_cast %c6_i32 : i32 to index
    %c0_70 = arith.constant 0 : index
    %c0_71 = arith.constant 0 : index
    %228 = vector.load %arg8[%227, %c0_70, %c0_71] : memref<8x8x512xf32, #tpu.memory_space<vmem>>, vector<1x8x512xf32>
    %229 = vector.shape_cast %228 : vector<1x8x512xf32> to vector<8x512xf32>
    %cst_72 = arith.constant dense<0.000000e+00> : vector<8x512xf32>
    %230 = tpu.matmul %222, %14, %cst_72 {dimension_numbers = #tpu.dot_dimension_numbers<[1], [0], [0], [1], [0, 0, 1, 1], [], []>} : vector<8x128xbf16>, vector<128x512xbf16>, vector<8x512xf32> -> vector<8x512xf32>
    %231 = arith.addf %229, %230 : vector<8x512xf32>
    %232 = vector.extract_strided_slice %231 {offsets = [0, 0], sizes = [8, 128], strides = [1, 1]} : vector<8x512xf32> to vector<8x128xf32>
    %233 = arith.negf %232 : vector<8x128xf32>
    %234 = math.exp %233 : vector<8x128xf32>
    %cst_73 = arith.constant 1.000000e+00 : f32
    %235 = vector.broadcast %cst_73 : f32 to vector<8x128xf32>
    %236 = arith.addf %235, %234 : vector<8x128xf32>
    %237 = arith.divf %235, %236 : vector<8x128xf32>
    %238 = vector.extract_strided_slice %231 {offsets = [0, 128], sizes = [8, 128], strides = [1, 1]} : vector<8x512xf32> to vector<8x128xf32>
    %239 = arith.negf %238 : vector<8x128xf32>
    %240 = math.exp %239 : vector<8x128xf32>
    %cst_74 = arith.constant 1.000000e+00 : f32
    %241 = vector.broadcast %cst_74 : f32 to vector<8x128xf32>
    %242 = arith.addf %241, %240 : vector<8x128xf32>
    %243 = arith.divf %241, %242 : vector<8x128xf32>
    %244 = vector.extract_strided_slice %231 {offsets = [0, 256], sizes = [8, 128], strides = [1, 1]} : vector<8x512xf32> to vector<8x128xf32>
    %245 = math.tanh %244 : vector<8x128xf32>
    %246 = vector.extract_strided_slice %231 {offsets = [0, 384], sizes = [8, 128], strides = [1, 1]} : vector<8x512xf32> to vector<8x128xf32>
    %247 = arith.negf %246 : vector<8x128xf32>
    %248 = math.exp %247 : vector<8x128xf32>
    %cst_75 = arith.constant 1.000000e+00 : f32
    %249 = vector.broadcast %cst_75 : f32 to vector<8x128xf32>
    %250 = arith.addf %249, %248 : vector<8x128xf32>
    %251 = arith.divf %249, %250 : vector<8x128xf32>
    %252 = arith.mulf %243, %219 : vector<8x128xf32>
    %253 = arith.mulf %237, %245 : vector<8x128xf32>
    %254 = arith.addf %252, %253 : vector<8x128xf32>
    %255 = math.tanh %254 : vector<8x128xf32>
    %256 = arith.mulf %251, %255 : vector<8x128xf32>
    %257 = arith.truncf %256 : vector<8x128xf32> to vector<8x128xbf16>
    %258 = arith.index_cast %c6_i32 : i32 to index
    %c0_76 = arith.constant 0 : index
    %c0_77 = arith.constant 0 : index
    %259 = vector.load %arg7[%258, %c0_76, %c0_77] : memref<8x8x128xbf16, #tpu.memory_space<vmem>>, vector<1x8x128xbf16>
    %260 = vector.shape_cast %259 : vector<1x8x128xbf16> to vector<8x128xbf16>
    %261 = vector.shape_cast %257 : vector<8x128xbf16> to vector<1x8x128xbf16>
    tpu.vector_store %arg7[%258, %c0_76, %c0_77], %261 {strides = array<i32>} : memref<8x8x128xbf16, #tpu.memory_space<vmem>>, vector<1x8x128xbf16>,
    %c7_i32 = arith.constant 7 : i32
    %262 = arith.index_cast %c7_i32 : i32 to index
    %c0_78 = arith.constant 0 : index
    %c0_79 = arith.constant 0 : index
    %263 = vector.load %arg8[%262, %c0_78, %c0_79] : memref<8x8x512xf32, #tpu.memory_space<vmem>>, vector<1x8x512xf32>
    %264 = vector.shape_cast %263 : vector<1x8x512xf32> to vector<8x512xf32>
    %cst_80 = arith.constant dense<0.000000e+00> : vector<8x512xf32>
    %265 = tpu.matmul %257, %14, %cst_80 {dimension_numbers = #tpu.dot_dimension_numbers<[1], [0], [0], [1], [0, 0, 1, 1], [], []>} : vector<8x128xbf16>, vector<128x512xbf16>, vector<8x512xf32> -> vector<8x512xf32>
    %266 = arith.addf %264, %265 : vector<8x512xf32>
    %267 = vector.extract_strided_slice %266 {offsets = [0, 0], sizes = [8, 128], strides = [1, 1]} : vector<8x512xf32> to vector<8x128xf32>
    %268 = arith.negf %267 : vector<8x128xf32>
    %269 = math.exp %268 : vector<8x128xf32>
    %cst_81 = arith.constant 1.000000e+00 : f32
    %270 = vector.broadcast %cst_81 : f32 to vector<8x128xf32>
    %271 = arith.addf %270, %269 : vector<8x128xf32>
    %272 = arith.divf %270, %271 : vector<8x128xf32>
    %273 = vector.extract_strided_slice %266 {offsets = [0, 128], sizes = [8, 128], strides = [1, 1]} : vector<8x512xf32> to vector<8x128xf32>
    %274 = arith.negf %273 : vector<8x128xf32>
    %275 = math.exp %274 : vector<8x128xf32>
    %cst_82 = arith.constant 1.000000e+00 : f32
    %276 = vector.broadcast %cst_82 : f32 to vector<8x128xf32>
    %277 = arith.addf %276, %275 : vector<8x128xf32>
    %278 = arith.divf %276, %277 : vector<8x128xf32>
    %279 = vector.extract_strided_slice %266 {offsets = [0, 256], sizes = [8, 128], strides = [1, 1]} : vector<8x512xf32> to vector<8x128xf32>
    %280 = math.tanh %279 : vector<8x128xf32>
    %281 = vector.extract_strided_slice %266 {offsets = [0, 384], sizes = [8, 128], strides = [1, 1]} : vector<8x512xf32> to vector<8x128xf32>
    %282 = arith.negf %281 : vector<8x128xf32>
    %283 = math.exp %282 : vector<8x128xf32>
    %cst_83 = arith.constant 1.000000e+00 : f32
    %284 = vector.broadcast %cst_83 : f32 to vector<8x128xf32>
    %285 = arith.addf %284, %283 : vector<8x128xf32>
    %286 = arith.divf %284, %285 : vector<8x128xf32>
    %287 = arith.mulf %278, %254 : vector<8x128xf32>
    %288 = arith.mulf %272, %280 : vector<8x128xf32>
    %289 = arith.addf %287, %288 : vector<8x128xf32>
    %290 = math.tanh %289 : vector<8x128xf32>
    %291 = arith.mulf %286, %290 : vector<8x128xf32>
    %292 = arith.truncf %291 : vector<8x128xf32> to vector<8x128xbf16>
    %293 = arith.index_cast %c7_i32 : i32 to index
    %c0_84 = arith.constant 0 : index
    %c0_85 = arith.constant 0 : index
    %294 = vector.load %arg7[%293, %c0_84, %c0_85] : memref<8x8x128xbf16, #tpu.memory_space<vmem>>, vector<1x8x128xbf16>
    %295 = vector.shape_cast %294 : vector<1x8x128xbf16> to vector<8x128xbf16>
    %296 = vector.shape_cast %292 : vector<8x128xbf16> to vector<1x8x128xbf16>
    tpu.vector_store %arg7[%293, %c0_84, %c0_85], %296 {strides = array<i32>} : memref<8x8x128xbf16, #tpu.memory_space<vmem>>, vector<1x8x128xbf16>,
    %c8_i32 = arith.constant 8 : i32
    %c0_86 = arith.constant 0 : index
    %c0_87 = arith.constant 0 : index
    %c0_88 = arith.constant 0 : index
    %297 = vector.load %arg7[%c0_86, %c0_87, %c0_88] : memref<8x8x128xbf16, #tpu.memory_space<vmem>>, vector<8x8x128xbf16>
    %298 = vector.shape_cast %297 : vector<8x8x128xbf16> to vector<64x128xbf16>
    %c1 = arith.constant 1 : index
    %c0_89 = arith.constant 0 : index
    %c0_90 = arith.constant 0 : index
    %299 = vector.load %arg1[%c1, %c0_89, %c0_90] : memref<3x128x512xbf16, #tpu.memory_space<vmem>>, vector<1x128x512xbf16>
    %300 = vector.shape_cast %299 : vector<1x128x512xbf16> to vector<128x512xbf16>
    %cst_91 = arith.constant dense<0.000000e+00> : vector<64x512xf32>
    %301 = tpu.matmul %298, %300, %cst_91 {dimension_numbers = #tpu.dot_dimension_numbers<[1], [0], [0], [1], [0, 0, 1, 1], [], []>} : vector<64x128xbf16>, vector<128x512xbf16>, vector<64x512xf32> -> vector<64x512xf32>
    %c1_92 = arith.constant 1 : index
    %c0_93 = arith.constant 0 : index
    %c0_94 = arith.constant 0 : index
    %302 = vector.load %arg3[%c1_92, %c0_93, %c0_94] : memref<3x1x512xf32, #tpu.memory_space<vmem>>, vector<1x1x512xf32>
    %303 = vector.shape_cast %302 : vector<1x1x512xf32> to vector<1x512xf32>
    %304 = vector.broadcast %303 : vector<1x512xf32> to vector<64x512xf32>
    %305 = arith.addf %301, %304 : vector<64x512xf32>
    %306 = vector.shape_cast %305 : vector<64x512xf32> to vector<8x8x512xf32>
    %c0_95 = arith.constant 0 : index
    %c0_96 = arith.constant 0 : index
    %c0_97 = arith.constant 0 : index
    %307 = vector.load %arg8[%c0_95, %c0_96, %c0_97] : memref<8x8x512xf32, #tpu.memory_space<vmem>>, vector<8x8x512xf32>
    tpu.vector_store %arg8[%c0_95, %c0_96, %c0_97], %306 {strides = array<i32>} : memref<8x8x512xf32, #tpu.memory_space<vmem>>, vector<8x8x512xf32>,
    %c1_98 = arith.constant 1 : index
    %c0_99 = arith.constant 0 : index
    %c0_100 = arith.constant 0 : index
    %308 = vector.load %arg2[%c1_98, %c0_99, %c0_100] : memref<3x128x512xbf16, #tpu.memory_space<vmem>>, vector<1x128x512xbf16>
    %309 = vector.shape_cast %308 : vector<1x128x512xbf16> to vector<128x512xbf16>
    %cst_101 = arith.constant 0.000000e+00 : bf16
    %310 = vector.broadcast %cst_101 : bf16 to vector<8x128xbf16>
    %cst_102 = arith.constant 0.000000e+00 : f32
    %311 = vector.broadcast %cst_102 : f32 to vector<8x128xf32>
    %c0_i32_103 = arith.constant 0 : i32
    %312 = arith.index_cast %c0_i32_103 : i32 to index
    %c0_104 = arith.constant 0 : index
    %c0_105 = arith.constant 0 : index
    %313 = vector.load %arg8[%312, %c0_104, %c0_105] : memref<8x8x512xf32, #tpu.memory_space<vmem>>, vector<1x8x512xf32>
    %314 = vector.shape_cast %313 : vector<1x8x512xf32> to vector<8x512xf32>
    %cst_106 = arith.constant dense<0.000000e+00> : vector<8x512xf32>
    %315 = tpu.matmul %310, %309, %cst_106 {dimension_numbers = #tpu.dot_dimension_numbers<[1], [0], [0], [1], [0, 0, 1, 1], [], []>} : vector<8x128xbf16>, vector<128x512xbf16>, vector<8x512xf32> -> vector<8x512xf32>
    %316 = arith.addf %314, %315 : vector<8x512xf32>
    %317 = vector.extract_strided_slice %316 {offsets = [0, 0], sizes = [8, 128], strides = [1, 1]} : vector<8x512xf32> to vector<8x128xf32>
    %318 = arith.negf %317 : vector<8x128xf32>
    %319 = math.exp %318 : vector<8x128xf32>
    %cst_107 = arith.constant 1.000000e+00 : f32
    %320 = vector.broadcast %cst_107 : f32 to vector<8x128xf32>
    %321 = arith.addf %320, %319 : vector<8x128xf32>
    %322 = arith.divf %320, %321 : vector<8x128xf32>
    %323 = vector.extract_strided_slice %316 {offsets = [0, 128], sizes = [8, 128], strides = [1, 1]} : vector<8x512xf32> to vector<8x128xf32>
    %324 = arith.negf %323 : vector<8x128xf32>
    %325 = math.exp %324 : vector<8x128xf32>
    %cst_108 = arith.constant 1.000000e+00 : f32
    %326 = vector.broadcast %cst_108 : f32 to vector<8x128xf32>
    %327 = arith.addf %326, %325 : vector<8x128xf32>
    %328 = arith.divf %326, %327 : vector<8x128xf32>
    %329 = vector.extract_strided_slice %316 {offsets = [0, 256], sizes = [8, 128], strides = [1, 1]} : vector<8x512xf32> to vector<8x128xf32>
    %330 = math.tanh %329 : vector<8x128xf32>
    %331 = vector.extract_strided_slice %316 {offsets = [0, 384], sizes = [8, 128], strides = [1, 1]} : vector<8x512xf32> to vector<8x128xf32>
    %332 = arith.negf %331 : vector<8x128xf32>
    %333 = math.exp %332 : vector<8x128xf32>
    %cst_109 = arith.constant 1.000000e+00 : f32
    %334 = vector.broadcast %cst_109 : f32 to vector<8x128xf32>
    %335 = arith.addf %334, %333 : vector<8x128xf32>
    %336 = arith.divf %334, %335 : vector<8x128xf32>
    %337 = arith.mulf %328, %311 : vector<8x128xf32>
    %338 = arith.mulf %322, %330 : vector<8x128xf32>
    %339 = arith.addf %337, %338 : vector<8x128xf32>
    %340 = math.tanh %339 : vector<8x128xf32>
    %341 = arith.mulf %336, %340 : vector<8x128xf32>
    %342 = arith.truncf %341 : vector<8x128xf32> to vector<8x128xbf16>
    %343 = arith.index_cast %c0_i32_103 : i32 to index
    %c0_110 = arith.constant 0 : index
    %c0_111 = arith.constant 0 : index
    %344 = vector.load %arg7[%343, %c0_110, %c0_111] : memref<8x8x128xbf16, #tpu.memory_space<vmem>>, vector<1x8x128xbf16>
    %345 = vector.shape_cast %344 : vector<1x8x128xbf16> to vector<8x128xbf16>
    %346 = vector.shape_cast %342 : vector<8x128xbf16> to vector<1x8x128xbf16>
    tpu.vector_store %arg7[%343, %c0_110, %c0_111], %346 {strides = array<i32>} : memref<8x8x128xbf16, #tpu.memory_space<vmem>>, vector<1x8x128xbf16>,
    %c1_i32_112 = arith.constant 1 : i32
    %347 = arith.index_cast %c1_i32_112 : i32 to index
    %c0_113 = arith.constant 0 : index
    %c0_114 = arith.constant 0 : index
    %348 = vector.load %arg8[%347, %c0_113, %c0_114] : memref<8x8x512xf32, #tpu.memory_space<vmem>>, vector<1x8x512xf32>
    %349 = vector.shape_cast %348 : vector<1x8x512xf32> to vector<8x512xf32>
    %cst_115 = arith.constant dense<0.000000e+00> : vector<8x512xf32>
    %350 = tpu.matmul %342, %309, %cst_115 {dimension_numbers = #tpu.dot_dimension_numbers<[1], [0], [0], [1], [0, 0, 1, 1], [], []>} : vector<8x128xbf16>, vector<128x512xbf16>, vector<8x512xf32> -> vector<8x512xf32>
    %351 = arith.addf %349, %350 : vector<8x512xf32>
    %352 = vector.extract_strided_slice %351 {offsets = [0, 0], sizes = [8, 128], strides = [1, 1]} : vector<8x512xf32> to vector<8x128xf32>
    %353 = arith.negf %352 : vector<8x128xf32>
    %354 = math.exp %353 : vector<8x128xf32>
    %cst_116 = arith.constant 1.000000e+00 : f32
    %355 = vector.broadcast %cst_116 : f32 to vector<8x128xf32>
    %356 = arith.addf %355, %354 : vector<8x128xf32>
    %357 = arith.divf %355, %356 : vector<8x128xf32>
    %358 = vector.extract_strided_slice %351 {offsets = [0, 128], sizes = [8, 128], strides = [1, 1]} : vector<8x512xf32> to vector<8x128xf32>
    %359 = arith.negf %358 : vector<8x128xf32>
    %360 = math.exp %359 : vector<8x128xf32>
    %cst_117 = arith.constant 1.000000e+00 : f32
    %361 = vector.broadcast %cst_117 : f32 to vector<8x128xf32>
    %362 = arith.addf %361, %360 : vector<8x128xf32>
    %363 = arith.divf %361, %362 : vector<8x128xf32>
    %364 = vector.extract_strided_slice %351 {offsets = [0, 256], sizes = [8, 128], strides = [1, 1]} : vector<8x512xf32> to vector<8x128xf32>
    %365 = math.tanh %364 : vector<8x128xf32>
    %366 = vector.extract_strided_slice %351 {offsets = [0, 384], sizes = [8, 128], strides = [1, 1]} : vector<8x512xf32> to vector<8x128xf32>
    %367 = arith.negf %366 : vector<8x128xf32>
    %368 = math.exp %367 : vector<8x128xf32>
    %cst_118 = arith.constant 1.000000e+00 : f32
    %369 = vector.broadcast %cst_118 : f32 to vector<8x128xf32>
    %370 = arith.addf %369, %368 : vector<8x128xf32>
    %371 = arith.divf %369, %370 : vector<8x128xf32>
    %372 = arith.mulf %363, %339 : vector<8x128xf32>
    %373 = arith.mulf %357, %365 : vector<8x128xf32>
    %374 = arith.addf %372, %373 : vector<8x128xf32>
    %375 = math.tanh %374 : vector<8x128xf32>
    %376 = arith.mulf %371, %375 : vector<8x128xf32>
    %377 = arith.truncf %376 : vector<8x128xf32> to vector<8x128xbf16>
    %378 = arith.index_cast %c1_i32_112 : i32 to index
    %c0_119 = arith.constant 0 : index
    %c0_120 = arith.constant 0 : index
    %379 = vector.load %arg7[%378, %c0_119, %c0_120] : memref<8x8x128xbf16, #tpu.memory_space<vmem>>, vector<1x8x128xbf16>
    %380 = vector.shape_cast %379 : vector<1x8x128xbf16> to vector<8x128xbf16>
    %381 = vector.shape_cast %377 : vector<8x128xbf16> to vector<1x8x128xbf16>
    tpu.vector_store %arg7[%378, %c0_119, %c0_120], %381 {strides = array<i32>} : memref<8x8x128xbf16, #tpu.memory_space<vmem>>, vector<1x8x128xbf16>,
    %c2_i32_121 = arith.constant 2 : i32
    %382 = arith.index_cast %c2_i32_121 : i32 to index
    %c0_122 = arith.constant 0 : index
    %c0_123 = arith.constant 0 : index
    %383 = vector.load %arg8[%382, %c0_122, %c0_123] : memref<8x8x512xf32, #tpu.memory_space<vmem>>, vector<1x8x512xf32>
    %384 = vector.shape_cast %383 : vector<1x8x512xf32> to vector<8x512xf32>
    %cst_124 = arith.constant dense<0.000000e+00> : vector<8x512xf32>
    %385 = tpu.matmul %377, %309, %cst_124 {dimension_numbers = #tpu.dot_dimension_numbers<[1], [0], [0], [1], [0, 0, 1, 1], [], []>} : vector<8x128xbf16>, vector<128x512xbf16>, vector<8x512xf32> -> vector<8x512xf32>
    %386 = arith.addf %384, %385 : vector<8x512xf32>
    %387 = vector.extract_strided_slice %386 {offsets = [0, 0], sizes = [8, 128], strides = [1, 1]} : vector<8x512xf32> to vector<8x128xf32>
    %388 = arith.negf %387 : vector<8x128xf32>
    %389 = math.exp %388 : vector<8x128xf32>
    %cst_125 = arith.constant 1.000000e+00 : f32
    %390 = vector.broadcast %cst_125 : f32 to vector<8x128xf32>
    %391 = arith.addf %390, %389 : vector<8x128xf32>
    %392 = arith.divf %390, %391 : vector<8x128xf32>
    %393 = vector.extract_strided_slice %386 {offsets = [0, 128], sizes = [8, 128], strides = [1, 1]} : vector<8x512xf32> to vector<8x128xf32>
    %394 = arith.negf %393 : vector<8x128xf32>
    %395 = math.exp %394 : vector<8x128xf32>
    %cst_126 = arith.constant 1.000000e+00 : f32
    %396 = vector.broadcast %cst_126 : f32 to vector<8x128xf32>
    %397 = arith.addf %396, %395 : vector<8x128xf32>
    %398 = arith.divf %396, %397 : vector<8x128xf32>
    %399 = vector.extract_strided_slice %386 {offsets = [0, 256], sizes = [8, 128], strides = [1, 1]} : vector<8x512xf32> to vector<8x128xf32>
    %400 = math.tanh %399 : vector<8x128xf32>
    %401 = vector.extract_strided_slice %386 {offsets = [0, 384], sizes = [8, 128], strides = [1, 1]} : vector<8x512xf32> to vector<8x128xf32>
    %402 = arith.negf %401 : vector<8x128xf32>
    %403 = math.exp %402 : vector<8x128xf32>
    %cst_127 = arith.constant 1.000000e+00 : f32
    %404 = vector.broadcast %cst_127 : f32 to vector<8x128xf32>
    %405 = arith.addf %404, %403 : vector<8x128xf32>
    %406 = arith.divf %404, %405 : vector<8x128xf32>
    %407 = arith.mulf %398, %374 : vector<8x128xf32>
    %408 = arith.mulf %392, %400 : vector<8x128xf32>
    %409 = arith.addf %407, %408 : vector<8x128xf32>
    %410 = math.tanh %409 : vector<8x128xf32>
    %411 = arith.mulf %406, %410 : vector<8x128xf32>
    %412 = arith.truncf %411 : vector<8x128xf32> to vector<8x128xbf16>
    %413 = arith.index_cast %c2_i32_121 : i32 to index
    %c0_128 = arith.constant 0 : index
    %c0_129 = arith.constant 0 : index
    %414 = vector.load %arg7[%413, %c0_128, %c0_129] : memref<8x8x128xbf16, #tpu.memory_space<vmem>>, vector<1x8x128xbf16>
    %415 = vector.shape_cast %414 : vector<1x8x128xbf16> to vector<8x128xbf16>
    %416 = vector.shape_cast %412 : vector<8x128xbf16> to vector<1x8x128xbf16>
    tpu.vector_store %arg7[%413, %c0_128, %c0_129], %416 {strides = array<i32>} : memref<8x8x128xbf16, #tpu.memory_space<vmem>>, vector<1x8x128xbf16>,
    %c3_i32_130 = arith.constant 3 : i32
    %417 = arith.index_cast %c3_i32_130 : i32 to index
    %c0_131 = arith.constant 0 : index
    %c0_132 = arith.constant 0 : index
    %418 = vector.load %arg8[%417, %c0_131, %c0_132] : memref<8x8x512xf32, #tpu.memory_space<vmem>>, vector<1x8x512xf32>
    %419 = vector.shape_cast %418 : vector<1x8x512xf32> to vector<8x512xf32>
    %cst_133 = arith.constant dense<0.000000e+00> : vector<8x512xf32>
    %420 = tpu.matmul %412, %309, %cst_133 {dimension_numbers = #tpu.dot_dimension_numbers<[1], [0], [0], [1], [0, 0, 1, 1], [], []>} : vector<8x128xbf16>, vector<128x512xbf16>, vector<8x512xf32> -> vector<8x512xf32>
    %421 = arith.addf %419, %420 : vector<8x512xf32>
    %422 = vector.extract_strided_slice %421 {offsets = [0, 0], sizes = [8, 128], strides = [1, 1]} : vector<8x512xf32> to vector<8x128xf32>
    %423 = arith.negf %422 : vector<8x128xf32>
    %424 = math.exp %423 : vector<8x128xf32>
    %cst_134 = arith.constant 1.000000e+00 : f32
    %425 = vector.broadcast %cst_134 : f32 to vector<8x128xf32>
    %426 = arith.addf %425, %424 : vector<8x128xf32>
    %427 = arith.divf %425, %426 : vector<8x128xf32>
    %428 = vector.extract_strided_slice %421 {offsets = [0, 128], sizes = [8, 128], strides = [1, 1]} : vector<8x512xf32> to vector<8x128xf32>
    %429 = arith.negf %428 : vector<8x128xf32>
    %430 = math.exp %429 : vector<8x128xf32>
    %cst_135 = arith.constant 1.000000e+00 : f32
    %431 = vector.broadcast %cst_135 : f32 to vector<8x128xf32>
    %432 = arith.addf %431, %430 : vector<8x128xf32>
    %433 = arith.divf %431, %432 : vector<8x128xf32>
    %434 = vector.extract_strided_slice %421 {offsets = [0, 256], sizes = [8, 128], strides = [1, 1]} : vector<8x512xf32> to vector<8x128xf32>
    %435 = math.tanh %434 : vector<8x128xf32>
    %436 = vector.extract_strided_slice %421 {offsets = [0, 384], sizes = [8, 128], strides = [1, 1]} : vector<8x512xf32> to vector<8x128xf32>
    %437 = arith.negf %436 : vector<8x128xf32>
    %438 = math.exp %437 : vector<8x128xf32>
    %cst_136 = arith.constant 1.000000e+00 : f32
    %439 = vector.broadcast %cst_136 : f32 to vector<8x128xf32>
    %440 = arith.addf %439, %438 : vector<8x128xf32>
    %441 = arith.divf %439, %440 : vector<8x128xf32>
    %442 = arith.mulf %433, %409 : vector<8x128xf32>
    %443 = arith.mulf %427, %435 : vector<8x128xf32>
    %444 = arith.addf %442, %443 : vector<8x128xf32>
    %445 = math.tanh %444 : vector<8x128xf32>
    %446 = arith.mulf %441, %445 : vector<8x128xf32>
    %447 = arith.truncf %446 : vector<8x128xf32> to vector<8x128xbf16>
    %448 = arith.index_cast %c3_i32_130 : i32 to index
    %c0_137 = arith.constant 0 : index
    %c0_138 = arith.constant 0 : index
    %449 = vector.load %arg7[%448, %c0_137, %c0_138] : memref<8x8x128xbf16, #tpu.memory_space<vmem>>, vector<1x8x128xbf16>
    %450 = vector.shape_cast %449 : vector<1x8x128xbf16> to vector<8x128xbf16>
    %451 = vector.shape_cast %447 : vector<8x128xbf16> to vector<1x8x128xbf16>
    tpu.vector_store %arg7[%448, %c0_137, %c0_138], %451 {strides = array<i32>} : memref<8x8x128xbf16, #tpu.memory_space<vmem>>, vector<1x8x128xbf16>,
    %c4_i32_139 = arith.constant 4 : i32
    %452 = arith.index_cast %c4_i32_139 : i32 to index
    %c0_140 = arith.constant 0 : index
    %c0_141 = arith.constant 0 : index
    %453 = vector.load %arg8[%452, %c0_140, %c0_141] : memref<8x8x512xf32, #tpu.memory_space<vmem>>, vector<1x8x512xf32>
    %454 = vector.shape_cast %453 : vector<1x8x512xf32> to vector<8x512xf32>
    %cst_142 = arith.constant dense<0.000000e+00> : vector<8x512xf32>
    %455 = tpu.matmul %447, %309, %cst_142 {dimension_numbers = #tpu.dot_dimension_numbers<[1], [0], [0], [1], [0, 0, 1, 1], [], []>} : vector<8x128xbf16>, vector<128x512xbf16>, vector<8x512xf32> -> vector<8x512xf32>
    %456 = arith.addf %454, %455 : vector<8x512xf32>
    %457 = vector.extract_strided_slice %456 {offsets = [0, 0], sizes = [8, 128], strides = [1, 1]} : vector<8x512xf32> to vector<8x128xf32>
    %458 = arith.negf %457 : vector<8x128xf32>
    %459 = math.exp %458 : vector<8x128xf32>
    %cst_143 = arith.constant 1.000000e+00 : f32
    %460 = vector.broadcast %cst_143 : f32 to vector<8x128xf32>
    %461 = arith.addf %460, %459 : vector<8x128xf32>
    %462 = arith.divf %460, %461 : vector<8x128xf32>
    %463 = vector.extract_strided_slice %456 {offsets = [0, 128], sizes = [8, 128], strides = [1, 1]} : vector<8x512xf32> to vector<8x128xf32>
    %464 = arith.negf %463 : vector<8x128xf32>
    %465 = math.exp %464 : vector<8x128xf32>
    %cst_144 = arith.constant 1.000000e+00 : f32
    %466 = vector.broadcast %cst_144 : f32 to vector<8x128xf32>
    %467 = arith.addf %466, %465 : vector<8x128xf32>
    %468 = arith.divf %466, %467 : vector<8x128xf32>
    %469 = vector.extract_strided_slice %456 {offsets = [0, 256], sizes = [8, 128], strides = [1, 1]} : vector<8x512xf32> to vector<8x128xf32>
    %470 = math.tanh %469 : vector<8x128xf32>
    %471 = vector.extract_strided_slice %456 {offsets = [0, 384], sizes = [8, 128], strides = [1, 1]} : vector<8x512xf32> to vector<8x128xf32>
    %472 = arith.negf %471 : vector<8x128xf32>
    %473 = math.exp %472 : vector<8x128xf32>
    %cst_145 = arith.constant 1.000000e+00 : f32
    %474 = vector.broadcast %cst_145 : f32 to vector<8x128xf32>
    %475 = arith.addf %474, %473 : vector<8x128xf32>
    %476 = arith.divf %474, %475 : vector<8x128xf32>
    %477 = arith.mulf %468, %444 : vector<8x128xf32>
    %478 = arith.mulf %462, %470 : vector<8x128xf32>
    %479 = arith.addf %477, %478 : vector<8x128xf32>
    %480 = math.tanh %479 : vector<8x128xf32>
    %481 = arith.mulf %476, %480 : vector<8x128xf32>
    %482 = arith.truncf %481 : vector<8x128xf32> to vector<8x128xbf16>
    %483 = arith.index_cast %c4_i32_139 : i32 to index
    %c0_146 = arith.constant 0 : index
    %c0_147 = arith.constant 0 : index
    %484 = vector.load %arg7[%483, %c0_146, %c0_147] : memref<8x8x128xbf16, #tpu.memory_space<vmem>>, vector<1x8x128xbf16>
    %485 = vector.shape_cast %484 : vector<1x8x128xbf16> to vector<8x128xbf16>
    %486 = vector.shape_cast %482 : vector<8x128xbf16> to vector<1x8x128xbf16>
    tpu.vector_store %arg7[%483, %c0_146, %c0_147], %486 {strides = array<i32>} : memref<8x8x128xbf16, #tpu.memory_space<vmem>>, vector<1x8x128xbf16>,
    %c5_i32_148 = arith.constant 5 : i32
    %487 = arith.index_cast %c5_i32_148 : i32 to index
    %c0_149 = arith.constant 0 : index
    %c0_150 = arith.constant 0 : index
    %488 = vector.load %arg8[%487, %c0_149, %c0_150] : memref<8x8x512xf32, #tpu.memory_space<vmem>>, vector<1x8x512xf32>
    %489 = vector.shape_cast %488 : vector<1x8x512xf32> to vector<8x512xf32>
    %cst_151 = arith.constant dense<0.000000e+00> : vector<8x512xf32>
    %490 = tpu.matmul %482, %309, %cst_151 {dimension_numbers = #tpu.dot_dimension_numbers<[1], [0], [0], [1], [0, 0, 1, 1], [], []>} : vector<8x128xbf16>, vector<128x512xbf16>, vector<8x512xf32> -> vector<8x512xf32>
    %491 = arith.addf %489, %490 : vector<8x512xf32>
    %492 = vector.extract_strided_slice %491 {offsets = [0, 0], sizes = [8, 128], strides = [1, 1]} : vector<8x512xf32> to vector<8x128xf32>
    %493 = arith.negf %492 : vector<8x128xf32>
    %494 = math.exp %493 : vector<8x128xf32>
    %cst_152 = arith.constant 1.000000e+00 : f32
    %495 = vector.broadcast %cst_152 : f32 to vector<8x128xf32>
    %496 = arith.addf %495, %494 : vector<8x128xf32>
    %497 = arith.divf %495, %496 : vector<8x128xf32>
    %498 = vector.extract_strided_slice %491 {offsets = [0, 128], sizes = [8, 128], strides = [1, 1]} : vector<8x512xf32> to vector<8x128xf32>
    %499 = arith.negf %498 : vector<8x128xf32>
    %500 = math.exp %499 : vector<8x128xf32>
    %cst_153 = arith.constant 1.000000e+00 : f32
    %501 = vector.broadcast %cst_153 : f32 to vector<8x128xf32>
    %502 = arith.addf %501, %500 : vector<8x128xf32>
    %503 = arith.divf %501, %502 : vector<8x128xf32>
    %504 = vector.extract_strided_slice %491 {offsets = [0, 256], sizes = [8, 128], strides = [1, 1]} : vector<8x512xf32> to vector<8x128xf32>
    %505 = math.tanh %504 : vector<8x128xf32>
    %506 = vector.extract_strided_slice %491 {offsets = [0, 384], sizes = [8, 128], strides = [1, 1]} : vector<8x512xf32> to vector<8x128xf32>
    %507 = arith.negf %506 : vector<8x128xf32>
    %508 = math.exp %507 : vector<8x128xf32>
    %cst_154 = arith.constant 1.000000e+00 : f32
    %509 = vector.broadcast %cst_154 : f32 to vector<8x128xf32>
    %510 = arith.addf %509, %508 : vector<8x128xf32>
    %511 = arith.divf %509, %510 : vector<8x128xf32>
    %512 = arith.mulf %503, %479 : vector<8x128xf32>
    %513 = arith.mulf %497, %505 : vector<8x128xf32>
    %514 = arith.addf %512, %513 : vector<8x128xf32>
    %515 = math.tanh %514 : vector<8x128xf32>
    %516 = arith.mulf %511, %515 : vector<8x128xf32>
    %517 = arith.truncf %516 : vector<8x128xf32> to vector<8x128xbf16>
    %518 = arith.index_cast %c5_i32_148 : i32 to index
    %c0_155 = arith.constant 0 : index
    %c0_156 = arith.constant 0 : index
    %519 = vector.load %arg7[%518, %c0_155, %c0_156] : memref<8x8x128xbf16, #tpu.memory_space<vmem>>, vector<1x8x128xbf16>
    %520 = vector.shape_cast %519 : vector<1x8x128xbf16> to vector<8x128xbf16>
    %521 = vector.shape_cast %517 : vector<8x128xbf16> to vector<1x8x128xbf16>
    tpu.vector_store %arg7[%518, %c0_155, %c0_156], %521 {strides = array<i32>} : memref<8x8x128xbf16, #tpu.memory_space<vmem>>, vector<1x8x128xbf16>,
    %c6_i32_157 = arith.constant 6 : i32
    %522 = arith.index_cast %c6_i32_157 : i32 to index
    %c0_158 = arith.constant 0 : index
    %c0_159 = arith.constant 0 : index
    %523 = vector.load %arg8[%522, %c0_158, %c0_159] : memref<8x8x512xf32, #tpu.memory_space<vmem>>, vector<1x8x512xf32>
    %524 = vector.shape_cast %523 : vector<1x8x512xf32> to vector<8x512xf32>
    %cst_160 = arith.constant dense<0.000000e+00> : vector<8x512xf32>
    %525 = tpu.matmul %517, %309, %cst_160 {dimension_numbers = #tpu.dot_dimension_numbers<[1], [0], [0], [1], [0, 0, 1, 1], [], []>} : vector<8x128xbf16>, vector<128x512xbf16>, vector<8x512xf32> -> vector<8x512xf32>
    %526 = arith.addf %524, %525 : vector<8x512xf32>
    %527 = vector.extract_strided_slice %526 {offsets = [0, 0], sizes = [8, 128], strides = [1, 1]} : vector<8x512xf32> to vector<8x128xf32>
    %528 = arith.negf %527 : vector<8x128xf32>
    %529 = math.exp %528 : vector<8x128xf32>
    %cst_161 = arith.constant 1.000000e+00 : f32
    %530 = vector.broadcast %cst_161 : f32 to vector<8x128xf32>
    %531 = arith.addf %530, %529 : vector<8x128xf32>
    %532 = arith.divf %530, %531 : vector<8x128xf32>
    %533 = vector.extract_strided_slice %526 {offsets = [0, 128], sizes = [8, 128], strides = [1, 1]} : vector<8x512xf32> to vector<8x128xf32>
    %534 = arith.negf %533 : vector<8x128xf32>
    %535 = math.exp %534 : vector<8x128xf32>
    %cst_162 = arith.constant 1.000000e+00 : f32
    %536 = vector.broadcast %cst_162 : f32 to vector<8x128xf32>
    %537 = arith.addf %536, %535 : vector<8x128xf32>
    %538 = arith.divf %536, %537 : vector<8x128xf32>
    %539 = vector.extract_strided_slice %526 {offsets = [0, 256], sizes = [8, 128], strides = [1, 1]} : vector<8x512xf32> to vector<8x128xf32>
    %540 = math.tanh %539 : vector<8x128xf32>
    %541 = vector.extract_strided_slice %526 {offsets = [0, 384], sizes = [8, 128], strides = [1, 1]} : vector<8x512xf32> to vector<8x128xf32>
    %542 = arith.negf %541 : vector<8x128xf32>
    %543 = math.exp %542 : vector<8x128xf32>
    %cst_163 = arith.constant 1.000000e+00 : f32
    %544 = vector.broadcast %cst_163 : f32 to vector<8x128xf32>
    %545 = arith.addf %544, %543 : vector<8x128xf32>
    %546 = arith.divf %544, %545 : vector<8x128xf32>
    %547 = arith.mulf %538, %514 : vector<8x128xf32>
    %548 = arith.mulf %532, %540 : vector<8x128xf32>
    %549 = arith.addf %547, %548 : vector<8x128xf32>
    %550 = math.tanh %549 : vector<8x128xf32>
    %551 = arith.mulf %546, %550 : vector<8x128xf32>
    %552 = arith.truncf %551 : vector<8x128xf32> to vector<8x128xbf16>
    %553 = arith.index_cast %c6_i32_157 : i32 to index
    %c0_164 = arith.constant 0 : index
    %c0_165 = arith.constant 0 : index
    %554 = vector.load %arg7[%553, %c0_164, %c0_165] : memref<8x8x128xbf16, #tpu.memory_space<vmem>>, vector<1x8x128xbf16>
    %555 = vector.shape_cast %554 : vector<1x8x128xbf16> to vector<8x128xbf16>
    %556 = vector.shape_cast %552 : vector<8x128xbf16> to vector<1x8x128xbf16>
    tpu.vector_store %arg7[%553, %c0_164, %c0_165], %556 {strides = array<i32>} : memref<8x8x128xbf16, #tpu.memory_space<vmem>>, vector<1x8x128xbf16>,
    %c7_i32_166 = arith.constant 7 : i32
    %557 = arith.index_cast %c7_i32_166 : i32 to index
    %c0_167 = arith.constant 0 : index
    %c0_168 = arith.constant 0 : index
    %558 = vector.load %arg8[%557, %c0_167, %c0_168] : memref<8x8x512xf32, #tpu.memory_space<vmem>>, vector<1x8x512xf32>
    %559 = vector.shape_cast %558 : vector<1x8x512xf32> to vector<8x512xf32>
    %cst_169 = arith.constant dense<0.000000e+00> : vector<8x512xf32>
    %560 = tpu.matmul %552, %309, %cst_169 {dimension_numbers = #tpu.dot_dimension_numbers<[1], [0], [0], [1], [0, 0, 1, 1], [], []>} : vector<8x128xbf16>, vector<128x512xbf16>, vector<8x512xf32> -> vector<8x512xf32>
    %561 = arith.addf %559, %560 : vector<8x512xf32>
    %562 = vector.extract_strided_slice %561 {offsets = [0, 0], sizes = [8, 128], strides = [1, 1]} : vector<8x512xf32> to vector<8x128xf32>
    %563 = arith.negf %562 : vector<8x128xf32>
    %564 = math.exp %563 : vector<8x128xf32>
    %cst_170 = arith.constant 1.000000e+00 : f32
    %565 = vector.broadcast %cst_170 : f32 to vector<8x128xf32>
    %566 = arith.addf %565, %564 : vector<8x128xf32>
    %567 = arith.divf %565, %566 : vector<8x128xf32>
    %568 = vector.extract_strided_slice %561 {offsets = [0, 128], sizes = [8, 128], strides = [1, 1]} : vector<8x512xf32> to vector<8x128xf32>
    %569 = arith.negf %568 : vector<8x128xf32>
    %570 = math.exp %569 : vector<8x128xf32>
    %cst_171 = arith.constant 1.000000e+00 : f32
    %571 = vector.broadcast %cst_171 : f32 to vector<8x128xf32>
    %572 = arith.addf %571, %570 : vector<8x128xf32>
    %573 = arith.divf %571, %572 : vector<8x128xf32>
    %574 = vector.extract_strided_slice %561 {offsets = [0, 256], sizes = [8, 128], strides = [1, 1]} : vector<8x512xf32> to vector<8x128xf32>
    %575 = math.tanh %574 : vector<8x128xf32>
    %576 = vector.extract_strided_slice %561 {offsets = [0, 384], sizes = [8, 128], strides = [1, 1]} : vector<8x512xf32> to vector<8x128xf32>
    %577 = arith.negf %576 : vector<8x128xf32>
    %578 = math.exp %577 : vector<8x128xf32>
    %cst_172 = arith.constant 1.000000e+00 : f32
    %579 = vector.broadcast %cst_172 : f32 to vector<8x128xf32>
    %580 = arith.addf %579, %578 : vector<8x128xf32>
    %581 = arith.divf %579, %580 : vector<8x128xf32>
    %582 = arith.mulf %573, %549 : vector<8x128xf32>
    %583 = arith.mulf %567, %575 : vector<8x128xf32>
    %584 = arith.addf %582, %583 : vector<8x128xf32>
    %585 = math.tanh %584 : vector<8x128xf32>
    %586 = arith.mulf %581, %585 : vector<8x128xf32>
    %587 = arith.truncf %586 : vector<8x128xf32> to vector<8x128xbf16>
    %588 = arith.index_cast %c7_i32_166 : i32 to index
    %c0_173 = arith.constant 0 : index
    %c0_174 = arith.constant 0 : index
    %589 = vector.load %arg7[%588, %c0_173, %c0_174] : memref<8x8x128xbf16, #tpu.memory_space<vmem>>, vector<1x8x128xbf16>
    %590 = vector.shape_cast %589 : vector<1x8x128xbf16> to vector<8x128xbf16>
    %591 = vector.shape_cast %587 : vector<8x128xbf16> to vector<1x8x128xbf16>
    tpu.vector_store %arg7[%588, %c0_173, %c0_174], %591 {strides = array<i32>} : memref<8x8x128xbf16, #tpu.memory_space<vmem>>, vector<1x8x128xbf16>,
    %c8_i32_175 = arith.constant 8 : i32
    %c0_176 = arith.constant 0 : index
    %c0_177 = arith.constant 0 : index
    %c0_178 = arith.constant 0 : index
    %592 = vector.load %arg7[%c0_176, %c0_177, %c0_178] : memref<8x8x128xbf16, #tpu.memory_space<vmem>>, vector<8x8x128xbf16>
    %593 = vector.shape_cast %592 : vector<8x8x128xbf16> to vector<64x128xbf16>
    %c2 = arith.constant 2 : index
    %c0_179 = arith.constant 0 : index
    %c0_180 = arith.constant 0 : index
    %594 = vector.load %arg1[%c2, %c0_179, %c0_180] : memref<3x128x512xbf16, #tpu.memory_space<vmem>>, vector<1x128x512xbf16>
    %595 = vector.shape_cast %594 : vector<1x128x512xbf16> to vector<128x512xbf16>
    %cst_181 = arith.constant dense<0.000000e+00> : vector<64x512xf32>
    %596 = tpu.matmul %593, %595, %cst_181 {dimension_numbers = #tpu.dot_dimension_numbers<[1], [0], [0], [1], [0, 0, 1, 1], [], []>} : vector<64x128xbf16>, vector<128x512xbf16>, vector<64x512xf32> -> vector<64x512xf32>
    %c2_182 = arith.constant 2 : index
    %c0_183 = arith.constant 0 : index
    %c0_184 = arith.constant 0 : index
    %597 = vector.load %arg3[%c2_182, %c0_183, %c0_184] : memref<3x1x512xf32, #tpu.memory_space<vmem>>, vector<1x1x512xf32>
    %598 = vector.shape_cast %597 : vector<1x1x512xf32> to vector<1x512xf32>
    %599 = vector.broadcast %598 : vector<1x512xf32> to vector<64x512xf32>
    %600 = arith.addf %596, %599 : vector<64x512xf32>
    %601 = vector.shape_cast %600 : vector<64x512xf32> to vector<8x8x512xf32>
    %c0_185 = arith.constant 0 : index
    %c0_186 = arith.constant 0 : index
    %c0_187 = arith.constant 0 : index
    %602 = vector.load %arg8[%c0_185, %c0_186, %c0_187] : memref<8x8x512xf32, #tpu.memory_space<vmem>>, vector<8x8x512xf32>
    tpu.vector_store %arg8[%c0_185, %c0_186, %c0_187], %601 {strides = array<i32>} : memref<8x8x512xf32, #tpu.memory_space<vmem>>, vector<8x8x512xf32>,
    %c2_188 = arith.constant 2 : index
    %c0_189 = arith.constant 0 : index
    %c0_190 = arith.constant 0 : index
    %603 = vector.load %arg2[%c2_188, %c0_189, %c0_190] : memref<3x128x512xbf16, #tpu.memory_space<vmem>>, vector<1x128x512xbf16>
    %604 = vector.shape_cast %603 : vector<1x128x512xbf16> to vector<128x512xbf16>
    %cst_191 = arith.constant 0.000000e+00 : bf16
    %605 = vector.broadcast %cst_191 : bf16 to vector<8x128xbf16>
    %cst_192 = arith.constant 0.000000e+00 : f32
    %606 = vector.broadcast %cst_192 : f32 to vector<8x128xf32>
    %c0_i32_193 = arith.constant 0 : i32
    %607 = arith.index_cast %c0_i32_193 : i32 to index
    %c0_194 = arith.constant 0 : index
    %c0_195 = arith.constant 0 : index
    %608 = vector.load %arg8[%607, %c0_194, %c0_195] : memref<8x8x512xf32, #tpu.memory_space<vmem>>, vector<1x8x512xf32>
    %609 = vector.shape_cast %608 : vector<1x8x512xf32> to vector<8x512xf32>
    %cst_196 = arith.constant dense<0.000000e+00> : vector<8x512xf32>
    %610 = tpu.matmul %605, %604, %cst_196 {dimension_numbers = #tpu.dot_dimension_numbers<[1], [0], [0], [1], [0, 0, 1, 1], [], []>} : vector<8x128xbf16>, vector<128x512xbf16>, vector<8x512xf32> -> vector<8x512xf32>
    %611 = arith.addf %609, %610 : vector<8x512xf32>
    %612 = vector.extract_strided_slice %611 {offsets = [0, 0], sizes = [8, 128], strides = [1, 1]} : vector<8x512xf32> to vector<8x128xf32>
    %613 = arith.negf %612 : vector<8x128xf32>
    %614 = math.exp %613 : vector<8x128xf32>
    %cst_197 = arith.constant 1.000000e+00 : f32
    %615 = vector.broadcast %cst_197 : f32 to vector<8x128xf32>
    %616 = arith.addf %615, %614 : vector<8x128xf32>
    %617 = arith.divf %615, %616 : vector<8x128xf32>
    %618 = vector.extract_strided_slice %611 {offsets = [0, 128], sizes = [8, 128], strides = [1, 1]} : vector<8x512xf32> to vector<8x128xf32>
    %619 = arith.negf %618 : vector<8x128xf32>
    %620 = math.exp %619 : vector<8x128xf32>
    %cst_198 = arith.constant 1.000000e+00 : f32
    %621 = vector.broadcast %cst_198 : f32 to vector<8x128xf32>
    %622 = arith.addf %621, %620 : vector<8x128xf32>
    %623 = arith.divf %621, %622 : vector<8x128xf32>
    %624 = vector.extract_strided_slice %611 {offsets = [0, 256], sizes = [8, 128], strides = [1, 1]} : vector<8x512xf32> to vector<8x128xf32>
    %625 = math.tanh %624 : vector<8x128xf32>
    %626 = vector.extract_strided_slice %611 {offsets = [0, 384], sizes = [8, 128], strides = [1, 1]} : vector<8x512xf32> to vector<8x128xf32>
    %627 = arith.negf %626 : vector<8x128xf32>
    %628 = math.exp %627 : vector<8x128xf32>
    %cst_199 = arith.constant 1.000000e+00 : f32
    %629 = vector.broadcast %cst_199 : f32 to vector<8x128xf32>
    %630 = arith.addf %629, %628 : vector<8x128xf32>
    %631 = arith.divf %629, %630 : vector<8x128xf32>
    %632 = arith.mulf %623, %606 : vector<8x128xf32>
    %633 = arith.mulf %617, %625 : vector<8x128xf32>
    %634 = arith.addf %632, %633 : vector<8x128xf32>
    %635 = math.tanh %634 : vector<8x128xf32>
    %636 = arith.mulf %631, %635 : vector<8x128xf32>
    %637 = arith.truncf %636 : vector<8x128xf32> to vector<8x128xbf16>
    %638 = arith.index_cast %c0_i32_193 : i32 to index
    %c0_200 = arith.constant 0 : index
    %c0_201 = arith.constant 0 : index
    %639 = vector.load %arg7[%638, %c0_200, %c0_201] : memref<8x8x128xbf16, #tpu.memory_space<vmem>>, vector<1x8x128xbf16>
    %640 = vector.shape_cast %639 : vector<1x8x128xbf16> to vector<8x128xbf16>
    %641 = vector.shape_cast %637 : vector<8x128xbf16> to vector<1x8x128xbf16>
    tpu.vector_store %arg7[%638, %c0_200, %c0_201], %641 {strides = array<i32>} : memref<8x8x128xbf16, #tpu.memory_space<vmem>>, vector<1x8x128xbf16>,
    %c1_i32_202 = arith.constant 1 : i32
    %642 = arith.index_cast %c1_i32_202 : i32 to index
    %c0_203 = arith.constant 0 : index
    %c0_204 = arith.constant 0 : index
    %643 = vector.load %arg8[%642, %c0_203, %c0_204] : memref<8x8x512xf32, #tpu.memory_space<vmem>>, vector<1x8x512xf32>
    %644 = vector.shape_cast %643 : vector<1x8x512xf32> to vector<8x512xf32>
    %cst_205 = arith.constant dense<0.000000e+00> : vector<8x512xf32>
    %645 = tpu.matmul %637, %604, %cst_205 {dimension_numbers = #tpu.dot_dimension_numbers<[1], [0], [0], [1], [0, 0, 1, 1], [], []>} : vector<8x128xbf16>, vector<128x512xbf16>, vector<8x512xf32> -> vector<8x512xf32>
    %646 = arith.addf %644, %645 : vector<8x512xf32>
    %647 = vector.extract_strided_slice %646 {offsets = [0, 0], sizes = [8, 128], strides = [1, 1]} : vector<8x512xf32> to vector<8x128xf32>
    %648 = arith.negf %647 : vector<8x128xf32>
    %649 = math.exp %648 : vector<8x128xf32>
    %cst_206 = arith.constant 1.000000e+00 : f32
    %650 = vector.broadcast %cst_206 : f32 to vector<8x128xf32>
    %651 = arith.addf %650, %649 : vector<8x128xf32>
    %652 = arith.divf %650, %651 : vector<8x128xf32>
    %653 = vector.extract_strided_slice %646 {offsets = [0, 128], sizes = [8, 128], strides = [1, 1]} : vector<8x512xf32> to vector<8x128xf32>
    %654 = arith.negf %653 : vector<8x128xf32>
    %655 = math.exp %654 : vector<8x128xf32>
    %cst_207 = arith.constant 1.000000e+00 : f32
    %656 = vector.broadcast %cst_207 : f32 to vector<8x128xf32>
    %657 = arith.addf %656, %655 : vector<8x128xf32>
    %658 = arith.divf %656, %657 : vector<8x128xf32>
    %659 = vector.extract_strided_slice %646 {offsets = [0, 256], sizes = [8, 128], strides = [1, 1]} : vector<8x512xf32> to vector<8x128xf32>
    %660 = math.tanh %659 : vector<8x128xf32>
    %661 = vector.extract_strided_slice %646 {offsets = [0, 384], sizes = [8, 128], strides = [1, 1]} : vector<8x512xf32> to vector<8x128xf32>
    %662 = arith.negf %661 : vector<8x128xf32>
    %663 = math.exp %662 : vector<8x128xf32>
    %cst_208 = arith.constant 1.000000e+00 : f32
    %664 = vector.broadcast %cst_208 : f32 to vector<8x128xf32>
    %665 = arith.addf %664, %663 : vector<8x128xf32>
    %666 = arith.divf %664, %665 : vector<8x128xf32>
    %667 = arith.mulf %658, %634 : vector<8x128xf32>
    %668 = arith.mulf %652, %660 : vector<8x128xf32>
    %669 = arith.addf %667, %668 : vector<8x128xf32>
    %670 = math.tanh %669 : vector<8x128xf32>
    %671 = arith.mulf %666, %670 : vector<8x128xf32>
    %672 = arith.truncf %671 : vector<8x128xf32> to vector<8x128xbf16>
    %673 = arith.index_cast %c1_i32_202 : i32 to index
    %c0_209 = arith.constant 0 : index
    %c0_210 = arith.constant 0 : index
    %674 = vector.load %arg7[%673, %c0_209, %c0_210] : memref<8x8x128xbf16, #tpu.memory_space<vmem>>, vector<1x8x128xbf16>
    %675 = vector.shape_cast %674 : vector<1x8x128xbf16> to vector<8x128xbf16>
    %676 = vector.shape_cast %672 : vector<8x128xbf16> to vector<1x8x128xbf16>
    tpu.vector_store %arg7[%673, %c0_209, %c0_210], %676 {strides = array<i32>} : memref<8x8x128xbf16, #tpu.memory_space<vmem>>, vector<1x8x128xbf16>,
    %c2_i32_211 = arith.constant 2 : i32
    %677 = arith.index_cast %c2_i32_211 : i32 to index
    %c0_212 = arith.constant 0 : index
    %c0_213 = arith.constant 0 : index
    %678 = vector.load %arg8[%677, %c0_212, %c0_213] : memref<8x8x512xf32, #tpu.memory_space<vmem>>, vector<1x8x512xf32>
    %679 = vector.shape_cast %678 : vector<1x8x512xf32> to vector<8x512xf32>
    %cst_214 = arith.constant dense<0.000000e+00> : vector<8x512xf32>
    %680 = tpu.matmul %672, %604, %cst_214 {dimension_numbers = #tpu.dot_dimension_numbers<[1], [0], [0], [1], [0, 0, 1, 1], [], []>} : vector<8x128xbf16>, vector<128x512xbf16>, vector<8x512xf32> -> vector<8x512xf32>
    %681 = arith.addf %679, %680 : vector<8x512xf32>
    %682 = vector.extract_strided_slice %681 {offsets = [0, 0], sizes = [8, 128], strides = [1, 1]} : vector<8x512xf32> to vector<8x128xf32>
    %683 = arith.negf %682 : vector<8x128xf32>
    %684 = math.exp %683 : vector<8x128xf32>
    %cst_215 = arith.constant 1.000000e+00 : f32
    %685 = vector.broadcast %cst_215 : f32 to vector<8x128xf32>
    %686 = arith.addf %685, %684 : vector<8x128xf32>
    %687 = arith.divf %685, %686 : vector<8x128xf32>
    %688 = vector.extract_strided_slice %681 {offsets = [0, 128], sizes = [8, 128], strides = [1, 1]} : vector<8x512xf32> to vector<8x128xf32>
    %689 = arith.negf %688 : vector<8x128xf32>
    %690 = math.exp %689 : vector<8x128xf32>
    %cst_216 = arith.constant 1.000000e+00 : f32
    %691 = vector.broadcast %cst_216 : f32 to vector<8x128xf32>
    %692 = arith.addf %691, %690 : vector<8x128xf32>
    %693 = arith.divf %691, %692 : vector<8x128xf32>
    %694 = vector.extract_strided_slice %681 {offsets = [0, 256], sizes = [8, 128], strides = [1, 1]} : vector<8x512xf32> to vector<8x128xf32>
    %695 = math.tanh %694 : vector<8x128xf32>
    %696 = vector.extract_strided_slice %681 {offsets = [0, 384], sizes = [8, 128], strides = [1, 1]} : vector<8x512xf32> to vector<8x128xf32>
    %697 = arith.negf %696 : vector<8x128xf32>
    %698 = math.exp %697 : vector<8x128xf32>
    %cst_217 = arith.constant 1.000000e+00 : f32
    %699 = vector.broadcast %cst_217 : f32 to vector<8x128xf32>
    %700 = arith.addf %699, %698 : vector<8x128xf32>
    %701 = arith.divf %699, %700 : vector<8x128xf32>
    %702 = arith.mulf %693, %669 : vector<8x128xf32>
    %703 = arith.mulf %687, %695 : vector<8x128xf32>
    %704 = arith.addf %702, %703 : vector<8x128xf32>
    %705 = math.tanh %704 : vector<8x128xf32>
    %706 = arith.mulf %701, %705 : vector<8x128xf32>
    %707 = arith.truncf %706 : vector<8x128xf32> to vector<8x128xbf16>
    %708 = arith.index_cast %c2_i32_211 : i32 to index
    %c0_218 = arith.constant 0 : index
    %c0_219 = arith.constant 0 : index
    %709 = vector.load %arg7[%708, %c0_218, %c0_219] : memref<8x8x128xbf16, #tpu.memory_space<vmem>>, vector<1x8x128xbf16>
    %710 = vector.shape_cast %709 : vector<1x8x128xbf16> to vector<8x128xbf16>
    %711 = vector.shape_cast %707 : vector<8x128xbf16> to vector<1x8x128xbf16>
    tpu.vector_store %arg7[%708, %c0_218, %c0_219], %711 {strides = array<i32>} : memref<8x8x128xbf16, #tpu.memory_space<vmem>>, vector<1x8x128xbf16>,
    %c3_i32_220 = arith.constant 3 : i32
    %712 = arith.index_cast %c3_i32_220 : i32 to index
    %c0_221 = arith.constant 0 : index
    %c0_222 = arith.constant 0 : index
    %713 = vector.load %arg8[%712, %c0_221, %c0_222] : memref<8x8x512xf32, #tpu.memory_space<vmem>>, vector<1x8x512xf32>
    %714 = vector.shape_cast %713 : vector<1x8x512xf32> to vector<8x512xf32>
    %cst_223 = arith.constant dense<0.000000e+00> : vector<8x512xf32>
    %715 = tpu.matmul %707, %604, %cst_223 {dimension_numbers = #tpu.dot_dimension_numbers<[1], [0], [0], [1], [0, 0, 1, 1], [], []>} : vector<8x128xbf16>, vector<128x512xbf16>, vector<8x512xf32> -> vector<8x512xf32>
    %716 = arith.addf %714, %715 : vector<8x512xf32>
    %717 = vector.extract_strided_slice %716 {offsets = [0, 0], sizes = [8, 128], strides = [1, 1]} : vector<8x512xf32> to vector<8x128xf32>
    %718 = arith.negf %717 : vector<8x128xf32>
    %719 = math.exp %718 : vector<8x128xf32>
    %cst_224 = arith.constant 1.000000e+00 : f32
    %720 = vector.broadcast %cst_224 : f32 to vector<8x128xf32>
    %721 = arith.addf %720, %719 : vector<8x128xf32>
    %722 = arith.divf %720, %721 : vector<8x128xf32>
    %723 = vector.extract_strided_slice %716 {offsets = [0, 128], sizes = [8, 128], strides = [1, 1]} : vector<8x512xf32> to vector<8x128xf32>
    %724 = arith.negf %723 : vector<8x128xf32>
    %725 = math.exp %724 : vector<8x128xf32>
    %cst_225 = arith.constant 1.000000e+00 : f32
    %726 = vector.broadcast %cst_225 : f32 to vector<8x128xf32>
    %727 = arith.addf %726, %725 : vector<8x128xf32>
    %728 = arith.divf %726, %727 : vector<8x128xf32>
    %729 = vector.extract_strided_slice %716 {offsets = [0, 256], sizes = [8, 128], strides = [1, 1]} : vector<8x512xf32> to vector<8x128xf32>
    %730 = math.tanh %729 : vector<8x128xf32>
    %731 = vector.extract_strided_slice %716 {offsets = [0, 384], sizes = [8, 128], strides = [1, 1]} : vector<8x512xf32> to vector<8x128xf32>
    %732 = arith.negf %731 : vector<8x128xf32>
    %733 = math.exp %732 : vector<8x128xf32>
    %cst_226 = arith.constant 1.000000e+00 : f32
    %734 = vector.broadcast %cst_226 : f32 to vector<8x128xf32>
    %735 = arith.addf %734, %733 : vector<8x128xf32>
    %736 = arith.divf %734, %735 : vector<8x128xf32>
    %737 = arith.mulf %728, %704 : vector<8x128xf32>
    %738 = arith.mulf %722, %730 : vector<8x128xf32>
    %739 = arith.addf %737, %738 : vector<8x128xf32>
    %740 = math.tanh %739 : vector<8x128xf32>
    %741 = arith.mulf %736, %740 : vector<8x128xf32>
    %742 = arith.truncf %741 : vector<8x128xf32> to vector<8x128xbf16>
    %743 = arith.index_cast %c3_i32_220 : i32 to index
    %c0_227 = arith.constant 0 : index
    %c0_228 = arith.constant 0 : index
    %744 = vector.load %arg7[%743, %c0_227, %c0_228] : memref<8x8x128xbf16, #tpu.memory_space<vmem>>, vector<1x8x128xbf16>
    %745 = vector.shape_cast %744 : vector<1x8x128xbf16> to vector<8x128xbf16>
    %746 = vector.shape_cast %742 : vector<8x128xbf16> to vector<1x8x128xbf16>
    tpu.vector_store %arg7[%743, %c0_227, %c0_228], %746 {strides = array<i32>} : memref<8x8x128xbf16, #tpu.memory_space<vmem>>, vector<1x8x128xbf16>,
    %c4_i32_229 = arith.constant 4 : i32
    %747 = arith.index_cast %c4_i32_229 : i32 to index
    %c0_230 = arith.constant 0 : index
    %c0_231 = arith.constant 0 : index
    %748 = vector.load %arg8[%747, %c0_230, %c0_231] : memref<8x8x512xf32, #tpu.memory_space<vmem>>, vector<1x8x512xf32>
    %749 = vector.shape_cast %748 : vector<1x8x512xf32> to vector<8x512xf32>
    %cst_232 = arith.constant dense<0.000000e+00> : vector<8x512xf32>
    %750 = tpu.matmul %742, %604, %cst_232 {dimension_numbers = #tpu.dot_dimension_numbers<[1], [0], [0], [1], [0, 0, 1, 1], [], []>} : vector<8x128xbf16>, vector<128x512xbf16>, vector<8x512xf32> -> vector<8x512xf32>
    %751 = arith.addf %749, %750 : vector<8x512xf32>
    %752 = vector.extract_strided_slice %751 {offsets = [0, 0], sizes = [8, 128], strides = [1, 1]} : vector<8x512xf32> to vector<8x128xf32>
    %753 = arith.negf %752 : vector<8x128xf32>
    %754 = math.exp %753 : vector<8x128xf32>
    %cst_233 = arith.constant 1.000000e+00 : f32
    %755 = vector.broadcast %cst_233 : f32 to vector<8x128xf32>
    %756 = arith.addf %755, %754 : vector<8x128xf32>
    %757 = arith.divf %755, %756 : vector<8x128xf32>
    %758 = vector.extract_strided_slice %751 {offsets = [0, 128], sizes = [8, 128], strides = [1, 1]} : vector<8x512xf32> to vector<8x128xf32>
    %759 = arith.negf %758 : vector<8x128xf32>
    %760 = math.exp %759 : vector<8x128xf32>
    %cst_234 = arith.constant 1.000000e+00 : f32
    %761 = vector.broadcast %cst_234 : f32 to vector<8x128xf32>
    %762 = arith.addf %761, %760 : vector<8x128xf32>
    %763 = arith.divf %761, %762 : vector<8x128xf32>
    %764 = vector.extract_strided_slice %751 {offsets = [0, 256], sizes = [8, 128], strides = [1, 1]} : vector<8x512xf32> to vector<8x128xf32>
    %765 = math.tanh %764 : vector<8x128xf32>
    %766 = vector.extract_strided_slice %751 {offsets = [0, 384], sizes = [8, 128], strides = [1, 1]} : vector<8x512xf32> to vector<8x128xf32>
    %767 = arith.negf %766 : vector<8x128xf32>
    %768 = math.exp %767 : vector<8x128xf32>
    %cst_235 = arith.constant 1.000000e+00 : f32
    %769 = vector.broadcast %cst_235 : f32 to vector<8x128xf32>
    %770 = arith.addf %769, %768 : vector<8x128xf32>
    %771 = arith.divf %769, %770 : vector<8x128xf32>
    %772 = arith.mulf %763, %739 : vector<8x128xf32>
    %773 = arith.mulf %757, %765 : vector<8x128xf32>
    %774 = arith.addf %772, %773 : vector<8x128xf32>
    %775 = math.tanh %774 : vector<8x128xf32>
    %776 = arith.mulf %771, %775 : vector<8x128xf32>
    %777 = arith.truncf %776 : vector<8x128xf32> to vector<8x128xbf16>
    %778 = arith.index_cast %c4_i32_229 : i32 to index
    %c0_236 = arith.constant 0 : index
    %c0_237 = arith.constant 0 : index
    %779 = vector.load %arg7[%778, %c0_236, %c0_237] : memref<8x8x128xbf16, #tpu.memory_space<vmem>>, vector<1x8x128xbf16>
    %780 = vector.shape_cast %779 : vector<1x8x128xbf16> to vector<8x128xbf16>
    %781 = vector.shape_cast %777 : vector<8x128xbf16> to vector<1x8x128xbf16>
    tpu.vector_store %arg7[%778, %c0_236, %c0_237], %781 {strides = array<i32>} : memref<8x8x128xbf16, #tpu.memory_space<vmem>>, vector<1x8x128xbf16>,
    %c5_i32_238 = arith.constant 5 : i32
    %782 = arith.index_cast %c5_i32_238 : i32 to index
    %c0_239 = arith.constant 0 : index
    %c0_240 = arith.constant 0 : index
    %783 = vector.load %arg8[%782, %c0_239, %c0_240] : memref<8x8x512xf32, #tpu.memory_space<vmem>>, vector<1x8x512xf32>
    %784 = vector.shape_cast %783 : vector<1x8x512xf32> to vector<8x512xf32>
    %cst_241 = arith.constant dense<0.000000e+00> : vector<8x512xf32>
    %785 = tpu.matmul %777, %604, %cst_241 {dimension_numbers = #tpu.dot_dimension_numbers<[1], [0], [0], [1], [0, 0, 1, 1], [], []>} : vector<8x128xbf16>, vector<128x512xbf16>, vector<8x512xf32> -> vector<8x512xf32>
    %786 = arith.addf %784, %785 : vector<8x512xf32>
    %787 = vector.extract_strided_slice %786 {offsets = [0, 0], sizes = [8, 128], strides = [1, 1]} : vector<8x512xf32> to vector<8x128xf32>
    %788 = arith.negf %787 : vector<8x128xf32>
    %789 = math.exp %788 : vector<8x128xf32>
    %cst_242 = arith.constant 1.000000e+00 : f32
    %790 = vector.broadcast %cst_242 : f32 to vector<8x128xf32>
    %791 = arith.addf %790, %789 : vector<8x128xf32>
    %792 = arith.divf %790, %791 : vector<8x128xf32>
    %793 = vector.extract_strided_slice %786 {offsets = [0, 128], sizes = [8, 128], strides = [1, 1]} : vector<8x512xf32> to vector<8x128xf32>
    %794 = arith.negf %793 : vector<8x128xf32>
    %795 = math.exp %794 : vector<8x128xf32>
    %cst_243 = arith.constant 1.000000e+00 : f32
    %796 = vector.broadcast %cst_243 : f32 to vector<8x128xf32>
    %797 = arith.addf %796, %795 : vector<8x128xf32>
    %798 = arith.divf %796, %797 : vector<8x128xf32>
    %799 = vector.extract_strided_slice %786 {offsets = [0, 256], sizes = [8, 128], strides = [1, 1]} : vector<8x512xf32> to vector<8x128xf32>
    %800 = math.tanh %799 : vector<8x128xf32>
    %801 = vector.extract_strided_slice %786 {offsets = [0, 384], sizes = [8, 128], strides = [1, 1]} : vector<8x512xf32> to vector<8x128xf32>
    %802 = arith.negf %801 : vector<8x128xf32>
    %803 = math.exp %802 : vector<8x128xf32>
    %cst_244 = arith.constant 1.000000e+00 : f32
    %804 = vector.broadcast %cst_244 : f32 to vector<8x128xf32>
    %805 = arith.addf %804, %803 : vector<8x128xf32>
    %806 = arith.divf %804, %805 : vector<8x128xf32>
    %807 = arith.mulf %798, %774 : vector<8x128xf32>
    %808 = arith.mulf %792, %800 : vector<8x128xf32>
    %809 = arith.addf %807, %808 : vector<8x128xf32>
    %810 = math.tanh %809 : vector<8x128xf32>
    %811 = arith.mulf %806, %810 : vector<8x128xf32>
    %812 = arith.truncf %811 : vector<8x128xf32> to vector<8x128xbf16>
    %813 = arith.index_cast %c5_i32_238 : i32 to index
    %c0_245 = arith.constant 0 : index
    %c0_246 = arith.constant 0 : index
    %814 = vector.load %arg7[%813, %c0_245, %c0_246] : memref<8x8x128xbf16, #tpu.memory_space<vmem>>, vector<1x8x128xbf16>
    %815 = vector.shape_cast %814 : vector<1x8x128xbf16> to vector<8x128xbf16>
    %816 = vector.shape_cast %812 : vector<8x128xbf16> to vector<1x8x128xbf16>
    tpu.vector_store %arg7[%813, %c0_245, %c0_246], %816 {strides = array<i32>} : memref<8x8x128xbf16, #tpu.memory_space<vmem>>, vector<1x8x128xbf16>,
    %c6_i32_247 = arith.constant 6 : i32
    %817 = arith.index_cast %c6_i32_247 : i32 to index
    %c0_248 = arith.constant 0 : index
    %c0_249 = arith.constant 0 : index
    %818 = vector.load %arg8[%817, %c0_248, %c0_249] : memref<8x8x512xf32, #tpu.memory_space<vmem>>, vector<1x8x512xf32>
    %819 = vector.shape_cast %818 : vector<1x8x512xf32> to vector<8x512xf32>
    %cst_250 = arith.constant dense<0.000000e+00> : vector<8x512xf32>
    %820 = tpu.matmul %812, %604, %cst_250 {dimension_numbers = #tpu.dot_dimension_numbers<[1], [0], [0], [1], [0, 0, 1, 1], [], []>} : vector<8x128xbf16>, vector<128x512xbf16>, vector<8x512xf32> -> vector<8x512xf32>
    %821 = arith.addf %819, %820 : vector<8x512xf32>
    %822 = vector.extract_strided_slice %821 {offsets = [0, 0], sizes = [8, 128], strides = [1, 1]} : vector<8x512xf32> to vector<8x128xf32>
    %823 = arith.negf %822 : vector<8x128xf32>
    %824 = math.exp %823 : vector<8x128xf32>
    %cst_251 = arith.constant 1.000000e+00 : f32
    %825 = vector.broadcast %cst_251 : f32 to vector<8x128xf32>
    %826 = arith.addf %825, %824 : vector<8x128xf32>
    %827 = arith.divf %825, %826 : vector<8x128xf32>
    %828 = vector.extract_strided_slice %821 {offsets = [0, 128], sizes = [8, 128], strides = [1, 1]} : vector<8x512xf32> to vector<8x128xf32>
    %829 = arith.negf %828 : vector<8x128xf32>
    %830 = math.exp %829 : vector<8x128xf32>
    %cst_252 = arith.constant 1.000000e+00 : f32
    %831 = vector.broadcast %cst_252 : f32 to vector<8x128xf32>
    %832 = arith.addf %831, %830 : vector<8x128xf32>
    %833 = arith.divf %831, %832 : vector<8x128xf32>
    %834 = vector.extract_strided_slice %821 {offsets = [0, 256], sizes = [8, 128], strides = [1, 1]} : vector<8x512xf32> to vector<8x128xf32>
    %835 = math.tanh %834 : vector<8x128xf32>
    %836 = vector.extract_strided_slice %821 {offsets = [0, 384], sizes = [8, 128], strides = [1, 1]} : vector<8x512xf32> to vector<8x128xf32>
    %837 = arith.negf %836 : vector<8x128xf32>
    %838 = math.exp %837 : vector<8x128xf32>
    %cst_253 = arith.constant 1.000000e+00 : f32
    %839 = vector.broadcast %cst_253 : f32 to vector<8x128xf32>
    %840 = arith.addf %839, %838 : vector<8x128xf32>
    %841 = arith.divf %839, %840 : vector<8x128xf32>
    %842 = arith.mulf %833, %809 : vector<8x128xf32>
    %843 = arith.mulf %827, %835 : vector<8x128xf32>
    %844 = arith.addf %842, %843 : vector<8x128xf32>
    %845 = math.tanh %844 : vector<8x128xf32>
    %846 = arith.mulf %841, %845 : vector<8x128xf32>
    %847 = arith.truncf %846 : vector<8x128xf32> to vector<8x128xbf16>
    %848 = arith.index_cast %c6_i32_247 : i32 to index
    %c0_254 = arith.constant 0 : index
    %c0_255 = arith.constant 0 : index
    %849 = vector.load %arg7[%848, %c0_254, %c0_255] : memref<8x8x128xbf16, #tpu.memory_space<vmem>>, vector<1x8x128xbf16>
    %850 = vector.shape_cast %849 : vector<1x8x128xbf16> to vector<8x128xbf16>
    %851 = vector.shape_cast %847 : vector<8x128xbf16> to vector<1x8x128xbf16>
    tpu.vector_store %arg7[%848, %c0_254, %c0_255], %851 {strides = array<i32>} : memref<8x8x128xbf16, #tpu.memory_space<vmem>>, vector<1x8x128xbf16>,
    %c7_i32_256 = arith.constant 7 : i32
    %852 = arith.index_cast %c7_i32_256 : i32 to index
    %c0_257 = arith.constant 0 : index
    %c0_258 = arith.constant 0 : index
    %853 = vector.load %arg8[%852, %c0_257, %c0_258] : memref<8x8x512xf32, #tpu.memory_space<vmem>>, vector<1x8x512xf32>
    %854 = vector.shape_cast %853 : vector<1x8x512xf32> to vector<8x512xf32>
    %cst_259 = arith.constant dense<0.000000e+00> : vector<8x512xf32>
    %855 = tpu.matmul %847, %604, %cst_259 {dimension_numbers = #tpu.dot_dimension_numbers<[1], [0], [0], [1], [0, 0, 1, 1], [], []>} : vector<8x128xbf16>, vector<128x512xbf16>, vector<8x512xf32> -> vector<8x512xf32>
    %856 = arith.addf %854, %855 : vector<8x512xf32>
    %857 = vector.extract_strided_slice %856 {offsets = [0, 0], sizes = [8, 128], strides = [1, 1]} : vector<8x512xf32> to vector<8x128xf32>
    %858 = arith.negf %857 : vector<8x128xf32>
    %859 = math.exp %858 : vector<8x128xf32>
    %cst_260 = arith.constant 1.000000e+00 : f32
    %860 = vector.broadcast %cst_260 : f32 to vector<8x128xf32>
    %861 = arith.addf %860, %859 : vector<8x128xf32>
    %862 = arith.divf %860, %861 : vector<8x128xf32>
    %863 = vector.extract_strided_slice %856 {offsets = [0, 128], sizes = [8, 128], strides = [1, 1]} : vector<8x512xf32> to vector<8x128xf32>
    %864 = arith.negf %863 : vector<8x128xf32>
    %865 = math.exp %864 : vector<8x128xf32>
    %cst_261 = arith.constant 1.000000e+00 : f32
    %866 = vector.broadcast %cst_261 : f32 to vector<8x128xf32>
    %867 = arith.addf %866, %865 : vector<8x128xf32>
    %868 = arith.divf %866, %867 : vector<8x128xf32>
    %869 = vector.extract_strided_slice %856 {offsets = [0, 256], sizes = [8, 128], strides = [1, 1]} : vector<8x512xf32> to vector<8x128xf32>
    %870 = math.tanh %869 : vector<8x128xf32>
    %871 = vector.extract_strided_slice %856 {offsets = [0, 384], sizes = [8, 128], strides = [1, 1]} : vector<8x512xf32> to vector<8x128xf32>
    %872 = arith.negf %871 : vector<8x128xf32>
    %873 = math.exp %872 : vector<8x128xf32>
    %cst_262 = arith.constant 1.000000e+00 : f32
    %874 = vector.broadcast %cst_262 : f32 to vector<8x128xf32>
    %875 = arith.addf %874, %873 : vector<8x128xf32>
    %876 = arith.divf %874, %875 : vector<8x128xf32>
    %877 = arith.mulf %868, %844 : vector<8x128xf32>
    %878 = arith.mulf %862, %870 : vector<8x128xf32>
    %879 = arith.addf %877, %878 : vector<8x128xf32>
    %880 = math.tanh %879 : vector<8x128xf32>
    %881 = arith.mulf %876, %880 : vector<8x128xf32>
    %882 = arith.truncf %881 : vector<8x128xf32> to vector<8x128xbf16>
    %883 = arith.index_cast %c7_i32_256 : i32 to index
    %c0_263 = arith.constant 0 : index
    %c0_264 = arith.constant 0 : index
    %884 = vector.load %arg7[%883, %c0_263, %c0_264] : memref<8x8x128xbf16, #tpu.memory_space<vmem>>, vector<1x8x128xbf16>
    %885 = vector.shape_cast %884 : vector<1x8x128xbf16> to vector<8x128xbf16>
    %886 = vector.shape_cast %882 : vector<8x128xbf16> to vector<1x8x128xbf16>
    tpu.vector_store %arg7[%883, %c0_263, %c0_264], %886 {strides = array<i32>} : memref<8x8x128xbf16, #tpu.memory_space<vmem>>, vector<1x8x128xbf16>,
    %c8_i32_265 = arith.constant 8 : i32
    %c0_266 = arith.constant 0 : index
    %c0_267 = arith.constant 0 : index
    %c0_268 = arith.constant 0 : index
    %887 = vector.load %arg7[%c0_266, %c0_267, %c0_268] : memref<8x8x128xbf16, #tpu.memory_space<vmem>>, vector<8x8x128xbf16>
    %888 = vector.shape_cast %887 : vector<8x8x128xbf16> to vector<64x128xbf16>
    %c0_269 = arith.constant 0 : index
    %c0_270 = arith.constant 0 : index
    %889 = vector.load %arg4[%c0_269, %c0_270] : memref<128x128xbf16, #tpu.memory_space<vmem>>, vector<128x128xbf16>
    %cst_271 = arith.constant dense<0.000000e+00> : vector<64x128xf32>
    %890 = tpu.matmul %888, %889, %cst_271 {dimension_numbers = #tpu.dot_dimension_numbers<[1], [0], [0], [1], [0, 0, 1, 1], [], []>} : vector<64x128xbf16>, vector<128x128xbf16>, vector<64x128xf32> -> vector<64x128xf32>
    %c0_272 = arith.constant 0 : index
    %c0_273 = arith.constant 0 : index
    %891 = vector.load %arg5[%c0_272, %c0_273] : memref<1x128xf32, #tpu.memory_space<vmem>>, vector<1x128xf32>
    %892 = vector.broadcast %891 : vector<1x128xf32> to vector<64x128xf32>
    %893 = arith.addf %890, %892 : vector<64x128xf32>
    %894 = vector.shape_cast %893 : vector<64x128xf32> to vector<8x8x128xf32>
    %c0_274 = arith.constant 0 : index
    %c0_275 = arith.constant 0 : index
    %c0_276 = arith.constant 0 : index
    %895 = vector.load %arg6[%c0_274, %c0_275, %c0_276] : memref<8x8x128xf32, #tpu.memory_space<vmem>>, vector<8x8x128xf32>
    tpu.vector_store %arg6[%c0_274, %c0_275, %c0_276], %894 {strides = array<i32>} : memref<8x8x128xf32, #tpu.memory_space<vmem>>, vector<8x8x128xf32>,
    return
  }
}

</mosaic_0001>

<llo_original>
// kernel: rnn_lm_forward.1
$region0: #{rnn_lm_forward.1}
  #allocation0 [shape = 'u32[]', space=smem, size = 0x4, offset = 0x4, fixed_abs, tag = 'smem constant byte address 0x4 - core index']
  #allocation1 [shape = 'u32[144,128]{1,0:T(1,128)}', space=vmem, size = 0x12000, scoped, tag = 'internal scratch']
  #allocation2 [shape = 'bf16[8,8,128]{2,1,0:T(8,128)(2,1)}', space=vmem, size = 0x4000, scoped, tag = 'scratch operand']
  #allocation3 [shape = 'f32[8,8,512]{2,1,0:T(8,128)}', space=vmem, size = 0x20000, scoped, tag = 'scratch operand']
  %s0 = inlined_call_operand.vmem [shape: bf16[8,8,128], index: 0, kind: input, shape index: {}]
  %s1 = inlined_call_operand.vmem [shape: bf16[3,128,512], index: 1, kind: input, shape index: {}]
  %s2 = inlined_call_operand.vmem [shape: bf16[3,128,512], index: 2, kind: input, shape index: {}]
  %s3 = inlined_call_operand.vmem [shape: f32[3,1,512], index: 3, kind: input, shape index: {}]
  %s4 = inlined_call_operand.vmem [shape: bf16[128,128], index: 4, kind: input, shape index: {}]
  %s5 = inlined_call_operand.vmem [shape: f32[1,128], index: 5, kind: input, shape index: {}]
  %s6 = inlined_call_operand.vmem [shape: f32[8,8,128], index: 6, kind: output, shape index: {}]
  %s7 = sld [smem:[#allocation0]]
  $region34: #{rnn_lm_forward.1} parent=0
    _
  %s9 = ssub.s32 1, %s7
  %s10 = scalar_select 0, %s9, %s7
  // Predicated region
  $region2: #{rnn_lm_forward.1} parent=0 // pred_check
    _
  $region3: #{rnn_lm_forward.1} parent=0 // pred_check_branch
    %12 = sbr.rel (0) target = $region5
  $region4: #{rnn_lm_forward.1} parent=0 // pred_region
    _
  $region5: #{rnn_lm_forward.1} parent=0 // pred_fallthru
    _
  // Predicated region
  $region6: #{rnn_lm_forward.1} parent=0 // pred_check
    _
  $region7: #{rnn_lm_forward.1} parent=0 // pred_check_branch
    %14 = sbr.rel (0) target = $region9
  $region8: #{rnn_lm_forward.1} parent=0 // pred_region
    _
  $region9: #{rnn_lm_forward.1} parent=0 // pred_fallthru
    _
  // Predicated region
  $region10: #{rnn_lm_forward.1} parent=0 // pred_check
    _
  $region11: #{rnn_lm_forward.1} parent=0 // pred_check_branch
    %16 = sbr.rel (0) target = $region13
  $region12: #{rnn_lm_forward.1} parent=0 // pred_region
    _
  $region13: #{rnn_lm_forward.1} parent=0 // pred_fallthru
    _
  // Predicated region
  $region14: #{rnn_lm_forward.1} parent=0 // pred_check
    _
  $region15: #{rnn_lm_forward.1} parent=0 // pred_check_branch
    %18 = sbr.rel (0) target = $region17
  $region16: #{rnn_lm_forward.1} parent=0 // pred_region
    _
  $region17: #{rnn_lm_forward.1} parent=0 // pred_fallthru
    _
  // Predicated region
  $region18: #{rnn_lm_forward.1} parent=0 // pred_check
    _
  $region19: #{rnn_lm_forward.1} parent=0 // pred_check_branch
    %20 = sbr.rel (0) target = $region21
  $region20: #{rnn_lm_forward.1} parent=0 // pred_region
    _
  $region21: #{rnn_lm_forward.1} parent=0 // pred_fallthru
    _
  // Predicated region
  $region22: #{rnn_lm_forward.1} parent=0 // pred_check
    _
  $region23: #{rnn_lm_forward.1} parent=0 // pred_check_branch
    %22 = sbr.rel (0) target = $region25
  $region24: #{rnn_lm_forward.1} parent=0 // pred_region
    _
  $region25: #{rnn_lm_forward.1} parent=0 // pred_fallthru
    _
  %v24 = vld [vmem:[%s0] sm:$0xf]
  %v25 = vld [vmem:[%s0 + $0x4] sm:$0xf]
  %v26 = vld [vmem:[%s0 + $0x8] sm:$0xf]
  %v27 = vld [vmem:[%s0 + $0xc] sm:$0xf]
  %v28 = vld [vmem:[%s0 + $0x10] sm:$0xf]
  %v29 = vld [vmem:[%s0 + $0x14] sm:$0xf]
  %v30 = vld [vmem:[%s0 + $0x18] sm:$0xf]
  %v31 = vld [vmem:[%s0 + $0x1c] sm:$0xf]
  %32 = vst [vmem:[#allocation2] sm:$0xf] %v24
  %33 = vst [vmem:[#allocation2 + $0x4] sm:$0xf] %v25
  %34 = vst [vmem:[#allocation2 + $0x8] sm:$0xf] %v26
  %35 = vst [vmem:[#allocation2 + $0xc] sm:$0xf] %v27
  %36 = vst [vmem:[#allocation2 + $0x10] sm:$0xf] %v28
  %37 = vst [vmem:[#allocation2 + $0x14] sm:$0xf] %v29
  %38 = vst [vmem:[#allocation2 + $0x18] sm:$0xf] %v30
  %39 = vst [vmem:[#allocation2 + $0x1c] sm:$0xf] %v31
  %v40 = vld [vmem:[#allocation2] sm:$0xf]
  %v41 = vld [vmem:[#allocation2 + $0x4] sm:$0xf]
  %v42 = vld [vmem:[#allocation2 + $0x8] sm:$0xf]
  %v43 = vld [vmem:[#allocation2 + $0xc] sm:$0xf]
  %v44 = vld [vmem:[#allocation2 + $0x10] sm:$0xf]
  %v45 = vld [vmem:[#allocation2 + $0x14] sm:$0xf]
  %v46 = vld [vmem:[#allocation2 + $0x18] sm:$0xf]
  %v47 = vld [vmem:[#allocation2 + $0x1c] sm:$0xf]
  %v48 = vld [vmem:[%s1] sm:$0xff]
  %v49 = vld [vmem:[%s1 + $0x8] sm:$0xff]
  %v50 = vld [vmem:[%s1 + $0x10] sm:$0xff]
  %v51 = vld [vmem:[%s1 + $0x18] sm:$0xff]
  %v52 = vld [vmem:[%s1 + $0x20] sm:$0xff]
  %v53 = vld [vmem:[%s1 + $0x28] sm:$0xff]
  %v54 = vld [vmem:[%s1 + $0x30] sm:$0xff]
  %v55 = vld [vmem:[%s1 + $0x38] sm:$0xff]
  %v56 = vld [vmem:[%s1 + $0x40] sm:$0xff]
  %v57 = vld [vmem:[%s1 + $0x48] sm:$0xff]
  %v58 = vld [vmem:[%s1 + $0x50] sm:$0xff]
  %v59 = vld [vmem:[%s1 + $0x58] sm:$0xff]
  %v60 = vld [vmem:[%s1 + $0x60] sm:$0xff]
  %v61 = vld [vmem:[%s1 + $0x68] sm:$0xff]
  %v62 = vld [vmem:[%s1 + $0x70] sm:$0xff]
  %v63 = vld [vmem:[%s1 + $0x78] sm:$0xff]
  %v64 = vld [vmem:[%s1 + $0x80] sm:$0xff]
  %v65 = vld [vmem:[%s1 + $0x88] sm:$0xff]
  %v66 = vld [vmem:[%s1 + $0x90] sm:$0xff]
  %v67 = vld [vmem:[%s1 + $0x98] sm:$0xff]
  %v68 = vld [vmem:[%s1 + $0xa0] sm:$0xff]
  %v69 = vld [vmem:[%s1 + $0xa8] sm:$0xff]
  %v70 = vld [vmem:[%s1 + $0xb0] sm:$0xff]
  %v71 = vld [vmem:[%s1 + $0xb8] sm:$0xff]
  %v72 = vld [vmem:[%s1 + $0xc0] sm:$0xff]
  %v73 = vld [vmem:[%s1 + $0xc8] sm:$0xff]
  %v74 = vld [vmem:[%s1 + $0xd0] sm:$0xff]
  %v75 = vld [vmem:[%s1 + $0xd8] sm:$0xff]
  %v76 = vld [vmem:[%s1 + $0xe0] sm:$0xff]
  %v77 = vld [vmem:[%s1 + $0xe8] sm:$0xff]
  %v78 = vld [vmem:[%s1 + $0xf0] sm:$0xff]
  %v79 = vld [vmem:[%s1 + $0xf8] sm:$0xff]
  %v80 = vld [vmem:[%s3] sm:$0xf]
  %v82 = vlaneseq
  %v83 = vshrl.u32 %v82, 7
  %v84 = vsub.s32 0, %v83
  %v85 = vrot.slane %v80, %v84
  %v86 = vlaneseq
  %v87 = vshrl.u32 %v86, 7
  %v88 = vsub.s32 1, %v87
  %v89 = vrot.slane %v80, %v88
  %v90 = vlaneseq
  %v91 = vshrl.u32 %v90, 7
  %v92 = vsub.s32 2, %v91
  %v93 = vrot.slane %v80, %v92
  %v94 = vlaneseq
  %v95 = vshrl.u32 %v94, 7
  %v96 = vsub.s32 3, %v95
  %v97 = vrot.slane %v80, %v96
  %v110 = vunpack.c.l.b16 %v40
  %v111 = vunpack.c.l.b16 %v41
  %v112 = vunpack.c.l.b16 %v42
  %v113 = vunpack.c.l.b16 %v43
  %v114 = vunpack.c.l.b16 %v44
  %v115 = vunpack.c.l.b16 %v45
  %v116 = vunpack.c.l.b16 %v46
  %v117 = vunpack.c.l.b16 %v47
  %v118 = vpack.c.b16 %v111, %v110
  %v119 = vpack.c.b16 %v113, %v112
  %v120 = vpack.c.b16 %v115, %v114
  %v121 = vpack.c.b16 %v117, %v116
  %v158 = vunpack.c.l.b16 %v48
  %v159 = vunpack.c.h.b16 %v48
  %v160 = vunpack.c.l.b16 %v49
  %v161 = vunpack.c.h.b16 %v49
  %v162 = vunpack.c.l.b16 %v50
  %v163 = vunpack.c.h.b16 %v50
  %v164 = vunpack.c.l.b16 %v51
  %v165 = vunpack.c.h.b16 %v51
  %v166 = vunpack.c.l.b16 %v52
  %v167 = vunpack.c.h.b16 %v52
  %v168 = vunpack.c.l.b16 %v53
  %v169 = vunpack.c.h.b16 %v53
  %v170 = vunpack.c.l.b16 %v54
  %v171 = vunpack.c.h.b16 %v54
  %v172 = vunpack.c.l.b16 %v55
  %v173 = vunpack.c.h.b16 %v55
  %v174 = vunpack.c.l.b16 %v56
  %v175 = vunpack.c.h.b16 %v56
  %v176 = vunpack.c.l.b16 %v57
  %v177 = vunpack.c.h.b16 %v57
  %v178 = vunpack.c.l.b16 %v58
  %v179 = vunpack.c.h.b16 %v58
  %v180 = vunpack.c.l.b16 %v59
  %v181 = vunpack.c.h.b16 %v59
  %v182 = vunpack.c.l.b16 %v60
  %v183 = vunpack.c.h.b16 %v60
  %v184 = vunpack.c.l.b16 %v61
  %v185 = vunpack.c.h.b16 %v61
  %v186 = vunpack.c.l.b16 %v62
  %v187 = vunpack.c.h.b16 %v62
  %v188 = vunpack.c.l.b16 %v63
  %v189 = vunpack.c.h.b16 %v63
  %v190 = vunpack.c.l.b16 %v64
  %v191 = vunpack.c.h.b16 %v64
  %v192 = vunpack.c.l.b16 %v65
  %v193 = vunpack.c.h.b16 %v65
  %v194 = vunpack.c.l.b16 %v66
  %v195 = vunpack.c.h.b16 %v66
  %v196 = vunpack.c.l.b16 %v67
  %v197 = vunpack.c.h.b16 %v67
  %v198 = vunpack.c.l.b16 %v68
  %v199 = vunpack.c.h.b16 %v68
  %v200 = vunpack.c.l.b16 %v69
  %v201 = vunpack.c.h.b16 %v69
  %v202 = vunpack.c.l.b16 %v70
  %v203 = vunpack.c.h.b16 %v70
  %v204 = vunpack.c.l.b16 %v71
  %v205 = vunpack.c.h.b16 %v71
  %v206 = vunpack.c.l.b16 %v72
  %v207 = vunpack.c.h.b16 %v72
  %v208 = vunpack.c.l.b16 %v73
  %v209 = vunpack.c.h.b16 %v73
  %v210 = vunpack.c.l.b16 %v74
  %v211 = vunpack.c.h.b16 %v74
  %v212 = vunpack.c.l.b16 %v75
  %v213 = vunpack.c.h.b16 %v75
  %v214 = vunpack.c.l.b16 %v76
  %v215 = vunpack.c.h.b16 %v76
  %v216 = vunpack.c.l.b16 %v77
  %v217 = vunpack.c.h.b16 %v77
  %v218 = vunpack.c.l.b16 %v78
  %v219 = vunpack.c.h.b16 %v78
  %v220 = vunpack.c.l.b16 %v79
  %v221 = vunpack.c.h.b16 %v79
  %v222 = vpack.c.b16 %v162, %v158
  %v223 = vpack.c.b16 %v163, %v159
  %v224 = vpack.c.b16 %v164, %v160
  %v225 = vpack.c.b16 %v165, %v161
  %v226 = vpack.c.b16 %v170, %v166
  %v227 = vpack.c.b16 %v171, %v167
  %v228 = vpack.c.b16 %v172, %v168
  %v229 = vpack.c.b16 %v173, %v169
  %v230 = vpack.c.b16 %v178, %v174
  %v231 = vpack.c.b16 %v179, %v175
  %v232 = vpack.c.b16 %v180, %v176
  %v233 = vpack.c.b16 %v181, %v177
  %v234 = vpack.c.b16 %v186, %v182
  %v235 = vpack.c.b16 %v187, %v183
  %v236 = vpack.c.b16 %v188, %v184
  %v237 = vpack.c.b16 %v189, %v185
  %v238 = vpack.c.b16 %v194, %v190
  %v239 = vpack.c.b16 %v195, %v191
  %v240 = vpack.c.b16 %v196, %v192
  %v241 = vpack.c.b16 %v197, %v193
  %v242 = vpack.c.b16 %v202, %v198
  %v243 = vpack.c.b16 %v203, %v199
  %v244 = vpack.c.b16 %v204, %v200
  %v245 = vpack.c.b16 %v205, %v201
  %v246 = vpack.c.b16 %v210, %v206
  %v247 = vpack.c.b16 %v211, %v207
  %v248 = vpack.c.b16 %v212, %v208
  %v249 = vpack.c.b16 %v213, %v209
  %v250 = vpack.c.b16 %v218, %v214
  %v251 = vpack.c.b16 %v219, %v215
  %v252 = vpack.c.b16 %v220, %v216
  %v253 = vpack.c.b16 %v221, %v217
  %286 = vmatprep.subr.bf16.mxu0 %v251
  %287 = vmatpush1.bf16.msra.mxu0 %v250
  %288 = vmatprep.subr.bf16.mxu0 %v247
  %289 = vmatpush1.bf16.msra.mxu0 %v246
  %290 = vmatprep.subr.bf16.mxu0 %v243
  %291 = vmatpush1.bf16.msra.mxu0 %v242
  %292 = vmatprep.subr.bf16.mxu0 %v239
  %293 = vmatpush1.bf16.msra.mxu0 %v238
  %294 = vmatprep.subr.bf16.mxu0 %v235
  %295 = vmatpush1.bf16.msra.mxu0 %v234
  %296 = vmatprep.subr.bf16.mxu0 %v231
  %297 = vmatpush1.bf16.msra.mxu0 %v230
  %298 = vmatprep.subr.bf16.mxu0 %v227
  %299 = vmatpush1.bf16.msra.mxu0 %v226
  %300 = vmatprep.subr.bf16.mxu0 %v223
  %301 = vmatpush1.bf16.msra.mxu0 %v222
  %302 = vmatprep.subr.bf16.mxu0 0
  %303 = vmatpush2.bf16.msra.mxu0 0
  %304 = vmatprep.subr.bf16.mxu0 0
  %305 = vmatpush2.bf16.msra.mxu0 0
  %306 = vmatprep.subr.bf16.mxu0 0
  %307 = vmatpush2.bf16.msra.mxu0 0
  %308 = vmatprep.subr.bf16.mxu0 0
  %309 = vmatpush2.bf16.msra.mxu0 0
  %310 = vmatprep.subr.bf16.mxu0 0
  %311 = vmatpush2.bf16.msra.mxu0 0
  %312 = vmatprep.subr.bf16.mxu0 0
  %313 = vmatpush2.bf16.msra.mxu0 0
  %314 = vmatprep.subr.bf16.mxu0 0
  %315 = vmatpush2.bf16.msra.mxu0 0
  %316 = vmatprep.subr.bf16.mxu0 0
  %317 = vmatpush2.bf16.msra.mxu0 0
  %318 = vmatprep.mubr.bf16.mxu0 0
  %319 = vmatmul.mubr.bf16.gmra.mxu0 %v118
  %v320 = vpop.f32.mrf.mxu0
  %v321 = vadd.f32 %v85, %v320
  %v322 = vpop.f32.mrf.mxu0
  %v323 = vadd.f32 %v89, %v322
  %v324 = vpop.f32.mrf.mxu0
  %v325 = vadd.f32 %v85, %v324
  %v326 = vpop.f32.mrf.mxu0
  %v327 = vadd.f32 %v89, %v326
  %328 = vmatprep.mubr.bf16.mxu0 0
  %329 = vmatmul.mubr.bf16.gmra.mxu0 %v119
  %v330 = vpop.f32.mrf.mxu0
  %v331 = vadd.f32 %v85, %v330
  %v332 = vpop.f32.mrf.mxu0
  %v333 = vadd.f32 %v89, %v332
  %v334 = vpop.f32.mrf.mxu0
  %v335 = vadd.f32 %v85, %v334
  %v336 = vpop.f32.mrf.mxu0
  %v337 = vadd.f32 %v89, %v336
  %338 = vmatprep.mubr.bf16.mxu0 0
  %339 = vmatmul.mubr.bf16.gmra.mxu0 %v120
  %v340 = vpop.f32.mrf.mxu0
  %v341 = vadd.f32 %v85, %v340
  %v342 = vpop.f32.mrf.mxu0
  %v343 = vadd.f32 %v89, %v342
  %v344 = vpop.f32.mrf.mxu0
  %v345 = vadd.f32 %v85, %v344
  %v346 = vpop.f32.mrf.mxu0
  %v347 = vadd.f32 %v89, %v346
  %348 = vmatprep.mubr.bf16.mxu0 0
  %349 = vmatmul.mubr.bf16.gmra.mxu0 %v121
  %v350 = vpop.f32.mrf.mxu0
  %v351 = vadd.f32 %v85, %v350
  %v352 = vpop.f32.mrf.mxu0
  %v353 = vadd.f32 %v89, %v352
  %v354 = vpop.f32.mrf.mxu0
  %v355 = vadd.f32 %v85, %v354
  %v356 = vpop.f32.mrf.mxu0
  %v357 = vadd.f32 %v89, %v356
  %358 = vdwg.mxu0
  %359 = vmatprep.subr.bf16.mxu0 %v253
  %360 = vmatpush1.bf16.msra.mxu0 %v252
  %361 = vmatprep.subr.bf16.mxu0 %v249
  %362 = vmatpush1.bf16.msra.mxu0 %v248
  %363 = vmatprep.subr.bf16.mxu0 %v245
  %364 = vmatpush1.bf16.msra.mxu0 %v244
  %365 = vmatprep.subr.bf16.mxu0 %v241
  %366 = vmatpush1.bf16.msra.mxu0 %v240
  %367 = vmatprep.subr.bf16.mxu0 %v237
  %368 = vmatpush1.bf16.msra.mxu0 %v236
  %369 = vmatprep.subr.bf16.mxu0 %v233
  %370 = vmatpush1.bf16.msra.mxu0 %v232
  %371 = vmatprep.subr.bf16.mxu0 %v229
  %372 = vmatpush1.bf16.msra.mxu0 %v228
  %373 = vmatprep.subr.bf16.mxu0 %v225
  %374 = vmatpush1.bf16.msra.mxu0 %v224
  %375 = vmatprep.subr.bf16.mxu0 0
  %376 = vmatpush2.bf16.msra.mxu0 0
  %377 = vmatprep.subr.bf16.mxu0 0
  %378 = vmatpush2.bf16.msra.mxu0 0
  %379 = vmatprep.subr.bf16.mxu0 0
  %380 = vmatpush2.bf16.msra.mxu0 0
  %381 = vmatprep.subr.bf16.mxu0 0
  %382 = vmatpush2.bf16.msra.mxu0 0
  %383 = vmatprep.subr.bf16.mxu0 0
  %384 = vmatpush2.bf16.msra.mxu0 0
  %385 = vmatprep.subr.bf16.mxu0 0
  %386 = vmatpush2.bf16.msra.mxu0 0
  %387 = vmatprep.subr.bf16.mxu0 0
  %388 = vmatpush2.bf16.msra.mxu0 0
  %389 = vmatprep.subr.bf16.mxu0 0
  %390 = vmatpush2.bf16.msra.mxu0 0
  %391 = vmatprep.mubr.bf16.mxu0 0
  %392 = vmatmul.mubr.bf16.gmra.mxu0 %v118
  %v393 = vpop.f32.mrf.mxu0
  %v394 = vadd.f32 %v93, %v393
  %v395 = vpop.f32.mrf.mxu0
  %v396 = vadd.f32 %v97, %v395
  %v397 = vpop.f32.mrf.mxu0
  %v398 = vadd.f32 %v93, %v397
  %v399 = vpop.f32.mrf.mxu0
  %v400 = vadd.f32 %v97, %v399
  %401 = vmatprep.mubr.bf16.mxu0 0
  %402 = vmatmul.mubr.bf16.gmra.mxu0 %v119
  %v403 = vpop.f32.mrf.mxu0
  %v404 = vadd.f32 %v93, %v403
  %v405 = vpop.f32.mrf.mxu0
  %v406 = vadd.f32 %v97, %v405
  %v407 = vpop.f32.mrf.mxu0
  %v408 = vadd.f32 %v93, %v407
  %v409 = vpop.f32.mrf.mxu0
  %v410 = vadd.f32 %v97, %v409
  %411 = vmatprep.mubr.bf16.mxu0 0
  %412 = vmatmul.mubr.bf16.gmra.mxu0 %v120
  %v413 = vpop.f32.mrf.mxu0
  %v414 = vadd.f32 %v93, %v413
  %v415 = vpop.f32.mrf.mxu0
  %v416 = vadd.f32 %v97, %v415
  %v417 = vpop.f32.mrf.mxu0
  %v418 = vadd.f32 %v93, %v417
  %v419 = vpop.f32.mrf.mxu0
  %v420 = vadd.f32 %v97, %v419
  %421 = vmatprep.mubr.bf16.mxu0 0
  %422 = vmatmul.mubr.bf16.gmra.mxu0 %v121
  %v423 = vpop.f32.mrf.mxu0
  %v424 = vadd.f32 %v93, %v423
  %v425 = vpop.f32.mrf.mxu0
  %v426 = vadd.f32 %v97, %v425
  %v427 = vpop.f32.mrf.mxu0
  %v428 = vadd.f32 %v93, %v427
  %v429 = vpop.f32.mrf.mxu0
  %v430 = vadd.f32 %v97, %v429
  %431 = vdwg.mxu0
  %432 = vst [vmem:[#allocation3] sm:$0xff] %v321
  %433 = vst [vmem:[#allocation3 + $0x8] sm:$0xff] %v323
  %434 = vst [vmem:[#allocation3 + $0x10] sm:$0xff] %v394
  %435 = vst [vmem:[#allocation3 + $0x18] sm:$0xff] %v396
  %436 = vst [vmem:[#allocation3 + $0x20] sm:$0xff] %v325
  %437 = vst [vmem:[#allocation3 + $0x28] sm:$0xff] %v327
  %438 = vst [vmem:[#allocation3 + $0x30] sm:$0xff] %v398
  %439 = vst [vmem:[#allocation3 + $0x38] sm:$0xff] %v400
  %440 = vst [vmem:[#allocation3 + $0x40] sm:$0xff] %v331
  %441 = vst [vmem:[#allocation3 + $0x48] sm:$0xff] %v333
  %442 = vst [vmem:[#allocation3 + $0x50] sm:$0xff] %v404
  %443 = vst [vmem:[#allocation3 + $0x58] sm:$0xff] %v406
  %444 = vst [vmem:[#allocation3 + $0x60] sm:$0xff] %v335
  %445 = vst [vmem:[#allocation3 + $0x68] sm:$0xff] %v337
  %446 = vst [vmem:[#allocation3 + $0x70] sm:$0xff] %v408
  %447 = vst [vmem:[#allocation3 + $0x78] sm:$0xff] %v410
  %448 = vst [vmem:[#allocation3 + $0x80] sm:$0xff] %v341
  %449 = vst [vmem:[#allocation3 + $0x88] sm:$0xff] %v343
  %450 = vst [vmem:[#allocation3 + $0x90] sm:$0xff] %v414
  %451 = vst [vmem:[#allocation3 + $0x98] sm:$0xff] %v416
  %452 = vst [vmem:[#allocation3 + $0xa0] sm:$0xff] %v345
  %453 = vst [vmem:[#allocation3 + $0xa8] sm:$0xff] %v347
  %454 = vst [vmem:[#allocation3 + $0xb0] sm:$0xff] %v418
  %455 = vst [vmem:[#allocation3 + $0xb8] sm:$0xff] %v420
  %456 = vst [vmem:[#allocation3 + $0xc0] sm:$0xff] %v351
  %457 = vst [vmem:[#allocation3 + $0xc8] sm:$0xff] %v353
  %458 = vst [vmem:[#allocation3 + $0xd0] sm:$0xff] %v424
  %459 = vst [vmem:[#allocation3 + $0xd8] sm:$0xff] %v426
  %460 = vst [vmem:[#allocation3 + $0xe0] sm:$0xff] %v355
  %461 = vst [vmem:[#allocation3 + $0xe8] sm:$0xff] %v357
  %462 = vst [vmem:[#allocation3 + $0xf0] sm:$0xff] %v428
  %463 = vst [vmem:[#allocation3 + $0xf8] sm:$0xff] %v430
  %v464 = vld [vmem:[%s2] sm:$0xff]
  %v465 = vld [vmem:[%s2 + $0x8] sm:$0xff]
  %v466 = vld [vmem:[%s2 + $0x10] sm:$0xff]
  %v467 = vld [vmem:[%s2 + $0x18] sm:$0xff]
  %v468 = vld [vmem:[%s2 + $0x20] sm:$0xff]
  %v469 = vld [vmem:[%s2 + $0x28] sm:$0xff]
  %v470 = vld [vmem:[%s2 + $0x30] sm:$0xff]
  %v471 = vld [vmem:[%s2 + $0x38] sm:$0xff]
  %v472 = vld [vmem:[%s2 + $0x40] sm:$0xff]
  %v473 = vld [vmem:[%s2 + $0x48] sm:$0xff]
  %v474 = vld [vmem:[%s2 + $0x50] sm:$0xff]
  %v475 = vld [vmem:[%s2 + $0x58] sm:$0xff]
  %v476 = vld [vmem:[%s2 + $0x60] sm:$0xff]
  %v477 = vld [vmem:[%s2 + $0x68] sm:$0xff]
  %v478 = vld [vmem:[%s2 + $0x70] sm:$0xff]
  %v479 = vld [vmem:[%s2 + $0x78] sm:$0xff]
  %v480 = vld [vmem:[%s2 + $0x80] sm:$0xff]
  %v481 = vld [vmem:[%s2 + $0x88] sm:$0xff]
  %v482 = vld [vmem:[%s2 + $0x90] sm:$0xff]
  %v483 = vld [vmem:[%s2 + $0x98] sm:$0xff]
  %v484 = vld [vmem:[%s2 + $0xa0] sm:$0xff]
  %v485 = vld [vmem:[%s2 + $0xa8] sm:$0xff]
  %v486 = vld [vmem:[%s2 + $0xb0] sm:$0xff]
  %v487 = vld [vmem:[%s2 + $0xb8] sm:$0xff]
  %v488 = vld [vmem:[%s2 + $0xc0] sm:$0xff]
  %v489 = vld [vmem:[%s2 + $0xc8] sm:$0xff]
  %v490 = vld [vmem:[%s2 + $0xd0] sm:$0xff]
  %v491 = vld [vmem:[%s2 + $0xd8] sm:$0xff]
  %v492 = vld [vmem:[%s2 + $0xe0] sm:$0xff]
  %v493 = vld [vmem:[%s2 + $0xe8] sm:$0xff]
  %v494 = vld [vmem:[%s2 + $0xf0] sm:$0xff]
  %v495 = vld [vmem:[%s2 + $0xf8] sm:$0xff]
  %v496 = vld [vmem:[#allocation3] sm:$0xff]
  %v497 = vld [vmem:[#allocation3 + $0x8] sm:$0xff]
  %v498 = vld [vmem:[#allocation3 + $0x10] sm:$0xff]
  %v499 = vld [vmem:[#allocation3 + $0x18] sm:$0xff]
  %v532 = vunpack.c.l.b16 %v464
  %v533 = vunpack.c.h.b16 %v464
  %v534 = vunpack.c.l.b16 %v465
  %v535 = vunpack.c.h.b16 %v465
  %v536 = vunpack.c.l.b16 %v466
  %v537 = vunpack.c.h.b16 %v466
  %v538 = vunpack.c.l.b16 %v467
  %v539 = vunpack.c.h.b16 %v467
  %v540 = vunpack.c.l.b16 %v468
  %v541 = vunpack.c.h.b16 %v468
  %v542 = vunpack.c.l.b16 %v469
  %v543 = vunpack.c.h.b16 %v469
  %v544 = vunpack.c.l.b16 %v470
  %v545 = vunpack.c.h.b16 %v470
  %v546 = vunpack.c.l.b16 %v471
  %v547 = vunpack.c.h.b16 %v471
  %v548 = vunpack.c.l.b16 %v472
  %v549 = vunpack.c.h.b16 %v472
  %v550 = vunpack.c.l.b16 %v473
  %v551 = vunpack.c.h.b16 %v473
  %v552 = vunpack.c.l.b16 %v474
  %v553 = vunpack.c.h.b16 %v474
  %v554 = vunpack.c.l.b16 %v475
  %v555 = vunpack.c.h.b16 %v475
  %v556 = vunpack.c.l.b16 %v476
  %v557 = vunpack.c.h.b16 %v476
  %v558 = vunpack.c.l.b16 %v477
  %v559 = vunpack.c.h.b16 %v477
  %v560 = vunpack.c.l.b16 %v478
  %v561 = vunpack.c.h.b16 %v478
  %v562 = vunpack.c.l.b16 %v479
  %v563 = vunpack.c.h.b16 %v479
  %v564 = vunpack.c.l.b16 %v480
  %v565 = vunpack.c.h.b16 %v480
  %v566 = vunpack.c.l.b16 %v481
  %v567 = vunpack.c.h.b16 %v481
  %v568 = vunpack.c.l.b16 %v482
  %v569 = vunpack.c.h.b16 %v482
  %v570 = vunpack.c.l.b16 %v483
  %v571 = vunpack.c.h.b16 %v483
  %v572 = vunpack.c.l.b16 %v484
  %v573 = vunpack.c.h.b16 %v484
  %v574 = vunpack.c.l.b16 %v485
  %v575 = vunpack.c.h.b16 %v485
  %v576 = vunpack.c.l.b16 %v486
  %v577 = vunpack.c.h.b16 %v486
  %v578 = vunpack.c.l.b16 %v487
  %v579 = vunpack.c.h.b16 %v487
  %v580 = vunpack.c.l.b16 %v488
  %v581 = vunpack.c.h.b16 %v488
  %v582 = vunpack.c.l.b16 %v489
  %v583 = vunpack.c.h.b16 %v489
  %v584 = vunpack.c.l.b16 %v490
  %v585 = vunpack.c.h.b16 %v490
  %v586 = vunpack.c.l.b16 %v491
  %v587 = vunpack.c.h.b16 %v491
  %v588 = vunpack.c.l.b16 %v492
  %v589 = vunpack.c.h.b16 %v492
  %v590 = vunpack.c.l.b16 %v493
  %v591 = vunpack.c.h.b16 %v493
  %v592 = vunpack.c.l.b16 %v494
  %v593 = vunpack.c.h.b16 %v494
  %v594 = vunpack.c.l.b16 %v495
  %v595 = vunpack.c.h.b16 %v495
  %v596 = vpack.c.b16 %v536, %v532
  %v597 = vpack.c.b16 %v537, %v533
  %v598 = vpack.c.b16 %v538, %v534
  %v599 = vpack.c.b16 %v539, %v535
  %v600 = vpack.c.b16 %v544, %v540
  %v601 = vpack.c.b16 %v545, %v541
  %v602 = vpack.c.b16 %v546, %v542
  %v603 = vpack.c.b16 %v547, %v543
  %v604 = vpack.c.b16 %v552, %v548
  %v605 = vpack.c.b16 %v553, %v549
  %v606 = vpack.c.b16 %v554, %v550
  %v607 = vpack.c.b16 %v555, %v551
  %v608 = vpack.c.b16 %v560, %v556
  %v609 = vpack.c.b16 %v561, %v557
  %v610 = vpack.c.b16 %v562, %v558
  %v611 = vpack.c.b16 %v563, %v559
  %v612 = vpack.c.b16 %v568, %v564
  %v613 = vpack.c.b16 %v569, %v565
  %v614 = vpack.c.b16 %v570, %v566
  %v615 = vpack.c.b16 %v571, %v567
  %v616 = vpack.c.b16 %v576, %v572
  %v617 = vpack.c.b16 %v577, %v573
  %v618 = vpack.c.b16 %v578, %v574
  %v619 = vpack.c.b16 %v579, %v575
  %v620 = vpack.c.b16 %v584, %v580
  %v621 = vpack.c.b16 %v585, %v581
  %v622 = vpack.c.b16 %v586, %v582
  %v623 = vpack.c.b16 %v587, %v583
  %v624 = vpack.c.b16 %v592, %v588
  %v625 = vpack.c.b16 %v593, %v589
  %v626 = vpack.c.b16 %v594, %v590
  %v627 = vpack.c.b16 %v595, %v591
  %660 = vmatprep.subr.bf16.mxu0 %v625
  %661 = vmatpush1.bf16.msra.mxu0 %v624
  %662 = vmatprep.subr.bf16.mxu0 %v621
  %663 = vmatpush1.bf16.msra.mxu0 %v620
  %664 = vmatprep.subr.bf16.mxu0 %v617
  %665 = vmatpush1.bf16.msra.mxu0 %v616
  %666 = vmatprep.subr.bf16.mxu0 %v613
  %667 = vmatpush1.bf16.msra.mxu0 %v612
  %668 = vmatprep.subr.bf16.mxu0 %v609
  %669 = vmatpush1.bf16.msra.mxu0 %v608
  %670 = vmatprep.subr.bf16.mxu0 %v605
  %671 = vmatpush1.bf16.msra.mxu0 %v604
  %672 = vmatprep.subr.bf16.mxu0 %v601
  %673 = vmatpush1.bf16.msra.mxu0 %v600
  %674 = vmatprep.subr.bf16.mxu0 %v597
  %675 = vmatpush1.bf16.msra.mxu0 %v596
  %676 = vmatprep.subr.bf16.mxu0 0
  %677 = vmatpush2.bf16.msra.mxu0 0
  %678 = vmatprep.subr.bf16.mxu0 0
  %679 = vmatpush2.bf16.msra.mxu0 0
  %680 = vmatprep.subr.bf16.mxu0 0
  %681 = vmatpush2.bf16.msra.mxu0 0
  %682 = vmatprep.subr.bf16.mxu0 0
  %683 = vmatpush2.bf16.msra.mxu0 0
  %684 = vmatprep.subr.bf16.mxu0 0
  %685 = vmatpush2.bf16.msra.mxu0 0
  %686 = vmatprep.subr.bf16.mxu0 0
  %687 = vmatpush2.bf16.msra.mxu0 0
  %688 = vmatprep.subr.bf16.mxu0 0
  %689 = vmatpush2.bf16.msra.mxu0 0
  %690 = vmatprep.subr.bf16.mxu0 0
  %691 = vmatpush2.bf16.msra.mxu0 0
  %692 = vmatprep.mubr.bf16.mxu0 0
  %693 = vmatmul.mubr.bf16.gmra.mxu0 0
  %v694 = vpop.f32.mrf.mxu0
  %v695 = vadd.f32 0.0, %v694
  %v696 = vpop.f32.mrf.mxu0
  %v697 = vadd.f32 0.0, %v696
  %v698 = vpop.f32.mrf.mxu0
  %v699 = vpop.f32.mrf.mxu0
  %700 = vdwg.mxu0
  %701 = vmatprep.subr.bf16.mxu0 %v627
  %702 = vmatpush1.bf16.msra.mxu0 %v626
  %703 = vmatprep.subr.bf16.mxu0 %v623
  %704 = vmatpush1.bf16.msra.mxu0 %v622
  %705 = vmatprep.subr.bf16.mxu0 %v619
  %706 = vmatpush1.bf16.msra.mxu0 %v618
  %707 = vmatprep.subr.bf16.mxu0 %v615
  %708 = vmatpush1.bf16.msra.mxu0 %v614
  %709 = vmatprep.subr.bf16.mxu0 %v611
  %710 = vmatpush1.bf16.msra.mxu0 %v610
  %711 = vmatprep.subr.bf16.mxu0 %v607
  %712 = vmatpush1.bf16.msra.mxu0 %v606
  %713 = vmatprep.subr.bf16.mxu0 %v603
  %714 = vmatpush1.bf16.msra.mxu0 %v602
  %715 = vmatprep.subr.bf16.mxu0 %v599
  %716 = vmatpush1.bf16.msra.mxu0 %v598
  %717 = vmatprep.subr.bf16.mxu0 0
  %718 = vmatpush2.bf16.msra.mxu0 0
  %719 = vmatprep.subr.bf16.mxu0 0
  %720 = vmatpush2.bf16.msra.mxu0 0
  %721 = vmatprep.subr.bf16.mxu0 0
  %722 = vmatpush2.bf16.msra.mxu0 0
  %723 = vmatprep.subr.bf16.mxu0 0
  %724 = vmatpush2.bf16.msra.mxu0 0
  %725 = vmatprep.subr.bf16.mxu0 0
  %726 = vmatpush2.bf16.msra.mxu0 0
  %727 = vmatprep.subr.bf16.mxu0 0
  %728 = vmatpush2.bf16.msra.mxu0 0
  %729 = vmatprep.subr.bf16.mxu0 0
  %730 = vmatpush2.bf16.msra.mxu0 0
  %731 = vmatprep.subr.bf16.mxu0 0
  %732 = vmatpush2.bf16.msra.mxu0 0
  %733 = vmatprep.mubr.bf16.mxu0 0
  %734 = vmatmul.mubr.bf16.gmra.mxu0 0
  %v735 = vpop.f32.mrf.mxu0
  %v736 = vadd.f32 0.0, %v735
  %v737 = vpop.f32.mrf.mxu0
  %v738 = vadd.f32 0.0, %v737
  %v739 = vpop.f32.mrf.mxu0
  %v740 = vpop.f32.mrf.mxu0
  %741 = vdwg.mxu0
  %v742 = vadd.f32 %v496, %v695
  %v743 = vadd.f32 %v497, %v697
  %v744 = vadd.f32 %v498, %v736
  %v745 = vadd.f32 %v499, %v738
  %v746 = vxor.u32 %v742, 2147483648
  %v747 = vmul.f32 %v746, 1.442695
  %v748 = vpow.pop %v747
  %v749 = vadd.f32 %v748, 1.0
  %v750 = vrcp.pop %v749
  %v751 = vmul.f32 1.0, %v750
  %v752 = vxor.u32 %v743, 2147483648
  %v753 = vmul.f32 %v752, 1.442695
  %v754 = vpow.pop %v753
  %v755 = vadd.f32 %v754, 1.0
  %v756 = vrcp.pop %v755
  %v757 = vmul.f32 1.0, %v756
  %v758 = vtanh.pop %v744
  %v759 = vxor.u32 %v745, 2147483648
  %v760 = vmul.f32 %v759, 1.442695
  %v761 = vpow.pop %v760
  %v762 = vadd.f32 %v761, 1.0
  %v763 = vrcp.pop %v762
  %v764 = vmul.f32 1.0, %v763
  %v765 = vmul.f32 %v757, 0.0
  %v766 = vmul.f32 %v751, %v758
  %v767 = vadd.f32 %v765, %v766
  %v768 = vtanh.pop %v767
  %v769 = vmul.f32 %v764, %v768
  %v770 = vpack.c.bf16 %v769, %v769
  %771 = vst [vmem:[#allocation2] sm:$0xf] %v770
  %s772 = scalar_lea.vmem [#allocation3], 32
  %v773 = vld [vmem:[%s772] sm:$0xff]
  %v774 = vld [vmem:[%s772 + $0x8] sm:$0xff]
  %v775 = vld [vmem:[%s772 + $0x10] sm:$0xff]
  %v776 = vld [vmem:[%s772 + $0x18] sm:$0xff]
  %777 = vmatprep.subr.bf16.mxu0 %v625
  %778 = vmatpush1.bf16.msra.mxu0 %v624
  %779 = vmatprep.subr.bf16.mxu0 %v621
  %780 = vmatpush1.bf16.msra.mxu0 %v620
  %781 = vmatprep.subr.bf16.mxu0 %v617
  %782 = vmatpush1.bf16.msra.mxu0 %v616
  %783 = vmatprep.subr.bf16.mxu0 %v613
  %784 = vmatpush1.bf16.msra.mxu0 %v612
  %785 = vmatprep.subr.bf16.mxu0 %v609
  %786 = vmatpush1.bf16.msra.mxu0 %v608
  %787 = vmatprep.subr.bf16.mxu0 %v605
  %788 = vmatpush1.bf16.msra.mxu0 %v604
  %789 = vmatprep.subr.bf16.mxu0 %v601
  %790 = vmatpush1.bf16.msra.mxu0 %v600
  %791 = vmatprep.subr.bf16.mxu0 %v597
  %792 = vmatpush1.bf16.msra.mxu0 %v596
  %793 = vmatprep.subr.bf16.mxu0 0
  %794 = vmatpush2.bf16.msra.mxu0 0
  %795 = vmatprep.subr.bf16.mxu0 0
  %796 = vmatpush2.bf16.msra.mxu0 0
  %797 = vmatprep.subr.bf16.mxu0 0
  %798 = vmatpush2.bf16.msra.mxu0 0
  %799 = vmatprep.subr.bf16.mxu0 0
  %800 = vmatpush2.bf16.msra.mxu0 0
  %801 = vmatprep.subr.bf16.mxu0 0
  %802 = vmatpush2.bf16.msra.mxu0 0
  %803 = vmatprep.subr.bf16.mxu0 0
  %804 = vmatpush2.bf16.msra.mxu0 0
  %805 = vmatprep.subr.bf16.mxu0 0
  %806 = vmatpush2.bf16.msra.mxu0 0
  %807 = vmatprep.subr.bf16.mxu0 0
  %808 = vmatpush2.bf16.msra.mxu0 0
  %809 = vmatprep.mubr.bf16.mxu0 0
  %810 = vmatmul.mubr.bf16.gmra.mxu0 %v770
  %v811 = vpop.f32.mrf.mxu0
  %v812 = vadd.f32 0.0, %v811
  %v813 = vpop.f32.mrf.mxu0
  %v814 = vadd.f32 0.0, %v813
  %v815 = vpop.f32.mrf.mxu0
  %v816 = vpop.f32.mrf.mxu0
  %817 = vdwg.mxu0
  %818 = vmatprep.subr.bf16.mxu0 %v627
  %819 = vmatpush1.bf16.msra.mxu0 %v626
  %820 = vmatprep.subr.bf16.mxu0 %v623
  %821 = vmatpush1.bf16.msra.mxu0 %v622
  %822 = vmatprep.subr.bf16.mxu0 %v619
  %823 = vmatpush1.bf16.msra.mxu0 %v618
  %824 = vmatprep.subr.bf16.mxu0 %v615
  %825 = vmatpush1.bf16.msra.mxu0 %v614
  %826 = vmatprep.subr.bf16.mxu0 %v611
  %827 = vmatpush1.bf16.msra.mxu0 %v610
  %828 = vmatprep.subr.bf16.mxu0 %v607
  %829 = vmatpush1.bf16.msra.mxu0 %v606
  %830 = vmatprep.subr.bf16.mxu0 %v603
  %831 = vmatpush1.bf16.msra.mxu0 %v602
  %832 = vmatprep.subr.bf16.mxu0 %v599
  %833 = vmatpush1.bf16.msra.mxu0 %v598
  %834 = vmatprep.subr.bf16.mxu0 0
  %835 = vmatpush2.bf16.msra.mxu0 0
  %836 = vmatprep.subr.bf16.mxu0 0
  %837 = vmatpush2.bf16.msra.mxu0 0
  %838 = vmatprep.subr.bf16.mxu0 0
  %839 = vmatpush2.bf16.msra.mxu0 0
  %840 = vmatprep.subr.bf16.mxu0 0
  %841 = vmatpush2.bf16.msra.mxu0 0
  %842 = vmatprep.subr.bf16.mxu0 0
  %843 = vmatpush2.bf16.msra.mxu0 0
  %844 = vmatprep.subr.bf16.mxu0 0
  %845 = vmatpush2.bf16.msra.mxu0 0
  %846 = vmatprep.subr.bf16.mxu0 0
  %847 = vmatpush2.bf16.msra.mxu0 0
  %848 = vmatprep.subr.bf16.mxu0 0
  %849 = vmatpush2.bf16.msra.mxu0 0
  %850 = vmatprep.mubr.bf16.mxu0 0
  %851 = vmatmul.mubr.bf16.gmra.mxu0 %v770
  %v852 = vpop.f32.mrf.mxu0
  %v853 = vadd.f32 0.0, %v852
  %v854 = vpop.f32.mrf.mxu0
  %v855 = vadd.f32 0.0, %v854
  %v856 = vpop.f32.mrf.mxu0
  %v857 = vpop.f32.mrf.mxu0
  %858 = vdwg.mxu0
  %v859 = vadd.f32 %v773, %v812
  %v860 = vadd.f32 %v774, %v814
  %v861 = vadd.f32 %v775, %v853
  %v862 = vadd.f32 %v776, %v855
  %v863 = vxor.u32 %v859, 2147483648
  %v864 = vmul.f32 %v863, 1.442695
  %v865 = vpow.pop %v864
  %v866 = vadd.f32 %v865, 1.0
  %v867 = vrcp.pop %v866
  %v868 = vmul.f32 1.0, %v867
  %v869 = vxor.u32 %v860, 2147483648
  %v870 = vmul.f32 %v869, 1.442695
  %v871 = vpow.pop %v870
  %v872 = vadd.f32 %v871, 1.0
  %v873 = vrcp.pop %v872
  %v874 = vmul.f32 1.0, %v873
  %v875 = vtanh.pop %v861
  %v876 = vxor.u32 %v862, 2147483648
  %v877 = vmul.f32 %v876, 1.442695
  %v878 = vpow.pop %v877
  %v879 = vadd.f32 %v878, 1.0
  %v880 = vrcp.pop %v879
  %v881 = vmul.f32 1.0, %v880
  %v882 = vmul.f32 %v874, %v767
  %v883 = vmul.f32 %v868, %v875
  %v884 = vadd.f32 %v882, %v883
  %v885 = vtanh.pop %v884
  %v886 = vmul.f32 %v881, %v885
  %v887 = vpack.c.bf16 %v886, %v886
  %s888 = scalar_lea.vmem [#allocation2], 4
  %889 = vst [vmem:[%s888] sm:$0xf] %v887
  %s890 = scalar_lea.vmem [#allocation3], 64
  %v891 = vld [vmem:[%s890] sm:$0xff]
  %v892 = vld [vmem:[%s890 + $0x8] sm:$0xff]
  %v893 = vld [vmem:[%s890 + $0x10] sm:$0xff]
  %v894 = vld [vmem:[%s890 + $0x18] sm:$0xff]
  %895 = vmatprep.subr.bf16.mxu0 %v625
  %896 = vmatpush1.bf16.msra.mxu0 %v624
  %897 = vmatprep.subr.bf16.mxu0 %v621
  %898 = vmatpush1.bf16.msra.mxu0 %v620
  %899 = vmatprep.subr.bf16.mxu0 %v617
  %900 = vmatpush1.bf16.msra.mxu0 %v616
  %901 = vmatprep.subr.bf16.mxu0 %v613
  %902 = vmatpush1.bf16.msra.mxu0 %v612
  %903 = vmatprep.subr.bf16.mxu0 %v609
  %904 = vmatpush1.bf16.msra.mxu0 %v608
  %905 = vmatprep.subr.bf16.mxu0 %v605
  %906 = vmatpush1.bf16.msra.mxu0 %v604
  %907 = vmatprep.subr.bf16.mxu0 %v601
  %908 = vmatpush1.bf16.msra.mxu0 %v600
  %909 = vmatprep.subr.bf16.mxu0 %v597
  %910 = vmatpush1.bf16.msra.mxu0 %v596
  %911 = vmatprep.subr.bf16.mxu0 0
  %912 = vmatpush2.bf16.msra.mxu0 0
  %913 = vmatprep.subr.bf16.mxu0 0
  %914 = vmatpush2.bf16.msra.mxu0 0
  %915 = vmatprep.subr.bf16.mxu0 0
  %916 = vmatpush2.bf16.msra.mxu0 0
  %917 = vmatprep.subr.bf16.mxu0 0
  %918 = vmatpush2.bf16.msra.mxu0 0
  %919 = vmatprep.subr.bf16.mxu0 0
  %920 = vmatpush2.bf16.msra.mxu0 0
  %921 = vmatprep.subr.bf16.mxu0 0
  %922 = vmatpush2.bf16.msra.mxu0 0
  %923 = vmatprep.subr.bf16.mxu0 0
  %924 = vmatpush2.bf16.msra.mxu0 0
  %925 = vmatprep.subr.bf16.mxu0 0
  %926 = vmatpush2.bf16.msra.mxu0 0
  %927 = vmatprep.mubr.bf16.mxu0 0
  %928 = vmatmul.mubr.bf16.gmra.mxu0 %v887
  %v929 = vpop.f32.mrf.mxu0
  %v930 = vadd.f32 0.0, %v929
  %v931 = vpop.f32.mrf.mxu0
  %v932 = vadd.f32 0.0, %v931
  %v933 = vpop.f32.mrf.mxu0
  %v934 = vpop.f32.mrf.mxu0
  %935 = vdwg.mxu0
  %936 = vmatprep.subr.bf16.mxu0 %v627
  %937 = vmatpush1.bf16.msra.mxu0 %v626
  %938 = vmatprep.subr.bf16.mxu0 %v623
  %939 = vmatpush1.bf16.msra.mxu0 %v622
  %940 = vmatprep.subr.bf16.mxu0 %v619
  %941 = vmatpush1.bf16.msra.mxu0 %v618
  %942 = vmatprep.subr.bf16.mxu0 %v615
  %943 = vmatpush1.bf16.msra.mxu0 %v614
  %944 = vmatprep.subr.bf16.mxu0 %v611
  %945 = vmatpush1.bf16.msra.mxu0 %v610
  %946 = vmatprep.subr.bf16.mxu0 %v607
  %947 = vmatpush1.bf16.msra.mxu0 %v606
  %948 = vmatprep.subr.bf16.mxu0 %v603
  %949 = vmatpush1.bf16.msra.mxu0 %v602
  %950 = vmatprep.subr.bf16.mxu0 %v599
  %951 = vmatpush1.bf16.msra.mxu0 %v598
  %952 = vmatprep.subr.bf16.mxu0 0
  %953 = vmatpush2.bf16.msra.mxu0 0
  %954 = vmatprep.subr.bf16.mxu0 0
  %955 = vmatpush2.bf16.msra.mxu0 0
  %956 = vmatprep.subr.bf16.mxu0 0
  %957 = vmatpush2.bf16.msra.mxu0 0
  %958 = vmatprep.subr.bf16.mxu0 0
  %959 = vmatpush2.bf16.msra.mxu0 0
  %960 = vmatprep.subr.bf16.mxu0 0
  %961 = vmatpush2.bf16.msra.mxu0 0
  %962 = vmatprep.subr.bf16.mxu0 0
  %963 = vmatpush2.bf16.msra.mxu0 0
  %964 = vmatprep.subr.bf16.mxu0 0
  %965 = vmatpush2.bf16.msra.mxu0 0
  %966 = vmatprep.subr.bf16.mxu0 0
  %967 = vmatpush2.bf16.msra.mxu0 0
  %968 = vmatprep.mubr.bf16.mxu0 0
  %969 = vmatmul.mubr.bf16.gmra.mxu0 %v887
  %v970 = vpop.f32.mrf.mxu0
  %v971 = vadd.f32 0.0, %v970
  %v972 = vpop.f32.mrf.mxu0
  %v973 = vadd.f32 0.0, %v972
  %v974 = vpop.f32.mrf.mxu0
  %v975 = vpop.f32.mrf.mxu0
  %976 = vdwg.mxu0
  %v977 = vadd.f32 %v891, %v930
  %v978 = vadd.f32 %v892, %v932
  %v979 = vadd.f32 %v893, %v971
  %v980 = vadd.f32 %v894, %v973
  %v981 = vxor.u32 %v977, 2147483648
  %v982 = vmul.f32 %v981, 1.442695
  %v983 = vpow.pop %v982
  %v984 = vadd.f32 %v983, 1.0
  %v985 = vrcp.pop %v984
  %v986 = vmul.f32 1.0, %v985
  %v987 = vxor.u32 %v978, 2147483648
  %v988 = vmul.f32 %v987, 1.442695
  %v989 = vpow.pop %v988
  %v990 = vadd.f32 %v989, 1.0
  %v991 = vrcp.pop %v990
  %v992 = vmul.f32 1.0, %v991
  %v993 = vtanh.pop %v979
  %v994 = vxor.u32 %v980, 2147483648
  %v995 = vmul.f32 %v994, 1.442695
  %v996 = vpow.pop %v995
  %v997 = vadd.f32 %v996, 1.0
  %v998 = vrcp.pop %v997
  %v999 = vmul.f32 1.0, %v998
  %v1000 = vmul.f32 %v992, %v884
  %v1001 = vmul.f32 %v986, %v993
  %v1002 = vadd.f32 %v1000, %v1001
  %v1003 = vtanh.pop %v1002
  %v1004 = vmul.f32 %v999, %v1003
  %v1005 = vpack.c.bf16 %v1004, %v1004
  %s1006 = scalar_lea.vmem [#allocation2], 8
  %1007 = vst [vmem:[%s1006] sm:$0xf] %v1005
  %s1008 = scalar_lea.vmem [#allocation3], 96
  %v1009 = vld [vmem:[%s1008] sm:$0xff]
  %v1010 = vld [vmem:[%s1008 + $0x8] sm:$0xff]
  %v1011 = vld [vmem:[%s1008 + $0x10] sm:$0xff]
  %v1012 = vld [vmem:[%s1008 + $0x18] sm:$0xff]
  %1013 = vmatprep.subr.bf16.mxu0 %v625
  %1014 = vmatpush1.bf16.msra.mxu0 %v624
  %1015 = vmatprep.subr.bf16.mxu0 %v621
  %1016 = vmatpush1.bf16.msra.mxu0 %v620
  %1017 = vmatprep.subr.bf16.mxu0 %v617
  %1018 = vmatpush1.bf16.msra.mxu0 %v616
  %1019 = vmatprep.subr.bf16.mxu0 %v613
  %1020 = vmatpush1.bf16.msra.mxu0 %v612
  %1021 = vmatprep.subr.bf16.mxu0 %v609
  %1022 = vmatpush1.bf16.msra.mxu0 %v608
  %1023 = vmatprep.subr.bf16.mxu0 %v605
  %1024 = vmatpush1.bf16.msra.mxu0 %v604
  %1025 = vmatprep.subr.bf16.mxu0 %v601
  %1026 = vmatpush1.bf16.msra.mxu0 %v600
  %1027 = vmatprep.subr.bf16.mxu0 %v597
  %1028 = vmatpush1.bf16.msra.mxu0 %v596
  %1029 = vmatprep.subr.bf16.mxu0 0
  %1030 = vmatpush2.bf16.msra.mxu0 0
  %1031 = vmatprep.subr.bf16.mxu0 0
  %1032 = vmatpush2.bf16.msra.mxu0 0
  %1033 = vmatprep.subr.bf16.mxu0 0
  %1034 = vmatpush2.bf16.msra.mxu0 0
  %1035 = vmatprep.subr.bf16.mxu0 0
  %1036 = vmatpush2.bf16.msra.mxu0 0
  %1037 = vmatprep.subr.bf16.mxu0 0
  %1038 = vmatpush2.bf16.msra.mxu0 0
  %1039 = vmatprep.subr.bf16.mxu0 0
  %1040 = vmatpush2.bf16.msra.mxu0 0
  %1041 = vmatprep.subr.bf16.mxu0 0
  %1042 = vmatpush2.bf16.msra.mxu0 0
  %1043 = vmatprep.subr.bf16.mxu0 0
  %1044 = vmatpush2.bf16.msra.mxu0 0
  %1045 = vmatprep.mubr.bf16.mxu0 0
  %1046 = vmatmul.mubr.bf16.gmra.mxu0 %v1005
  %v1047 = vpop.f32.mrf.mxu0
  %v1048 = vadd.f32 0.0, %v1047
  %v1049 = vpop.f32.mrf.mxu0
  %v1050 = vadd.f32 0.0, %v1049
  %v1051 = vpop.f32.mrf.mxu0
  %v1052 = vpop.f32.mrf.mxu0
  %1053 = vdwg.mxu0
  %1054 = vmatprep.subr.bf16.mxu0 %v627
  %1055 = vmatpush1.bf16.msra.mxu0 %v626
  %1056 = vmatprep.subr.bf16.mxu0 %v623
  %1057 = vmatpush1.bf16.msra.mxu0 %v622
  %1058 = vmatprep.subr.bf16.mxu0 %v619
  %1059 = vmatpush1.bf16.msra.mxu0 %v618
  %1060 = vmatprep.subr.bf16.mxu0 %v615
  %1061 = vmatpush1.bf16.msra.mxu0 %v614
  %1062 = vmatprep.subr.bf16.mxu0 %v611
  %1063 = vmatpush1.bf16.msra.mxu0 %v610
  %1064 = vmatprep.subr.bf16.mxu0 %v607
  %1065 = vmatpush1.bf16.msra.mxu0 %v606
  %1066 = vmatprep.subr.bf16.mxu0 %v603
  %1067 = vmatpush1.bf16.msra.mxu0 %v602
  %1068 = vmatprep.subr.bf16.mxu0 %v599
  %1069 = vmatpush1.bf16.msra.mxu0 %v598
  %1070 = vmatprep.subr.bf16.mxu0 0
  %1071 = vmatpush2.bf16.msra.mxu0 0
  %1072 = vmatprep.subr.bf16.mxu0 0
  %1073 = vmatpush2.bf16.msra.mxu0 0
  %1074 = vmatprep.subr.bf16.mxu0 0
  %1075 = vmatpush2.bf16.msra.mxu0 0
  %1076 = vmatprep.subr.bf16.mxu0 0
  %1077 = vmatpush2.bf16.msra.mxu0 0
  %1078 = vmatprep.subr.bf16.mxu0 0
  %1079 = vmatpush2.bf16.msra.mxu0 0
  %1080 = vmatprep.subr.bf16.mxu0 0
  %1081 = vmatpush2.bf16.msra.mxu0 0
  %1082 = vmatprep.subr.bf16.mxu0 0
  %1083 = vmatpush2.bf16.msra.mxu0 0
  %1084 = vmatprep.subr.bf16.mxu0 0
  %1085 = vmatpush2.bf16.msra.mxu0 0
  %1086 = vmatprep.mubr.bf16.mxu0 0
  %1087 = vmatmul.mubr.bf16.gmra.mxu0 %v1005
  %v1088 = vpop.f32.mrf.mxu0
  %v1089 = vadd.f32 0.0, %v1088
  %v1090 = vpop.f32.mrf.mxu0
  %v1091 = vadd.f32 0.0, %v1090
  %v1092 = vpop.f32.mrf.mxu0
  %v1093 = vpop.f32.mrf.mxu0
  %1094 = vdwg.mxu0
  %v1095 = vadd.f32 %v1009, %v1048
  %v1096 = vadd.f32 %v1010, %v1050
  %v1097 = vadd.f32 %v1011, %v1089
  %v1098 = vadd.f32 %v1012, %v1091
  %v1099 = vxor.u32 %v1095, 2147483648
  %v1100 = vmul.f32 %v1099, 1.442695
  %v1101 = vpow.pop %v1100
  %v1102 = vadd.f32 %v1101, 1.0
  %v1103 = vrcp.pop %v1102
  %v1104 = vmul.f32 1.0, %v1103
  %v1105 = vxor.u32 %v1096, 2147483648
  %v1106 = vmul.f32 %v1105, 1.442695
  %v1107 = vpow.pop %v1106
  %v1108 = vadd.f32 %v1107, 1.0
  %v1109 = vrcp.pop %v1108
  %v1110 = vmul.f32 1.0, %v1109
  %v1111 = vtanh.pop %v1097
  %v1112 = vxor.u32 %v1098, 2147483648
  %v1113 = vmul.f32 %v1112, 1.442695
  %v1114 = vpow.pop %v1113
  %v1115 = vadd.f32 %v1114, 1.0
  %v1116 = vrcp.pop %v1115
  %v1117 = vmul.f32 1.0, %v1116
  %v1118 = vmul.f32 %v1110, %v1002
  %v1119 = vmul.f32 %v1104, %v1111
  %v1120 = vadd.f32 %v1118, %v1119
  %v1121 = vtanh.pop %v1120
  %v1122 = vmul.f32 %v1117, %v1121
  %v1123 = vpack.c.bf16 %v1122, %v1122
  %s1124 = scalar_lea.vmem [#allocation2], 12
  %1125 = vst [vmem:[%s1124] sm:$0xf] %v1123
  %s1126 = scalar_lea.vmem [#allocation3], 128
  %v1127 = vld [vmem:[%s1126] sm:$0xff]
  %v1128 = vld [vmem:[%s1126 + $0x8] sm:$0xff]
  %v1129 = vld [vmem:[%s1126 + $0x10] sm:$0xff]
  %v1130 = vld [vmem:[%s1126 + $0x18] sm:$0xff]
  %1131 = vmatprep.subr.bf16.mxu0 %v625
  %1132 = vmatpush1.bf16.msra.mxu0 %v624
  %1133 = vmatprep.subr.bf16.mxu0 %v621
  %1134 = vmatpush1.bf16.msra.mxu0 %v620
  %1135 = vmatprep.subr.bf16.mxu0 %v617
  %1136 = vmatpush1.bf16.msra.mxu0 %v616
  %1137 = vmatprep.subr.bf16.mxu0 %v613
  %1138 = vmatpush1.bf16.msra.mxu0 %v612
  %1139 = vmatprep.subr.bf16.mxu0 %v609
  %1140 = vmatpush1.bf16.msra.mxu0 %v608
  %1141 = vmatprep.subr.bf16.mxu0 %v605
  %1142 = vmatpush1.bf16.msra.mxu0 %v604
  %1143 = vmatprep.subr.bf16.mxu0 %v601
  %1144 = vmatpush1.bf16.msra.mxu0 %v600
  %1145 = vmatprep.subr.bf16.mxu0 %v597
  %1146 = vmatpush1.bf16.msra.mxu0 %v596
  %1147 = vmatprep.subr.bf16.mxu0 0
  %1148 = vmatpush2.bf16.msra.mxu0 0
  %1149 = vmatprep.subr.bf16.mxu0 0
  %1150 = vmatpush2.bf16.msra.mxu0 0
  %1151 = vmatprep.subr.bf16.mxu0 0
  %1152 = vmatpush2.bf16.msra.mxu0 0
  %1153 = vmatprep.subr.bf16.mxu0 0
  %1154 = vmatpush2.bf16.msra.mxu0 0
  %1155 = vmatprep.subr.bf16.mxu0 0
  %1156 = vmatpush2.bf16.msra.mxu0 0
  %1157 = vmatprep.subr.bf16.mxu0 0
  %1158 = vmatpush2.bf16.msra.mxu0 0
  %1159 = vmatprep.subr.bf16.mxu0 0
  %1160 = vmatpush2.bf16.msra.mxu0 0
  %1161 = vmatprep.subr.bf16.mxu0 0
  %1162 = vmatpush2.bf16.msra.mxu0 0
  %1163 = vmatprep.mubr.bf16.mxu0 0
  %1164 = vmatmul.mubr.bf16.gmra.mxu0 %v1123
  %v1165 = vpop.f32.mrf.mxu0
  %v1166 = vadd.f32 0.0, %v1165
  %v1167 = vpop.f32.mrf.mxu0
  %v1168 = vadd.f32 0.0, %v1167
  %v1169 = vpop.f32.mrf.mxu0
  %v1170 = vpop.f32.mrf.mxu0
  %1171 = vdwg.mxu0
  %1172 = vmatprep.subr.bf16.mxu0 %v627
  %1173 = vmatpush1.bf16.msra.mxu0 %v626
  %1174 = vmatprep.subr.bf16.mxu0 %v623
  %1175 = vmatpush1.bf16.msra.mxu0 %v622
  %1176 = vmatprep.subr.bf16.mxu0 %v619
  %1177 = vmatpush1.bf16.msra.mxu0 %v618
  %1178 = vmatprep.subr.bf16.mxu0 %v615
  %1179 = vmatpush1.bf16.msra.mxu0 %v614
  %1180 = vmatprep.subr.bf16.mxu0 %v611
  %1181 = vmatpush1.bf16.msra.mxu0 %v610
  %1182 = vmatprep.subr.bf16.mxu0 %v607
  %1183 = vmatpush1.bf16.msra.mxu0 %v606
  %1184 = vmatprep.subr.bf16.mxu0 %v603
  %1185 = vmatpush1.bf16.msra.mxu0 %v602
  %1186 = vmatprep.subr.bf16.mxu0 %v599
  %1187 = vmatpush1.bf16.msra.mxu0 %v598
  %1188 = vmatprep.subr.bf16.mxu0 0
  %1189 = vmatpush2.bf16.msra.mxu0 0
  %1190 = vmatprep.subr.bf16.mxu0 0
  %1191 = vmatpush2.bf16.msra.mxu0 0
  %1192 = vmatprep.subr.bf16.mxu0 0
  %1193 = vmatpush2.bf16.msra.mxu0 0
  %1194 = vmatprep.subr.bf16.mxu0 0
  %1195 = vmatpush2.bf16.msra.mxu0 0
  %1196 = vmatprep.subr.bf16.mxu0 0
  %1197 = vmatpush2.bf16.msra.mxu0 0
  %1198 = vmatprep.subr.bf16.mxu0 0
  %1199 = vmatpush2.bf16.msra.mxu0 0
  %1200 = vmatprep.subr.bf16.mxu0 0
  %1201 = vmatpush2.bf16.msra.mxu0 0
  %1202 = vmatprep.subr.bf16.mxu0 0
  %1203 = vmatpush2.bf16.msra.mxu0 0
  %1204 = vmatprep.mubr.bf16.mxu0 0
  %1205 = vmatmul.mubr.bf16.gmra.mxu0 %v1123
  %v1206 = vpop.f32.mrf.mxu0
  %v1207 = vadd.f32 0.0, %v1206
  %v1208 = vpop.f32.mrf.mxu0
  %v1209 = vadd.f32 0.0, %v1208
  %v1210 = vpop.f32.mrf.mxu0
  %v1211 = vpop.f32.mrf.mxu0
  %1212 = vdwg.mxu0
  %v1213 = vadd.f32 %v1127, %v1166
  %v1214 = vadd.f32 %v1128, %v1168
  %v1215 = vadd.f32 %v1129, %v1207
  %v1216 = vadd.f32 %v1130, %v1209
  %v1217 = vxor.u32 %v1213, 2147483648
  %v1218 = vmul.f32 %v1217, 1.442695
  %v1219 = vpow.pop %v1218
  %v1220 = vadd.f32 %v1219, 1.0
  %v1221 = vrcp.pop %v1220
  %v1222 = vmul.f32 1.0, %v1221
  %v1223 = vxor.u32 %v1214, 2147483648
  %v1224 = vmul.f32 %v1223, 1.442695
  %v1225 = vpow.pop %v1224
  %v1226 = vadd.f32 %v1225, 1.0
  %v1227 = vrcp.pop %v1226
  %v1228 = vmul.f32 1.0, %v1227
  %v1229 = vtanh.pop %v1215
  %v1230 = vxor.u32 %v1216, 2147483648
  %v1231 = vmul.f32 %v1230, 1.442695
  %v1232 = vpow.pop %v1231
  %v1233 = vadd.f32 %v1232, 1.0
  %v1234 = vrcp.pop %v1233
  %v1235 = vmul.f32 1.0, %v1234
  %v1236 = vmul.f32 %v1228, %v1120
  %v1237 = vmul.f32 %v1222, %v1229
  %v1238 = vadd.f32 %v1236, %v1237
  %v1239 = vtanh.pop %v1238
  %v1240 = vmul.f32 %v1235, %v1239
  %v1241 = vpack.c.bf16 %v1240, %v1240
  %s1242 = scalar_lea.vmem [#allocation2], 16
  %1243 = vst [vmem:[%s1242] sm:$0xf] %v1241
  %s1244 = scalar_lea.vmem [#allocation3], 160
  %v1245 = vld [vmem:[%s1244] sm:$0xff]
  %v1246 = vld [vmem:[%s1244 + $0x8] sm:$0xff]
  %v1247 = vld [vmem:[%s1244 + $0x10] sm:$0xff]
  %v1248 = vld [vmem:[%s1244 + $0x18] sm:$0xff]
  %1249 = vmatprep.subr.bf16.mxu0 %v625
  %1250 = vmatpush1.bf16.msra.mxu0 %v624
  %1251 = vmatprep.subr.bf16.mxu0 %v621
  %1252 = vmatpush1.bf16.msra.mxu0 %v620
  %1253 = vmatprep.subr.bf16.mxu0 %v617
  %1254 = vmatpush1.bf16.msra.mxu0 %v616
  %1255 = vmatprep.subr.bf16.mxu0 %v613
  %1256 = vmatpush1.bf16.msra.mxu0 %v612
  %1257 = vmatprep.subr.bf16.mxu0 %v609
  %1258 = vmatpush1.bf16.msra.mxu0 %v608
  %1259 = vmatprep.subr.bf16.mxu0 %v605
  %1260 = vmatpush1.bf16.msra.mxu0 %v604
  %1261 = vmatprep.subr.bf16.mxu0 %v601
  %1262 = vmatpush1.bf16.msra.mxu0 %v600
  %1263 = vmatprep.subr.bf16.mxu0 %v597
  %1264 = vmatpush1.bf16.msra.mxu0 %v596
  %1265 = vmatprep.subr.bf16.mxu0 0
  %1266 = vmatpush2.bf16.msra.mxu0 0
  %1267 = vmatprep.subr.bf16.mxu0 0
  %1268 = vmatpush2.bf16.msra.mxu0 0
  %1269 = vmatprep.subr.bf16.mxu0 0
  %1270 = vmatpush2.bf16.msra.mxu0 0
  %1271 = vmatprep.subr.bf16.mxu0 0
  %1272 = vmatpush2.bf16.msra.mxu0 0
  %1273 = vmatprep.subr.bf16.mxu0 0
  %1274 = vmatpush2.bf16.msra.mxu0 0
  %1275 = vmatprep.subr.bf16.mxu0 0
  %1276 = vmatpush2.bf16.msra.mxu0 0
  %1277 = vmatprep.subr.bf16.mxu0 0
  %1278 = vmatpush2.bf16.msra.mxu0 0
  %1279 = vmatprep.subr.bf16.mxu0 0
  %1280 = vmatpush2.bf16.msra.mxu0 0
  %1281 = vmatprep.mubr.bf16.mxu0 0
  %1282 = vmatmul.mubr.bf16.gmra.mxu0 %v1241
  %v1283 = vpop.f32.mrf.mxu0
  %v1284 = vadd.f32 0.0, %v1283
  %v1285 = vpop.f32.mrf.mxu0
  %v1286 = vadd.f32 0.0, %v1285
  %v1287 = vpop.f32.mrf.mxu0
  %v1288 = vpop.f32.mrf.mxu0
  %1289 = vdwg.mxu0
  %1290 = vmatprep.subr.bf16.mxu0 %v627
  %1291 = vmatpush1.bf16.msra.mxu0 %v626
  %1292 = vmatprep.subr.bf16.mxu0 %v623
  %1293 = vmatpush1.bf16.msra.mxu0 %v622
  %1294 = vmatprep.subr.bf16.mxu0 %v619
  %1295 = vmatpush1.bf16.msra.mxu0 %v618
  %1296 = vmatprep.subr.bf16.mxu0 %v615
  %1297 = vmatpush1.bf16.msra.mxu0 %v614
  %1298 = vmatprep.subr.bf16.mxu0 %v611
  %1299 = vmatpush1.bf16.msra.mxu0 %v610
  %1300 = vmatprep.subr.bf16.mxu0 %v607
  %1301 = vmatpush1.bf16.msra.mxu0 %v606
  %1302 = vmatprep.subr.bf16.mxu0 %v603
  %1303 = vmatpush1.bf16.msra.mxu0 %v602
  %1304 = vmatprep.subr.bf16.mxu0 %v599
  %1305 = vmatpush1.bf16.msra.mxu0 %v598
  %1306 = vmatprep.subr.bf16.mxu0 0
  %1307 = vmatpush2.bf16.msra.mxu0 0
  %1308 = vmatprep.subr.bf16.mxu0 0
  %1309 = vmatpush2.bf16.msra.mxu0 0
  %1310 = vmatprep.subr.bf16.mxu0 0
  %1311 = vmatpush2.bf16.msra.mxu0 0
  %1312 = vmatprep.subr.bf16.mxu0 0
  %1313 = vmatpush2.bf16.msra.mxu0 0
  %1314 = vmatprep.subr.bf16.mxu0 0
  %1315 = vmatpush2.bf16.msra.mxu0 0
  %1316 = vmatprep.subr.bf16.mxu0 0
  %1317 = vmatpush2.bf16.msra.mxu0 0
  %1318 = vmatprep.subr.bf16.mxu0 0
  %1319 = vmatpush2.bf16.msra.mxu0 0
  %1320 = vmatprep.subr.bf16.mxu0 0
  %1321 = vmatpush2.bf16.msra.mxu0 0
  %1322 = vmatprep.mubr.bf16.mxu0 0
  %1323 = vmatmul.mubr.bf16.gmra.mxu0 %v1241
  %v1324 = vpop.f32.mrf.mxu0
  %v1325 = vadd.f32 0.0, %v1324
  %v1326 = vpop.f32.mrf.mxu0
  %v1327 = vadd.f32 0.0, %v1326
  %v1328 = vpop.f32.mrf.mxu0
  %v1329 = vpop.f32.mrf.mxu0
  %1330 = vdwg.mxu0
  %v1331 = vadd.f32 %v1245, %v1284
  %v1332 = vadd.f32 %v1246, %v1286
  %v1333 = vadd.f32 %v1247, %v1325
  %v1334 = vadd.f32 %v1248, %v1327
  %v1335 = vxor.u32 %v1331, 2147483648
  %v1336 = vmul.f32 %v1335, 1.442695
  %v1337 = vpow.pop %v1336
  %v1338 = vadd.f32 %v1337, 1.0
  %v1339 = vrcp.pop %v1338
  %v1340 = vmul.f32 1.0, %v1339
  %v1341 = vxor.u32 %v1332, 2147483648
  %v1342 = vmul.f32 %v1341, 1.442695
  %v1343 = vpow.pop %v1342
  %v1344 = vadd.f32 %v1343, 1.0
  %v1345 = vrcp.pop %v1344
  %v1346 = vmul.f32 1.0, %v1345
  %v1347 = vtanh.pop %v1333
  %v1348 = vxor.u32 %v1334, 2147483648
  %v1349 = vmul.f32 %v1348, 1.442695
  %v1350 = vpow.pop %v1349
  %v1351 = vadd.f32 %v1350, 1.0
  %v1352 = vrcp.pop %v1351
  %v1353 = vmul.f32 1.0, %v1352
  %v1354 = vmul.f32 %v1346, %v1238
  %v1355 = vmul.f32 %v1340, %v1347
  %v1356 = vadd.f32 %v1354, %v1355
  %v1357 = vtanh.pop %v1356
  %v1358 = vmul.f32 %v1353, %v1357
  %v1359 = vpack.c.bf16 %v1358, %v1358
  %s1360 = scalar_lea.vmem [#allocation2], 20
  %1361 = vst [vmem:[%s1360] sm:$0xf] %v1359
  %s1362 = scalar_lea.vmem [#allocation3], 192
  %v1363 = vld [vmem:[%s1362] sm:$0xff]
  %v1364 = vld [vmem:[%s1362 + $0x8] sm:$0xff]
  %v1365 = vld [vmem:[%s1362 + $0x10] sm:$0xff]
  %v1366 = vld [vmem:[%s1362 + $0x18] sm:$0xff]
  %1367 = vmatprep.subr.bf16.mxu0 %v625
  %1368 = vmatpush1.bf16.msra.mxu0 %v624
  %1369 = vmatprep.subr.bf16.mxu0 %v621
  %1370 = vmatpush1.bf16.msra.mxu0 %v620
  %1371 = vmatprep.subr.bf16.mxu0 %v617
  %1372 = vmatpush1.bf16.msra.mxu0 %v616
  %1373 = vmatprep.subr.bf16.mxu0 %v613
  %1374 = vmatpush1.bf16.msra.mxu0 %v612
  %1375 = vmatprep.subr.bf16.mxu0 %v609
  %1376 = vmatpush1.bf16.msra.mxu0 %v608
  %1377 = vmatprep.subr.bf16.mxu0 %v605
  %1378 = vmatpush1.bf16.msra.mxu0 %v604
  %1379 = vmatprep.subr.bf16.mxu0 %v601
  %1380 = vmatpush1.bf16.msra.mxu0 %v600
  %1381 = vmatprep.subr.bf16.mxu0 %v597
  %1382 = vmatpush1.bf16.msra.mxu0 %v596
  %1383 = vmatprep.subr.bf16.mxu0 0
  %1384 = vmatpush2.bf16.msra.mxu0 0
  %1385 = vmatprep.subr.bf16.mxu0 0
  %1386 = vmatpush2.bf16.msra.mxu0 0
  %1387 = vmatprep.subr.bf16.mxu0 0
  %1388 = vmatpush2.bf16.msra.mxu0 0
  %1389 = vmatprep.subr.bf16.mxu0 0
  %1390 = vmatpush2.bf16.msra.mxu0 0
  %1391 = vmatprep.subr.bf16.mxu0 0
  %1392 = vmatpush2.bf16.msra.mxu0 0
  %1393 = vmatprep.subr.bf16.mxu0 0
  %1394 = vmatpush2.bf16.msra.mxu0 0
  %1395 = vmatprep.subr.bf16.mxu0 0
  %1396 = vmatpush2.bf16.msra.mxu0 0
  %1397 = vmatprep.subr.bf16.mxu0 0
  %1398 = vmatpush2.bf16.msra.mxu0 0
  %1399 = vmatprep.mubr.bf16.mxu0 0
  %1400 = vmatmul.mubr.bf16.gmra.mxu0 %v1359
  %v1401 = vpop.f32.mrf.mxu0
  %v1402 = vadd.f32 0.0, %v1401
  %v1403 = vpop.f32.mrf.mxu0
  %v1404 = vadd.f32 0.0, %v1403
  %v1405 = vpop.f32.mrf.mxu0
  %v1406 = vpop.f32.mrf.mxu0
  %1407 = vdwg.mxu0
  %1408 = vmatprep.subr.bf16.mxu0 %v627
  %1409 = vmatpush1.bf16.msra.mxu0 %v626
  %1410 = vmatprep.subr.bf16.mxu0 %v623
  %1411 = vmatpush1.bf16.msra.mxu0 %v622
  %1412 = vmatprep.subr.bf16.mxu0 %v619
  %1413 = vmatpush1.bf16.msra.mxu0 %v618
  %1414 = vmatprep.subr.bf16.mxu0 %v615
  %1415 = vmatpush1.bf16.msra.mxu0 %v614
  %1416 = vmatprep.subr.bf16.mxu0 %v611
  %1417 = vmatpush1.bf16.msra.mxu0 %v610
  %1418 = vmatprep.subr.bf16.mxu0 %v607
  %1419 = vmatpush1.bf16.msra.mxu0 %v606
  %1420 = vmatprep.subr.bf16.mxu0 %v603
  %1421 = vmatpush1.bf16.msra.mxu0 %v602
  %1422 = vmatprep.subr.bf16.mxu0 %v599
  %1423 = vmatpush1.bf16.msra.mxu0 %v598
  %1424 = vmatprep.subr.bf16.mxu0 0
  %1425 = vmatpush2.bf16.msra.mxu0 0
  %1426 = vmatprep.subr.bf16.mxu0 0
  %1427 = vmatpush2.bf16.msra.mxu0 0
  %1428 = vmatprep.subr.bf16.mxu0 0
  %1429 = vmatpush2.bf16.msra.mxu0 0
  %1430 = vmatprep.subr.bf16.mxu0 0
  %1431 = vmatpush2.bf16.msra.mxu0 0
  %1432 = vmatprep.subr.bf16.mxu0 0
  %1433 = vmatpush2.bf16.msra.mxu0 0
  %1434 = vmatprep.subr.bf16.mxu0 0
  %1435 = vmatpush2.bf16.msra.mxu0 0
  %1436 = vmatprep.subr.bf16.mxu0 0
  %1437 = vmatpush2.bf16.msra.mxu0 0
  %1438 = vmatprep.subr.bf16.mxu0 0
  %1439 = vmatpush2.bf16.msra.mxu0 0
  %1440 = vmatprep.mubr.bf16.mxu0 0
  %1441 = vmatmul.mubr.bf16.gmra.mxu0 %v1359
  %v1442 = vpop.f32.mrf.mxu0
  %v1443 = vadd.f32 0.0, %v1442
  %v1444 = vpop.f32.mrf.mxu0
  %v1445 = vadd.f32 0.0, %v1444
  %v1446 = vpop.f32.mrf.mxu0
  %v1447 = vpop.f32.mrf.mxu0
  %1448 = vdwg.mxu0
  %v1449 = vadd.f32 %v1363, %v1402
  %v1450 = vadd.f32 %v1364, %v1404
  %v1451 = vadd.f32 %v1365, %v1443
  %v1452 = vadd.f32 %v1366, %v1445
  %v1453 = vxor.u32 %v1449, 2147483648
  %v1454 = vmul.f32 %v1453, 1.442695
  %v1455 = vpow.pop %v1454
  %v1456 = vadd.f32 %v1455, 1.0
  %v1457 = vrcp.pop %v1456
  %v1458 = vmul.f32 1.0, %v1457
  %v1459 = vxor.u32 %v1450, 2147483648
  %v1460 = vmul.f32 %v1459, 1.442695
  %v1461 = vpow.pop %v1460
  %v1462 = vadd.f32 %v1461, 1.0
  %v1463 = vrcp.pop %v1462
  %v1464 = vmul.f32 1.0, %v1463
  %v1465 = vtanh.pop %v1451
  %v1466 = vxor.u32 %v1452, 2147483648
  %v1467 = vmul.f32 %v1466, 1.442695
  %v1468 = vpow.pop %v1467
  %v1469 = vadd.f32 %v1468, 1.0
  %v1470 = vrcp.pop %v1469
  %v1471 = vmul.f32 1.0, %v1470
  %v1472 = vmul.f32 %v1464, %v1356
  %v1473 = vmul.f32 %v1458, %v1465
  %v1474 = vadd.f32 %v1472, %v1473
  %v1475 = vtanh.pop %v1474
  %v1476 = vmul.f32 %v1471, %v1475
  %v1477 = vpack.c.bf16 %v1476, %v1476
  %s1478 = scalar_lea.vmem [#allocation2], 24
  %1479 = vst [vmem:[%s1478] sm:$0xf] %v1477
  %s1480 = scalar_lea.vmem [#allocation3], 224
  %v1481 = vld [vmem:[%s1480] sm:$0xff]
  %v1482 = vld [vmem:[%s1480 + $0x8] sm:$0xff]
  %v1483 = vld [vmem:[%s1480 + $0x10] sm:$0xff]
  %v1484 = vld [vmem:[%s1480 + $0x18] sm:$0xff]
  %1485 = vmatprep.subr.bf16.mxu0 %v625
  %1486 = vmatpush1.bf16.msra.mxu0 %v624
  %1487 = vmatprep.subr.bf16.mxu0 %v621
  %1488 = vmatpush1.bf16.msra.mxu0 %v620
  %1489 = vmatprep.subr.bf16.mxu0 %v617
  %1490 = vmatpush1.bf16.msra.mxu0 %v616
  %1491 = vmatprep.subr.bf16.mxu0 %v613
  %1492 = vmatpush1.bf16.msra.mxu0 %v612
  %1493 = vmatprep.subr.bf16.mxu0 %v609
  %1494 = vmatpush1.bf16.msra.mxu0 %v608
  %1495 = vmatprep.subr.bf16.mxu0 %v605
  %1496 = vmatpush1.bf16.msra.mxu0 %v604
  %1497 = vmatprep.subr.bf16.mxu0 %v601
  %1498 = vmatpush1.bf16.msra.mxu0 %v600
  %1499 = vmatprep.subr.bf16.mxu0 %v597
  %1500 = vmatpush1.bf16.msra.mxu0 %v596
  %1501 = vmatprep.subr.bf16.mxu0 0
  %1502 = vmatpush2.bf16.msra.mxu0 0
  %1503 = vmatprep.subr.bf16.mxu0 0
  %1504 = vmatpush2.bf16.msra.mxu0 0
  %1505 = vmatprep.subr.bf16.mxu0 0
  %1506 = vmatpush2.bf16.msra.mxu0 0
  %1507 = vmatprep.subr.bf16.mxu0 0
  %1508 = vmatpush2.bf16.msra.mxu0 0
  %1509 = vmatprep.subr.bf16.mxu0 0
  %1510 = vmatpush2.bf16.msra.mxu0 0
  %1511 = vmatprep.subr.bf16.mxu0 0
  %1512 = vmatpush2.bf16.msra.mxu0 0
  %1513 = vmatprep.subr.bf16.mxu0 0
  %1514 = vmatpush2.bf16.msra.mxu0 0
  %1515 = vmatprep.subr.bf16.mxu0 0
  %1516 = vmatpush2.bf16.msra.mxu0 0
  %1517 = vmatprep.mubr.bf16.mxu0 0
  %1518 = vmatmul.mubr.bf16.gmra.mxu0 %v1477
  %v1519 = vpop.f32.mrf.mxu0
  %v1520 = vadd.f32 0.0, %v1519
  %v1521 = vpop.f32.mrf.mxu0
  %v1522 = vadd.f32 0.0, %v1521
  %v1523 = vpop.f32.mrf.mxu0
  %v1524 = vpop.f32.mrf.mxu0
  %1525 = vdwg.mxu0
  %1526 = vmatprep.subr.bf16.mxu0 %v627
  %1527 = vmatpush1.bf16.msra.mxu0 %v626
  %1528 = vmatprep.subr.bf16.mxu0 %v623
  %1529 = vmatpush1.bf16.msra.mxu0 %v622
  %1530 = vmatprep.subr.bf16.mxu0 %v619
  %1531 = vmatpush1.bf16.msra.mxu0 %v618
  %1532 = vmatprep.subr.bf16.mxu0 %v615
  %1533 = vmatpush1.bf16.msra.mxu0 %v614
  %1534 = vmatprep.subr.bf16.mxu0 %v611
  %1535 = vmatpush1.bf16.msra.mxu0 %v610
  %1536 = vmatprep.subr.bf16.mxu0 %v607
  %1537 = vmatpush1.bf16.msra.mxu0 %v606
  %1538 = vmatprep.subr.bf16.mxu0 %v603
  %1539 = vmatpush1.bf16.msra.mxu0 %v602
  %1540 = vmatprep.subr.bf16.mxu0 %v599
  %1541 = vmatpush1.bf16.msra.mxu0 %v598
  %1542 = vmatprep.subr.bf16.mxu0 0
  %1543 = vmatpush2.bf16.msra.mxu0 0
  %1544 = vmatprep.subr.bf16.mxu0 0
  %1545 = vmatpush2.bf16.msra.mxu0 0
  %1546 = vmatprep.subr.bf16.mxu0 0
  %1547 = vmatpush2.bf16.msra.mxu0 0
  %1548 = vmatprep.subr.bf16.mxu0 0
  %1549 = vmatpush2.bf16.msra.mxu0 0
  %1550 = vmatprep.subr.bf16.mxu0 0
  %1551 = vmatpush2.bf16.msra.mxu0 0
  %1552 = vmatprep.subr.bf16.mxu0 0
  %1553 = vmatpush2.bf16.msra.mxu0 0
  %1554 = vmatprep.subr.bf16.mxu0 0
  %1555 = vmatpush2.bf16.msra.mxu0 0
  %1556 = vmatprep.subr.bf16.mxu0 0
  %1557 = vmatpush2.bf16.msra.mxu0 0
  %1558 = vmatprep.mubr.bf16.mxu0 0
  %1559 = vmatmul.mubr.bf16.gmra.mxu0 %v1477
  %v1560 = vpop.f32.mrf.mxu0
  %v1561 = vadd.f32 0.0, %v1560
  %v1562 = vpop.f32.mrf.mxu0
  %v1563 = vadd.f32 0.0, %v1562
  %v1564 = vpop.f32.mrf.mxu0
  %v1565 = vpop.f32.mrf.mxu0
  %1566 = vdwg.mxu0
  %v1567 = vadd.f32 %v1481, %v1520
  %v1568 = vadd.f32 %v1482, %v1522
  %v1569 = vadd.f32 %v1483, %v1561
  %v1570 = vadd.f32 %v1484, %v1563
  %v1571 = vxor.u32 %v1567, 2147483648
  %v1572 = vmul.f32 %v1571, 1.442695
  %v1573 = vpow.pop %v1572
  %v1574 = vadd.f32 %v1573, 1.0
  %v1575 = vrcp.pop %v1574
  %v1576 = vmul.f32 1.0, %v1575
  %v1577 = vxor.u32 %v1568, 2147483648
  %v1578 = vmul.f32 %v1577, 1.442695
  %v1579 = vpow.pop %v1578
  %v1580 = vadd.f32 %v1579, 1.0
  %v1581 = vrcp.pop %v1580
  %v1582 = vmul.f32 1.0, %v1581
  %v1583 = vtanh.pop %v1569
  %v1584 = vxor.u32 %v1570, 2147483648
  %v1585 = vmul.f32 %v1584, 1.442695
  %v1586 = vpow.pop %v1585
  %v1587 = vadd.f32 %v1586, 1.0
  %v1588 = vrcp.pop %v1587
  %v1589 = vmul.f32 1.0, %v1588
  %v1590 = vmul.f32 %v1582, %v1474
  %v1591 = vmul.f32 %v1576, %v1583
  %v1592 = vadd.f32 %v1590, %v1591
  %v1593 = vtanh.pop %v1592
  %v1594 = vmul.f32 %v1589, %v1593
  %v1595 = vpack.c.bf16 %v1594, %v1594
  %s1596 = scalar_lea.vmem [#allocation2], 28
  %1597 = vst [vmem:[%s1596] sm:$0xf] %v1595
  %v1598 = vld [vmem:[#allocation2] sm:$0xf]
  %v1599 = vld [vmem:[#allocation2 + $0x4] sm:$0xf]
  %v1600 = vld [vmem:[#allocation2 + $0x8] sm:$0xf]
  %v1601 = vld [vmem:[#allocation2 + $0xc] sm:$0xf]
  %v1602 = vld [vmem:[#allocation2 + $0x10] sm:$0xf]
  %v1603 = vld [vmem:[#allocation2 + $0x14] sm:$0xf]
  %v1604 = vld [vmem:[#allocation2 + $0x18] sm:$0xf]
  %v1605 = vld [vmem:[#allocation2 + $0x1c] sm:$0xf]
  %s1606 = scalar_lea.vmem %s1, 256
  %v1607 = vld [vmem:[%s1606] sm:$0xff]
  %v1608 = vld [vmem:[%s1606 + $0x8] sm:$0xff]
  %v1609 = vld [vmem:[%s1606 + $0x10] sm:$0xff]
  %v1610 = vld [vmem:[%s1606 + $0x18] sm:$0xff]
  %v1611 = vld [vmem:[%s1606 + $0x20] sm:$0xff]
  %v1612 = vld [vmem:[%s1606 + $0x28] sm:$0xff]
  %v1613 = vld [vmem:[%s1606 + $0x30] sm:$0xff]
  %v1614 = vld [vmem:[%s1606 + $0x38] sm:$0xff]
  %v1615 = vld [vmem:[%s1606 + $0x40] sm:$0xff]
  %v1616 = vld [vmem:[%s1606 + $0x48] sm:$0xff]
  %v1617 = vld [vmem:[%s1606 + $0x50] sm:$0xff]
  %v1618 = vld [vmem:[%s1606 + $0x58] sm:$0xff]
  %v1619 = vld [vmem:[%s1606 + $0x60] sm:$0xff]
  %v1620 = vld [vmem:[%s1606 + $0x68] sm:$0xff]
  %v1621 = vld [vmem:[%s1606 + $0x70] sm:$0xff]
  %v1622 = vld [vmem:[%s1606 + $0x78] sm:$0xff]
  %v1623 = vld [vmem:[%s1606 + $0x80] sm:$0xff]
  %v1624 = vld [vmem:[%s1606 + $0x88] sm:$0xff]
  %v1625 = vld [vmem:[%s1606 + $0x90] sm:$0xff]
  %v1626 = vld [vmem:[%s1606 + $0x98] sm:$0xff]
  %v1627 = vld [vmem:[%s1606 + $0xa0] sm:$0xff]
  %v1628 = vld [vmem:[%s1606 + $0xa8] sm:$0xff]
  %v1629 = vld [vmem:[%s1606 + $0xb0] sm:$0xff]
  %v1630 = vld [vmem:[%s1606 + $0xb8] sm:$0xff]
  %v1631 = vld [vmem:[%s1606 + $0xc0] sm:$0xff]
  %v1632 = vld [vmem:[%s1606 + $0xc8] sm:$0xff]
  %v1633 = vld [vmem:[%s1606 + $0xd0] sm:$0xff]
  %v1634 = vld [vmem:[%s1606 + $0xd8] sm:$0xff]
  %v1635 = vld [vmem:[%s1606 + $0xe0] sm:$0xff]
  %v1636 = vld [vmem:[%s1606 + $0xe8] sm:$0xff]
  %v1637 = vld [vmem:[%s1606 + $0xf0] sm:$0xff]
  %v1638 = vld [vmem:[%s1606 + $0xf8] sm:$0xff]
  %s1639 = scalar_lea.vmem %s3, 4
  %v1640 = vld [vmem:[%s1639] sm:$0xf]
  %v1642 = vlaneseq
  %v1643 = vshrl.u32 %v1642, 7
  %v1644 = vsub.s32 0, %v1643
  %v1645 = vrot.slane %v1640, %v1644
  %v1646 = vlaneseq
  %v1647 = vshrl.u32 %v1646, 7
  %v1648 = vsub.s32 1, %v1647
  %v1649 = vrot.slane %v1640, %v1648
  %v1650 = vlaneseq
  %v1651 = vshrl.u32 %v1650, 7
  %v1652 = vsub.s32 2, %v1651
  %v1653 = vrot.slane %v1640, %v1652
  %v1654 = vlaneseq
  %v1655 = vshrl.u32 %v1654, 7
  %v1656 = vsub.s32 3, %v1655
  %v1657 = vrot.slane %v1640, %v1656
  %v1670 = vunpack.c.l.b16 %v1598
  %v1671 = vunpack.c.l.b16 %v1599
  %v1672 = vunpack.c.l.b16 %v1600
  %v1673 = vunpack.c.l.b16 %v1601
  %v1674 = vunpack.c.l.b16 %v1602
  %v1675 = vunpack.c.l.b16 %v1603
  %v1676 = vunpack.c.l.b16 %v1604
  %v1677 = vunpack.c.l.b16 %v1605
  %v1678 = vpack.c.b16 %v1671, %v1670
  %v1679 = vpack.c.b16 %v1673, %v1672
  %v1680 = vpack.c.b16 %v1675, %v1674
  %v1681 = vpack.c.b16 %v1677, %v1676
  %v1718 = vunpack.c.l.b16 %v1607
  %v1719 = vunpack.c.h.b16 %v1607
  %v1720 = vunpack.c.l.b16 %v1608
  %v1721 = vunpack.c.h.b16 %v1608
  %v1722 = vunpack.c.l.b16 %v1609
  %v1723 = vunpack.c.h.b16 %v1609
  %v1724 = vunpack.c.l.b16 %v1610
  %v1725 = vunpack.c.h.b16 %v1610
  %v1726 = vunpack.c.l.b16 %v1611
  %v1727 = vunpack.c.h.b16 %v1611
  %v1728 = vunpack.c.l.b16 %v1612
  %v1729 = vunpack.c.h.b16 %v1612
  %v1730 = vunpack.c.l.b16 %v1613
  %v1731 = vunpack.c.h.b16 %v1613
  %v1732 = vunpack.c.l.b16 %v1614
  %v1733 = vunpack.c.h.b16 %v1614
  %v1734 = vunpack.c.l.b16 %v1615
  %v1735 = vunpack.c.h.b16 %v1615
  %v1736 = vunpack.c.l.b16 %v1616
  %v1737 = vunpack.c.h.b16 %v1616
  %v1738 = vunpack.c.l.b16 %v1617
  %v1739 = vunpack.c.h.b16 %v1617
  %v1740 = vunpack.c.l.b16 %v1618
  %v1741 = vunpack.c.h.b16 %v1618
  %v1742 = vunpack.c.l.b16 %v1619
  %v1743 = vunpack.c.h.b16 %v1619
  %v1744 = vunpack.c.l.b16 %v1620
  %v1745 = vunpack.c.h.b16 %v1620
  %v1746 = vunpack.c.l.b16 %v1621
  %v1747 = vunpack.c.h.b16 %v1621
  %v1748 = vunpack.c.l.b16 %v1622
  %v1749 = vunpack.c.h.b16 %v1622
  %v1750 = vunpack.c.l.b16 %v1623
  %v1751 = vunpack.c.h.b16 %v1623
  %v1752 = vunpack.c.l.b16 %v1624
  %v1753 = vunpack.c.h.b16 %v1624
  %v1754 = vunpack.c.l.b16 %v1625
  %v1755 = vunpack.c.h.b16 %v1625
  %v1756 = vunpack.c.l.b16 %v1626
  %v1757 = vunpack.c.h.b16 %v1626
  %v1758 = vunpack.c.l.b16 %v1627
  %v1759 = vunpack.c.h.b16 %v1627
  %v1760 = vunpack.c.l.b16 %v1628
  %v1761 = vunpack.c.h.b16 %v1628
  %v1762 = vunpack.c.l.b16 %v1629
  %v1763 = vunpack.c.h.b16 %v1629
  %v1764 = vunpack.c.l.b16 %v1630
  %v1765 = vunpack.c.h.b16 %v1630
  %v1766 = vunpack.c.l.b16 %v1631
  %v1767 = vunpack.c.h.b16 %v1631
  %v1768 = vunpack.c.l.b16 %v1632
  %v1769 = vunpack.c.h.b16 %v1632
  %v1770 = vunpack.c.l.b16 %v1633
  %v1771 = vunpack.c.h.b16 %v1633
  %v1772 = vunpack.c.l.b16 %v1634
  %v1773 = vunpack.c.h.b16 %v1634
  %v1774 = vunpack.c.l.b16 %v1635
  %v1775 = vunpack.c.h.b16 %v1635
  %v1776 = vunpack.c.l.b16 %v1636
  %v1777 = vunpack.c.h.b16 %v1636
  %v1778 = vunpack.c.l.b16 %v1637
  %v1779 = vunpack.c.h.b16 %v1637
  %v1780 = vunpack.c.l.b16 %v1638
  %v1781 = vunpack.c.h.b16 %v1638
  %v1782 = vpack.c.b16 %v1722, %v1718
  %v1783 = vpack.c.b16 %v1723, %v1719
  %v1784 = vpack.c.b16 %v1724, %v1720
  %v1785 = vpack.c.b16 %v1725, %v1721
  %v1786 = vpack.c.b16 %v1730, %v1726
  %v1787 = vpack.c.b16 %v1731, %v1727
  %v1788 = vpack.c.b16 %v1732, %v1728
  %v1789 = vpack.c.b16 %v1733, %v1729
  %v1790 = vpack.c.b16 %v1738, %v1734
  %v1791 = vpack.c.b16 %v1739, %v1735
  %v1792 = vpack.c.b16 %v1740, %v1736
  %v1793 = vpack.c.b16 %v1741, %v1737
  %v1794 = vpack.c.b16 %v1746, %v1742
  %v1795 = vpack.c.b16 %v1747, %v1743
  %v1796 = vpack.c.b16 %v1748, %v1744
  %v1797 = vpack.c.b16 %v1749, %v1745
  %v1798 = vpack.c.b16 %v1754, %v1750
  %v1799 = vpack.c.b16 %v1755, %v1751
  %v1800 = vpack.c.b16 %v1756, %v1752
  %v1801 = vpack.c.b16 %v1757, %v1753
  %v1802 = vpack.c.b16 %v1762, %v1758
  %v1803 = vpack.c.b16 %v1763, %v1759
  %v1804 = vpack.c.b16 %v1764, %v1760
  %v1805 = vpack.c.b16 %v1765, %v1761
  %v1806 = vpack.c.b16 %v1770, %v1766
  %v1807 = vpack.c.b16 %v1771, %v1767
  %v1808 = vpack.c.b16 %v1772, %v1768
  %v1809 = vpack.c.b16 %v1773, %v1769
  %v1810 = vpack.c.b16 %v1778, %v1774
  %v1811 = vpack.c.b16 %v1779, %v1775
  %v1812 = vpack.c.b16 %v1780, %v1776
  %v1813 = vpack.c.b16 %v1781, %v1777
  %1846 = vmatprep.subr.bf16.mxu0 %v1811
  %1847 = vmatpush1.bf16.msra.mxu0 %v1810
  %1848 = vmatprep.subr.bf16.mxu0 %v1807
  %1849 = vmatpush1.bf16.msra.mxu0 %v1806
  %1850 = vmatprep.subr.bf16.mxu0 %v1803
  %1851 = vmatpush1.bf16.msra.mxu0 %v1802
  %1852 = vmatprep.subr.bf16.mxu0 %v1799
  %1853 = vmatpush1.bf16.msra.mxu0 %v1798
  %1854 = vmatprep.subr.bf16.mxu0 %v1795
  %1855 = vmatpush1.bf16.msra.mxu0 %v1794
  %1856 = vmatprep.subr.bf16.mxu0 %v1791
  %1857 = vmatpush1.bf16.msra.mxu0 %v1790
  %1858 = vmatprep.subr.bf16.mxu0 %v1787
  %1859 = vmatpush1.bf16.msra.mxu0 %v1786
  %1860 = vmatprep.subr.bf16.mxu0 %v1783
  %1861 = vmatpush1.bf16.msra.mxu0 %v1782
  %1862 = vmatprep.subr.bf16.mxu0 0
  %1863 = vmatpush2.bf16.msra.mxu0 0
  %1864 = vmatprep.subr.bf16.mxu0 0
  %1865 = vmatpush2.bf16.msra.mxu0 0
  %1866 = vmatprep.subr.bf16.mxu0 0
  %1867 = vmatpush2.bf16.msra.mxu0 0
  %1868 = vmatprep.subr.bf16.mxu0 0
  %1869 = vmatpush2.bf16.msra.mxu0 0
  %1870 = vmatprep.subr.bf16.mxu0 0
  %1871 = vmatpush2.bf16.msra.mxu0 0
  %1872 = vmatprep.subr.bf16.mxu0 0
  %1873 = vmatpush2.bf16.msra.mxu0 0
  %1874 = vmatprep.subr.bf16.mxu0 0
  %1875 = vmatpush2.bf16.msra.mxu0 0
  %1876 = vmatprep.subr.bf16.mxu0 0
  %1877 = vmatpush2.bf16.msra.mxu0 0
  %1878 = vmatprep.mubr.bf16.mxu0 0
  %1879 = vmatmul.mubr.bf16.gmra.mxu0 %v1678
  %v1880 = vpop.f32.mrf.mxu0
  %v1881 = vadd.f32 %v1645, %v1880
  %v1882 = vpop.f32.mrf.mxu0
  %v1883 = vadd.f32 %v1649, %v1882
  %v1884 = vpop.f32.mrf.mxu0
  %v1885 = vadd.f32 %v1645, %v1884
  %v1886 = vpop.f32.mrf.mxu0
  %v1887 = vadd.f32 %v1649, %v1886
  %1888 = vmatprep.mubr.bf16.mxu0 0
  %1889 = vmatmul.mubr.bf16.gmra.mxu0 %v1679
  %v1890 = vpop.f32.mrf.mxu0
  %v1891 = vadd.f32 %v1645, %v1890
  %v1892 = vpop.f32.mrf.mxu0
  %v1893 = vadd.f32 %v1649, %v1892
  %v1894 = vpop.f32.mrf.mxu0
  %v1895 = vadd.f32 %v1645, %v1894
  %v1896 = vpop.f32.mrf.mxu0
  %v1897 = vadd.f32 %v1649, %v1896
  %1898 = vmatprep.mubr.bf16.mxu0 0
  %1899 = vmatmul.mubr.bf16.gmra.mxu0 %v1680
  %v1900 = vpop.f32.mrf.mxu0
  %v1901 = vadd.f32 %v1645, %v1900
  %v1902 = vpop.f32.mrf.mxu0
  %v1903 = vadd.f32 %v1649, %v1902
  %v1904 = vpop.f32.mrf.mxu0
  %v1905 = vadd.f32 %v1645, %v1904
  %v1906 = vpop.f32.mrf.mxu0
  %v1907 = vadd.f32 %v1649, %v1906
  %1908 = vmatprep.mubr.bf16.mxu0 0
  %1909 = vmatmul.mubr.bf16.gmra.mxu0 %v1681
  %v1910 = vpop.f32.mrf.mxu0
  %v1911 = vadd.f32 %v1645, %v1910
  %v1912 = vpop.f32.mrf.mxu0
  %v1913 = vadd.f32 %v1649, %v1912
  %v1914 = vpop.f32.mrf.mxu0
  %v1915 = vadd.f32 %v1645, %v1914
  %v1916 = vpop.f32.mrf.mxu0
  %v1917 = vadd.f32 %v1649, %v1916
  %1918 = vdwg.mxu0
  %1919 = vmatprep.subr.bf16.mxu0 %v1813
  %1920 = vmatpush1.bf16.msra.mxu0 %v1812
  %1921 = vmatprep.subr.bf16.mxu0 %v1809
  %1922 = vmatpush1.bf16.msra.mxu0 %v1808
  %1923 = vmatprep.subr.bf16.mxu0 %v1805
  %1924 = vmatpush1.bf16.msra.mxu0 %v1804
  %1925 = vmatprep.subr.bf16.mxu0 %v1801
  %1926 = vmatpush1.bf16.msra.mxu0 %v1800
  %1927 = vmatprep.subr.bf16.mxu0 %v1797
  %1928 = vmatpush1.bf16.msra.mxu0 %v1796
  %1929 = vmatprep.subr.bf16.mxu0 %v1793
  %1930 = vmatpush1.bf16.msra.mxu0 %v1792
  %1931 = vmatprep.subr.bf16.mxu0 %v1789
  %1932 = vmatpush1.bf16.msra.mxu0 %v1788
  %1933 = vmatprep.subr.bf16.mxu0 %v1785
  %1934 = vmatpush1.bf16.msra.mxu0 %v1784
  %1935 = vmatprep.subr.bf16.mxu0 0
  %1936 = vmatpush2.bf16.msra.mxu0 0
  %1937 = vmatprep.subr.bf16.mxu0 0
  %1938 = vmatpush2.bf16.msra.mxu0 0
  %1939 = vmatprep.subr.bf16.mxu0 0
  %1940 = vmatpush2.bf16.msra.mxu0 0
  %1941 = vmatprep.subr.bf16.mxu0 0
  %1942 = vmatpush2.bf16.msra.mxu0 0
  %1943 = vmatprep.subr.bf16.mxu0 0
  %1944 = vmatpush2.bf16.msra.mxu0 0
  %1945 = vmatprep.subr.bf16.mxu0 0
  %1946 = vmatpush2.bf16.msra.mxu0 0
  %1947 = vmatprep.subr.bf16.mxu0 0
  %1948 = vmatpush2.bf16.msra.mxu0 0
  %1949 = vmatprep.subr.bf16.mxu0 0
  %1950 = vmatpush2.bf16.msra.mxu0 0
  %1951 = vmatprep.mubr.bf16.mxu0 0
  %1952 = vmatmul.mubr.bf16.gmra.mxu0 %v1678
  %v1953 = vpop.f32.mrf.mxu0
  %v1954 = vadd.f32 %v1653, %v1953
  %v1955 = vpop.f32.mrf.mxu0
  %v1956 = vadd.f32 %v1657, %v1955
  %v1957 = vpop.f32.mrf.mxu0
  %v1958 = vadd.f32 %v1653, %v1957
  %v1959 = vpop.f32.mrf.mxu0
  %v1960 = vadd.f32 %v1657, %v1959
  %1961 = vmatprep.mubr.bf16.mxu0 0
  %1962 = vmatmul.mubr.bf16.gmra.mxu0 %v1679
  %v1963 = vpop.f32.mrf.mxu0
  %v1964 = vadd.f32 %v1653, %v1963
  %v1965 = vpop.f32.mrf.mxu0
  %v1966 = vadd.f32 %v1657, %v1965
  %v1967 = vpop.f32.mrf.mxu0
  %v1968 = vadd.f32 %v1653, %v1967
  %v1969 = vpop.f32.mrf.mxu0
  %v1970 = vadd.f32 %v1657, %v1969
  %1971 = vmatprep.mubr.bf16.mxu0 0
  %1972 = vmatmul.mubr.bf16.gmra.mxu0 %v1680
  %v1973 = vpop.f32.mrf.mxu0
  %v1974 = vadd.f32 %v1653, %v1973
  %v1975 = vpop.f32.mrf.mxu0
  %v1976 = vadd.f32 %v1657, %v1975
  %v1977 = vpop.f32.mrf.mxu0
  %v1978 = vadd.f32 %v1653, %v1977
  %v1979 = vpop.f32.mrf.mxu0
  %v1980 = vadd.f32 %v1657, %v1979
  %1981 = vmatprep.mubr.bf16.mxu0 0
  %1982 = vmatmul.mubr.bf16.gmra.mxu0 %v1681
  %v1983 = vpop.f32.mrf.mxu0
  %v1984 = vadd.f32 %v1653, %v1983
  %v1985 = vpop.f32.mrf.mxu0
  %v1986 = vadd.f32 %v1657, %v1985
  %v1987 = vpop.f32.mrf.mxu0
  %v1988 = vadd.f32 %v1653, %v1987
  %v1989 = vpop.f32.mrf.mxu0
  %v1990 = vadd.f32 %v1657, %v1989
  %1991 = vdwg.mxu0
  %1992 = vst [vmem:[#allocation3] sm:$0xff] %v1881
  %1993 = vst [vmem:[#allocation3 + $0x8] sm:$0xff] %v1883
  %1994 = vst [vmem:[#allocation3 + $0x10] sm:$0xff] %v1954
  %1995 = vst [vmem:[#allocation3 + $0x18] sm:$0xff] %v1956
  %1996 = vst [vmem:[#allocation3 + $0x20] sm:$0xff] %v1885
  %1997 = vst [vmem:[#allocation3 + $0x28] sm:$0xff] %v1887
  %1998 = vst [vmem:[#allocation3 + $0x30] sm:$0xff] %v1958
  %1999 = vst [vmem:[#allocation3 + $0x38] sm:$0xff] %v1960
  %2000 = vst [vmem:[#allocation3 + $0x40] sm:$0xff] %v1891
  %2001 = vst [vmem:[#allocation3 + $0x48] sm:$0xff] %v1893
  %2002 = vst [vmem:[#allocation3 + $0x50] sm:$0xff] %v1964
  %2003 = vst [vmem:[#allocation3 + $0x58] sm:$0xff] %v1966
  %2004 = vst [vmem:[#allocation3 + $0x60] sm:$0xff] %v1895
  %2005 = vst [vmem:[#allocation3 + $0x68] sm:$0xff] %v1897
  %2006 = vst [vmem:[#allocation3 + $0x70] sm:$0xff] %v1968
  %2007 = vst [vmem:[#allocation3 + $0x78] sm:$0xff] %v1970
  %2008 = vst [vmem:[#allocation3 + $0x80] sm:$0xff] %v1901
  %2009 = vst [vmem:[#allocation3 + $0x88] sm:$0xff] %v1903
  %2010 = vst [vmem:[#allocation3 + $0x90] sm:$0xff] %v1974
  %2011 = vst [vmem:[#allocation3 + $0x98] sm:$0xff] %v1976
  %2012 = vst [vmem:[#allocation3 + $0xa0] sm:$0xff] %v1905
  %2013 = vst [vmem:[#allocation3 + $0xa8] sm:$0xff] %v1907
  %2014 = vst [vmem:[#allocation3 + $0xb0] sm:$0xff] %v1978
  %2015 = vst [vmem:[#allocation3 + $0xb8] sm:$0xff] %v1980
  %2016 = vst [vmem:[#allocation3 + $0xc0] sm:$0xff] %v1911
  %2017 = vst [vmem:[#allocation3 + $0xc8] sm:$0xff] %v1913
  %2018 = vst [vmem:[#allocation3 + $0xd0] sm:$0xff] %v1984
  %2019 = vst [vmem:[#allocation3 + $0xd8] sm:$0xff] %v1986
  %2020 = vst [vmem:[#allocation3 + $0xe0] sm:$0xff] %v1915
  %2021 = vst [vmem:[#allocation3 + $0xe8] sm:$0xff] %v1917
  %2022 = vst [vmem:[#allocation3 + $0xf0] sm:$0xff] %v1988
  %2023 = vst [vmem:[#allocation3 + $0xf8] sm:$0xff] %v1990
  %s2024 = scalar_lea.vmem %s2, 256
  %v2025 = vld [vmem:[%s2024] sm:$0xff]
  %v2026 = vld [vmem:[%s2024 + $0x8] sm:$0xff]
  %v2027 = vld [vmem:[%s2024 + $0x10] sm:$0xff]
  %v2028 = vld [vmem:[%s2024 + $0x18] sm:$0xff]
  %v2029 = vld [vmem:[%s2024 + $0x20] sm:$0xff]
  %v2030 = vld [vmem:[%s2024 + $0x28] sm:$0xff]
  %v2031 = vld [vmem:[%s2024 + $0x30] sm:$0xff]
  %v2032 = vld [vmem:[%s2024 + $0x38] sm:$0xff]
  %v2033 = vld [vmem:[%s2024 + $0x40] sm:$0xff]
  %v2034 = vld [vmem:[%s2024 + $0x48] sm:$0xff]
  %v2035 = vld [vmem:[%s2024 + $0x50] sm:$0xff]
  %v2036 = vld [vmem:[%s2024 + $0x58] sm:$0xff]
  %v2037 = vld [vmem:[%s2024 + $0x60] sm:$0xff]
  %v2038 = vld [vmem:[%s2024 + $0x68] sm:$0xff]
  %v2039 = vld [vmem:[%s2024 + $0x70] sm:$0xff]
  %v2040 = vld [vmem:[%s2024 + $0x78] sm:$0xff]
  %v2041 = vld [vmem:[%s2024 + $0x80] sm:$0xff]
  %v2042 = vld [vmem:[%s2024 + $0x88] sm:$0xff]
  %v2043 = vld [vmem:[%s2024 + $0x90] sm:$0xff]
  %v2044 = vld [vmem:[%s2024 + $0x98] sm:$0xff]
  %v2045 = vld [vmem:[%s2024 + $0xa0] sm:$0xff]
  %v2046 = vld [vmem:[%s2024 + $0xa8] sm:$0xff]
  %v2047 = vld [vmem:[%s2024 + $0xb0] sm:$0xff]
  %v2048 = vld [vmem:[%s2024 + $0xb8] sm:$0xff]
  %v2049 = vld [vmem:[%s2024 + $0xc0] sm:$0xff]
  %v2050 = vld [vmem:[%s2024 + $0xc8] sm:$0xff]
  %v2051 = vld [vmem:[%s2024 + $0xd0] sm:$0xff]
  %v2052 = vld [vmem:[%s2024 + $0xd8] sm:$0xff]
  %v2053 = vld [vmem:[%s2024 + $0xe0] sm:$0xff]
  %v2054 = vld [vmem:[%s2024 + $0xe8] sm:$0xff]
  %v2055 = vld [vmem:[%s2024 + $0xf0] sm:$0xff]
  %v2056 = vld [vmem:[%s2024 + $0xf8] sm:$0xff]
  %v2057 = vld [vmem:[#allocation3] sm:$0xff]
  %v2058 = vld [vmem:[#allocation3 + $0x8] sm:$0xff]
  %v2059 = vld [vmem:[#allocation3 + $0x10] sm:$0xff]
  %v2060 = vld [vmem:[#allocation3 + $0x18] sm:$0xff]
  %v2093 = vunpack.c.l.b16 %v2025
  %v2094 = vunpack.c.h.b16 %v2025
  %v2095 = vunpack.c.l.b16 %v2026
  %v2096 = vunpack.c.h.b16 %v2026
  %v2097 = vunpack.c.l.b16 %v2027
  %v2098 = vunpack.c.h.b16 %v2027
  %v2099 = vunpack.c.l.b16 %v2028
  %v2100 = vunpack.c.h.b16 %v2028
  %v2101 = vunpack.c.l.b16 %v2029
  %v2102 = vunpack.c.h.b16 %v2029
  %v2103 = vunpack.c.l.b16 %v2030
  %v2104 = vunpack.c.h.b16 %v2030
  %v2105 = vunpack.c.l.b16 %v2031
  %v2106 = vunpack.c.h.b16 %v2031
  %v2107 = vunpack.c.l.b16 %v2032
  %v2108 = vunpack.c.h.b16 %v2032
  %v2109 = vunpack.c.l.b16 %v2033
  %v2110 = vunpack.c.h.b16 %v2033
  %v2111 = vunpack.c.l.b16 %v2034
  %v2112 = vunpack.c.h.b16 %v2034
  %v2113 = vunpack.c.l.b16 %v2035
  %v2114 = vunpack.c.h.b16 %v2035
  %v2115 = vunpack.c.l.b16 %v2036
  %v2116 = vunpack.c.h.b16 %v2036
  %v2117 = vunpack.c.l.b16 %v2037
  %v2118 = vunpack.c.h.b16 %v2037
  %v2119 = vunpack.c.l.b16 %v2038
  %v2120 = vunpack.c.h.b16 %v2038
  %v2121 = vunpack.c.l.b16 %v2039
  %v2122 = vunpack.c.h.b16 %v2039
  %v2123 = vunpack.c.l.b16 %v2040
  %v2124 = vunpack.c.h.b16 %v2040
  %v2125 = vunpack.c.l.b16 %v2041
  %v2126 = vunpack.c.h.b16 %v2041
  %v2127 = vunpack.c.l.b16 %v2042
  %v2128 = vunpack.c.h.b16 %v2042
  %v2129 = vunpack.c.l.b16 %v2043
  %v2130 = vunpack.c.h.b16 %v2043
  %v2131 = vunpack.c.l.b16 %v2044
  %v2132 = vunpack.c.h.b16 %v2044
  %v2133 = vunpack.c.l.b16 %v2045
  %v2134 = vunpack.c.h.b16 %v2045
  %v2135 = vunpack.c.l.b16 %v2046
  %v2136 = vunpack.c.h.b16 %v2046
  %v2137 = vunpack.c.l.b16 %v2047
  %v2138 = vunpack.c.h.b16 %v2047
  %v2139 = vunpack.c.l.b16 %v2048
  %v2140 = vunpack.c.h.b16 %v2048
  %v2141 = vunpack.c.l.b16 %v2049
  %v2142 = vunpack.c.h.b16 %v2049
  %v2143 = vunpack.c.l.b16 %v2050
  %v2144 = vunpack.c.h.b16 %v2050
  %v2145 = vunpack.c.l.b16 %v2051
  %v2146 = vunpack.c.h.b16 %v2051
  %v2147 = vunpack.c.l.b16 %v2052
  %v2148 = vunpack.c.h.b16 %v2052
  %v2149 = vunpack.c.l.b16 %v2053
  %v2150 = vunpack.c.h.b16 %v2053
  %v2151 = vunpack.c.l.b16 %v2054
  %v2152 = vunpack.c.h.b16 %v2054
  %v2153 = vunpack.c.l.b16 %v2055
  %v2154 = vunpack.c.h.b16 %v2055
  %v2155 = vunpack.c.l.b16 %v2056
  %v2156 = vunpack.c.h.b16 %v2056
  %v2157 = vpack.c.b16 %v2097, %v2093
  %v2158 = vpack.c.b16 %v2098, %v2094
  %v2159 = vpack.c.b16 %v2099, %v2095
  %v2160 = vpack.c.b16 %v2100, %v2096
  %v2161 = vpack.c.b16 %v2105, %v2101
  %v2162 = vpack.c.b16 %v2106, %v2102
  %v2163 = vpack.c.b16 %v2107, %v2103
  %v2164 = vpack.c.b16 %v2108, %v2104
  %v2165 = vpack.c.b16 %v2113, %v2109
  %v2166 = vpack.c.b16 %v2114, %v2110
  %v2167 = vpack.c.b16 %v2115, %v2111
  %v2168 = vpack.c.b16 %v2116, %v2112
  %v2169 = vpack.c.b16 %v2121, %v2117
  %v2170 = vpack.c.b16 %v2122, %v2118
  %v2171 = vpack.c.b16 %v2123, %v2119
  %v2172 = vpack.c.b16 %v2124, %v2120
  %v2173 = vpack.c.b16 %v2129, %v2125
  %v2174 = vpack.c.b16 %v2130, %v2126
  %v2175 = vpack.c.b16 %v2131, %v2127
  %v2176 = vpack.c.b16 %v2132, %v2128
  %v2177 = vpack.c.b16 %v2137, %v2133
  %v2178 = vpack.c.b16 %v2138, %v2134
  %v2179 = vpack.c.b16 %v2139, %v2135
  %v2180 = vpack.c.b16 %v2140, %v2136
  %v2181 = vpack.c.b16 %v2145, %v2141
  %v2182 = vpack.c.b16 %v2146, %v2142
  %v2183 = vpack.c.b16 %v2147, %v2143
  %v2184 = vpack.c.b16 %v2148, %v2144
  %v2185 = vpack.c.b16 %v2153, %v2149
  %v2186 = vpack.c.b16 %v2154, %v2150
  %v2187 = vpack.c.b16 %v2155, %v2151
  %v2188 = vpack.c.b16 %v2156, %v2152
  %2221 = vmatprep.subr.bf16.mxu0 %v2186
  %2222 = vmatpush1.bf16.msra.mxu0 %v2185
  %2223 = vmatprep.subr.bf16.mxu0 %v2182
  %2224 = vmatpush1.bf16.msra.mxu0 %v2181
  %2225 = vmatprep.subr.bf16.mxu0 %v2178
  %2226 = vmatpush1.bf16.msra.mxu0 %v2177
  %2227 = vmatprep.subr.bf16.mxu0 %v2174
  %2228 = vmatpush1.bf16.msra.mxu0 %v2173
  %2229 = vmatprep.subr.bf16.mxu0 %v2170
  %2230 = vmatpush1.bf16.msra.mxu0 %v2169
  %2231 = vmatprep.subr.bf16.mxu0 %v2166
  %2232 = vmatpush1.bf16.msra.mxu0 %v2165
  %2233 = vmatprep.subr.bf16.mxu0 %v2162
  %2234 = vmatpush1.bf16.msra.mxu0 %v2161
  %2235 = vmatprep.subr.bf16.mxu0 %v2158
  %2236 = vmatpush1.bf16.msra.mxu0 %v2157
  %2237 = vmatprep.subr.bf16.mxu0 0
  %2238 = vmatpush2.bf16.msra.mxu0 0
  %2239 = vmatprep.subr.bf16.mxu0 0
  %2240 = vmatpush2.bf16.msra.mxu0 0
  %2241 = vmatprep.subr.bf16.mxu0 0
  %2242 = vmatpush2.bf16.msra.mxu0 0
  %2243 = vmatprep.subr.bf16.mxu0 0
  %2244 = vmatpush2.bf16.msra.mxu0 0
  %2245 = vmatprep.subr.bf16.mxu0 0
  %2246 = vmatpush2.bf16.msra.mxu0 0
  %2247 = vmatprep.subr.bf16.mxu0 0
  %2248 = vmatpush2.bf16.msra.mxu0 0
  %2249 = vmatprep.subr.bf16.mxu0 0
  %2250 = vmatpush2.bf16.msra.mxu0 0
  %2251 = vmatprep.subr.bf16.mxu0 0
  %2252 = vmatpush2.bf16.msra.mxu0 0
  %2253 = vmatprep.mubr.bf16.mxu0 0
  %2254 = vmatmul.mubr.bf16.gmra.mxu0 0
  %v2255 = vpop.f32.mrf.mxu0
  %v2256 = vadd.f32 0.0, %v2255
  %v2257 = vpop.f32.mrf.mxu0
  %v2258 = vadd.f32 0.0, %v2257
  %v2259 = vpop.f32.mrf.mxu0
  %v2260 = vpop.f32.mrf.mxu0
  %2261 = vdwg.mxu0
  %2262 = vmatprep.subr.bf16.mxu0 %v2188
  %2263 = vmatpush1.bf16.msra.mxu0 %v2187
  %2264 = vmatprep.subr.bf16.mxu0 %v2184
  %2265 = vmatpush1.bf16.msra.mxu0 %v2183
  %2266 = vmatprep.subr.bf16.mxu0 %v2180
  %2267 = vmatpush1.bf16.msra.mxu0 %v2179
  %2268 = vmatprep.subr.bf16.mxu0 %v2176
  %2269 = vmatpush1.bf16.msra.mxu0 %v2175
  %2270 = vmatprep.subr.bf16.mxu0 %v2172
  %2271 = vmatpush1.bf16.msra.mxu0 %v2171
  %2272 = vmatprep.subr.bf16.mxu0 %v2168
  %2273 = vmatpush1.bf16.msra.mxu0 %v2167
  %2274 = vmatprep.subr.bf16.mxu0 %v2164
  %2275 = vmatpush1.bf16.msra.mxu0 %v2163
  %2276 = vmatprep.subr.bf16.mxu0 %v2160
  %2277 = vmatpush1.bf16.msra.mxu0 %v2159
  %2278 = vmatprep.subr.bf16.mxu0 0
  %2279 = vmatpush2.bf16.msra.mxu0 0
  %2280 = vmatprep.subr.bf16.mxu0 0
  %2281 = vmatpush2.bf16.msra.mxu0 0
  %2282 = vmatprep.subr.bf16.mxu0 0
  %2283 = vmatpush2.bf16.msra.mxu0 0
  %2284 = vmatprep.subr.bf16.mxu0 0
  %2285 = vmatpush2.bf16.msra.mxu0 0
  %2286 = vmatprep.subr.bf16.mxu0 0
  %2287 = vmatpush2.bf16.msra.mxu0 0
  %2288 = vmatprep.subr.bf16.mxu0 0
  %2289 = vmatpush2.bf16.msra.mxu0 0
  %2290 = vmatprep.subr.bf16.mxu0 0
  %2291 = vmatpush2.bf16.msra.mxu0 0
  %2292 = vmatprep.subr.bf16.mxu0 0
  %2293 = vmatpush2.bf16.msra.mxu0 0
  %2294 = vmatprep.mubr.bf16.mxu0 0
  %2295 = vmatmul.mubr.bf16.gmra.mxu0 0
  %v2296 = vpop.f32.mrf.mxu0
  %v2297 = vadd.f32 0.0, %v2296
  %v2298 = vpop.f32.mrf.mxu0
  %v2299 = vadd.f32 0.0, %v2298
  %v2300 = vpop.f32.mrf.mxu0
  %v2301 = vpop.f32.mrf.mxu0
  %2302 = vdwg.mxu0
  %v2303 = vadd.f32 %v2057, %v2256
  %v2304 = vadd.f32 %v2058, %v2258
  %v2305 = vadd.f32 %v2059, %v2297
  %v2306 = vadd.f32 %v2060, %v2299
  %v2307 = vxor.u32 %v2303, 2147483648
  %v2308 = vmul.f32 %v2307, 1.442695
  %v2309 = vpow.pop %v2308
  %v2310 = vadd.f32 %v2309, 1.0
  %v2311 = vrcp.pop %v2310
  %v2312 = vmul.f32 1.0, %v2311
  %v2313 = vxor.u32 %v2304, 2147483648
  %v2314 = vmul.f32 %v2313, 1.442695
  %v2315 = vpow.pop %v2314
  %v2316 = vadd.f32 %v2315, 1.0
  %v2317 = vrcp.pop %v2316
  %v2318 = vmul.f32 1.0, %v2317
  %v2319 = vtanh.pop %v2305
  %v2320 = vxor.u32 %v2306, 2147483648
  %v2321 = vmul.f32 %v2320, 1.442695
  %v2322 = vpow.pop %v2321
  %v2323 = vadd.f32 %v2322, 1.0
  %v2324 = vrcp.pop %v2323
  %v2325 = vmul.f32 1.0, %v2324
  %v2326 = vmul.f32 %v2318, 0.0
  %v2327 = vmul.f32 %v2312, %v2319
  %v2328 = vadd.f32 %v2326, %v2327
  %v2329 = vtanh.pop %v2328
  %v2330 = vmul.f32 %v2325, %v2329
  %v2331 = vpack.c.bf16 %v2330, %v2330
  %2332 = vst [vmem:[#allocation2] sm:$0xf] %v2331
  %v2333 = vld [vmem:[%s772] sm:$0xff]
  %v2334 = vld [vmem:[%s772 + $0x8] sm:$0xff]
  %v2335 = vld [vmem:[%s772 + $0x10] sm:$0xff]
  %v2336 = vld [vmem:[%s772 + $0x18] sm:$0xff]
  %2337 = vmatprep.subr.bf16.mxu0 %v2186
  %2338 = vmatpush1.bf16.msra.mxu0 %v2185
  %2339 = vmatprep.subr.bf16.mxu0 %v2182
  %2340 = vmatpush1.bf16.msra.mxu0 %v2181
  %2341 = vmatprep.subr.bf16.mxu0 %v2178
  %2342 = vmatpush1.bf16.msra.mxu0 %v2177
  %2343 = vmatprep.subr.bf16.mxu0 %v2174
  %2344 = vmatpush1.bf16.msra.mxu0 %v2173
  %2345 = vmatprep.subr.bf16.mxu0 %v2170
  %2346 = vmatpush1.bf16.msra.mxu0 %v2169
  %2347 = vmatprep.subr.bf16.mxu0 %v2166
  %2348 = vmatpush1.bf16.msra.mxu0 %v2165
  %2349 = vmatprep.subr.bf16.mxu0 %v2162
  %2350 = vmatpush1.bf16.msra.mxu0 %v2161
  %2351 = vmatprep.subr.bf16.mxu0 %v2158
  %2352 = vmatpush1.bf16.msra.mxu0 %v2157
  %2353 = vmatprep.subr.bf16.mxu0 0
  %2354 = vmatpush2.bf16.msra.mxu0 0
  %2355 = vmatprep.subr.bf16.mxu0 0
  %2356 = vmatpush2.bf16.msra.mxu0 0
  %2357 = vmatprep.subr.bf16.mxu0 0
  %2358 = vmatpush2.bf16.msra.mxu0 0
  %2359 = vmatprep.subr.bf16.mxu0 0
  %2360 = vmatpush2.bf16.msra.mxu0 0
  %2361 = vmatprep.subr.bf16.mxu0 0
  %2362 = vmatpush2.bf16.msra.mxu0 0
  %2363 = vmatprep.subr.bf16.mxu0 0
  %2364 = vmatpush2.bf16.msra.mxu0 0
  %2365 = vmatprep.subr.bf16.mxu0 0
  %2366 = vmatpush2.bf16.msra.mxu0 0
  %2367 = vmatprep.subr.bf16.mxu0 0
  %2368 = vmatpush2.bf16.msra.mxu0 0
  %2369 = vmatprep.mubr.bf16.mxu0 0
  %2370 = vmatmul.mubr.bf16.gmra.mxu0 %v2331
  %v2371 = vpop.f32.mrf.mxu0
  %v2372 = vadd.f32 0.0, %v2371
  %v2373 = vpop.f32.mrf.mxu0
  %v2374 = vadd.f32 0.0, %v2373
  %v2375 = vpop.f32.mrf.mxu0
  %v2376 = vpop.f32.mrf.mxu0
  %2377 = vdwg.mxu0
  %2378 = vmatprep.subr.bf16.mxu0 %v2188
  %2379 = vmatpush1.bf16.msra.mxu0 %v2187
  %2380 = vmatprep.subr.bf16.mxu0 %v2184
  %2381 = vmatpush1.bf16.msra.mxu0 %v2183
  %2382 = vmatprep.subr.bf16.mxu0 %v2180
  %2383 = vmatpush1.bf16.msra.mxu0 %v2179
  %2384 = vmatprep.subr.bf16.mxu0 %v2176
  %2385 = vmatpush1.bf16.msra.mxu0 %v2175
  %2386 = vmatprep.subr.bf16.mxu0 %v2172
  %2387 = vmatpush1.bf16.msra.mxu0 %v2171
  %2388 = vmatprep.subr.bf16.mxu0 %v2168
  %2389 = vmatpush1.bf16.msra.mxu0 %v2167
  %2390 = vmatprep.subr.bf16.mxu0 %v2164
  %2391 = vmatpush1.bf16.msra.mxu0 %v2163
  %2392 = vmatprep.subr.bf16.mxu0 %v2160
  %2393 = vmatpush1.bf16.msra.mxu0 %v2159
  %2394 = vmatprep.subr.bf16.mxu0 0
  %2395 = vmatpush2.bf16.msra.mxu0 0
  %2396 = vmatprep.subr.bf16.mxu0 0
  %2397 = vmatpush2.bf16.msra.mxu0 0
  %2398 = vmatprep.subr.bf16.mxu0 0
  %2399 = vmatpush2.bf16.msra.mxu0 0
  %2400 = vmatprep.subr.bf16.mxu0 0
  %2401 = vmatpush2.bf16.msra.mxu0 0
  %2402 = vmatprep.subr.bf16.mxu0 0
  %2403 = vmatpush2.bf16.msra.mxu0 0
  %2404 = vmatprep.subr.bf16.mxu0 0
  %2405 = vmatpush2.bf16.msra.mxu0 0
  %2406 = vmatprep.subr.bf16.mxu0 0
  %2407 = vmatpush2.bf16.msra.mxu0 0
  %2408 = vmatprep.subr.bf16.mxu0 0
  %2409 = vmatpush2.bf16.msra.mxu0 0
  %2410 = vmatprep.mubr.bf16.mxu0 0
  %2411 = vmatmul.mubr.bf16.gmra.mxu0 %v2331
  %v2412 = vpop.f32.mrf.mxu0
  %v2413 = vadd.f32 0.0, %v2412
  %v2414 = vpop.f32.mrf.mxu0
  %v2415 = vadd.f32 0.0, %v2414
  %v2416 = vpop.f32.mrf.mxu0
  %v2417 = vpop.f32.mrf.mxu0
  %2418 = vdwg.mxu0
  %v2419 = vadd.f32 %v2333, %v2372
  %v2420 = vadd.f32 %v2334, %v2374
  %v2421 = vadd.f32 %v2335, %v2413
  %v2422 = vadd.f32 %v2336, %v2415
  %v2423 = vxor.u32 %v2419, 2147483648
  %v2424 = vmul.f32 %v2423, 1.442695
  %v2425 = vpow.pop %v2424
  %v2426 = vadd.f32 %v2425, 1.0
  %v2427 = vrcp.pop %v2426
  %v2428 = vmul.f32 1.0, %v2427
  %v2429 = vxor.u32 %v2420, 2147483648
  %v2430 = vmul.f32 %v2429, 1.442695
  %v2431 = vpow.pop %v2430
  %v2432 = vadd.f32 %v2431, 1.0
  %v2433 = vrcp.pop %v2432
  %v2434 = vmul.f32 1.0, %v2433
  %v2435 = vtanh.pop %v2421
  %v2436 = vxor.u32 %v2422, 2147483648
  %v2437 = vmul.f32 %v2436, 1.442695
  %v2438 = vpow.pop %v2437
  %v2439 = vadd.f32 %v2438, 1.0
  %v2440 = vrcp.pop %v2439
  %v2441 = vmul.f32 1.0, %v2440
  %v2442 = vmul.f32 %v2434, %v2328
  %v2443 = vmul.f32 %v2428, %v2435
  %v2444 = vadd.f32 %v2442, %v2443
  %v2445 = vtanh.pop %v2444
  %v2446 = vmul.f32 %v2441, %v2445
  %v2447 = vpack.c.bf16 %v2446, %v2446
  %2448 = vst [vmem:[%s888] sm:$0xf] %v2447
  %v2449 = vld [vmem:[%s890] sm:$0xff]
  %v2450 = vld [vmem:[%s890 + $0x8] sm:$0xff]
  %v2451 = vld [vmem:[%s890 + $0x10] sm:$0xff]
  %v2452 = vld [vmem:[%s890 + $0x18] sm:$0xff]
  %2453 = vmatprep.subr.bf16.mxu0 %v2186
  %2454 = vmatpush1.bf16.msra.mxu0 %v2185
  %2455 = vmatprep.subr.bf16.mxu0 %v2182
  %2456 = vmatpush1.bf16.msra.mxu0 %v2181
  %2457 = vmatprep.subr.bf16.mxu0 %v2178
  %2458 = vmatpush1.bf16.msra.mxu0 %v2177
  %2459 = vmatprep.subr.bf16.mxu0 %v2174
  %2460 = vmatpush1.bf16.msra.mxu0 %v2173
  %2461 = vmatprep.subr.bf16.mxu0 %v2170
  %2462 = vmatpush1.bf16.msra.mxu0 %v2169
  %2463 = vmatprep.subr.bf16.mxu0 %v2166
  %2464 = vmatpush1.bf16.msra.mxu0 %v2165
  %2465 = vmatprep.subr.bf16.mxu0 %v2162
  %2466 = vmatpush1.bf16.msra.mxu0 %v2161
  %2467 = vmatprep.subr.bf16.mxu0 %v2158
  %2468 = vmatpush1.bf16.msra.mxu0 %v2157
  %2469 = vmatprep.subr.bf16.mxu0 0
  %2470 = vmatpush2.bf16.msra.mxu0 0
  %2471 = vmatprep.subr.bf16.mxu0 0
  %2472 = vmatpush2.bf16.msra.mxu0 0
  %2473 = vmatprep.subr.bf16.mxu0 0
  %2474 = vmatpush2.bf16.msra.mxu0 0
  %2475 = vmatprep.subr.bf16.mxu0 0
  %2476 = vmatpush2.bf16.msra.mxu0 0
  %2477 = vmatprep.subr.bf16.mxu0 0
  %2478 = vmatpush2.bf16.msra.mxu0 0
  %2479 = vmatprep.subr.bf16.mxu0 0
  %2480 = vmatpush2.bf16.msra.mxu0 0
  %2481 = vmatprep.subr.bf16.mxu0 0
  %2482 = vmatpush2.bf16.msra.mxu0 0
  %2483 = vmatprep.subr.bf16.mxu0 0
  %2484 = vmatpush2.bf16.msra.mxu0 0
  %2485 = vmatprep.mubr.bf16.mxu0 0
  %2486 = vmatmul.mubr.bf16.gmra.mxu0 %v2447
  %v2487 = vpop.f32.mrf.mxu0
  %v2488 = vadd.f32 0.0, %v2487
  %v2489 = vpop.f32.mrf.mxu0
  %v2490 = vadd.f32 0.0, %v2489
  %v2491 = vpop.f32.mrf.mxu0
  %v2492 = vpop.f32.mrf.mxu0
  %2493 = vdwg.mxu0
  %2494 = vmatprep.subr.bf16.mxu0 %v2188
  %2495 = vmatpush1.bf16.msra.mxu0 %v2187
  %2496 = vmatprep.subr.bf16.mxu0 %v2184
  %2497 = vmatpush1.bf16.msra.mxu0 %v2183
  %2498 = vmatprep.subr.bf16.mxu0 %v2180
  %2499 = vmatpush1.bf16.msra.mxu0 %v2179
  %2500 = vmatprep.subr.bf16.mxu0 %v2176
  %2501 = vmatpush1.bf16.msra.mxu0 %v2175
  %2502 = vmatprep.subr.bf16.mxu0 %v2172
  %2503 = vmatpush1.bf16.msra.mxu0 %v2171
  %2504 = vmatprep.subr.bf16.mxu0 %v2168
  %2505 = vmatpush1.bf16.msra.mxu0 %v2167
  %2506 = vmatprep.subr.bf16.mxu0 %v2164
  %2507 = vmatpush1.bf16.msra.mxu0 %v2163
  %2508 = vmatprep.subr.bf16.mxu0 %v2160
  %2509 = vmatpush1.bf16.msra.mxu0 %v2159
  %2510 = vmatprep.subr.bf16.mxu0 0
  %2511 = vmatpush2.bf16.msra.mxu0 0
  %2512 = vmatprep.subr.bf16.mxu0 0
  %2513 = vmatpush2.bf16.msra.mxu0 0
  %2514 = vmatprep.subr.bf16.mxu0 0
  %2515 = vmatpush2.bf16.msra.mxu0 0
  %2516 = vmatprep.subr.bf16.mxu0 0
  %2517 = vmatpush2.bf16.msra.mxu0 0
  %2518 = vmatprep.subr.bf16.mxu0 0
  %2519 = vmatpush2.bf16.msra.mxu0 0
  %2520 = vmatprep.subr.bf16.mxu0 0
  %2521 = vmatpush2.bf16.msra.mxu0 0
  %2522 = vmatprep.subr.bf16.mxu0 0
  %2523 = vmatpush2.bf16.msra.mxu0 0
  %2524 = vmatprep.subr.bf16.mxu0 0
  %2525 = vmatpush2.bf16.msra.mxu0 0
  %2526 = vmatprep.mubr.bf16.mxu0 0
  %2527 = vmatmul.mubr.bf16.gmra.mxu0 %v2447
  %v2528 = vpop.f32.mrf.mxu0
  %v2529 = vadd.f32 0.0, %v2528
  %v2530 = vpop.f32.mrf.mxu0
  %v2531 = vadd.f32 0.0, %v2530
  %v2532 = vpop.f32.mrf.mxu0
  %v2533 = vpop.f32.mrf.mxu0
  %2534 = vdwg.mxu0
  %v2535 = vadd.f32 %v2449, %v2488
  %v2536 = vadd.f32 %v2450, %v2490
  %v2537 = vadd.f32 %v2451, %v2529
  %v2538 = vadd.f32 %v2452, %v2531
  %v2539 = vxor.u32 %v2535, 2147483648
  %v2540 = vmul.f32 %v2539, 1.442695
  %v2541 = vpow.pop %v2540
  %v2542 = vadd.f32 %v2541, 1.0
  %v2543 = vrcp.pop %v2542
  %v2544 = vmul.f32 1.0, %v2543
  %v2545 = vxor.u32 %v2536, 2147483648
  %v2546 = vmul.f32 %v2545, 1.442695
  %v2547 = vpow.pop %v2546
  %v2548 = vadd.f32 %v2547, 1.0
  %v2549 = vrcp.pop %v2548
  %v2550 = vmul.f32 1.0, %v2549
  %v2551 = vtanh.pop %v2537
  %v2552 = vxor.u32 %v2538, 2147483648
  %v2553 = vmul.f32 %v2552, 1.442695
  %v2554 = vpow.pop %v2553
  %v2555 = vadd.f32 %v2554, 1.0
  %v2556 = vrcp.pop %v2555
  %v2557 = vmul.f32 1.0, %v2556
  %v2558 = vmul.f32 %v2550, %v2444
  %v2559 = vmul.f32 %v2544, %v2551
  %v2560 = vadd.f32 %v2558, %v2559
  %v2561 = vtanh.pop %v2560
  %v2562 = vmul.f32 %v2557, %v2561
  %v2563 = vpack.c.bf16 %v2562, %v2562
  %2564 = vst [vmem:[%s1006] sm:$0xf] %v2563
  %v2565 = vld [vmem:[%s1008] sm:$0xff]
  %v2566 = vld [vmem:[%s1008 + $0x8] sm:$0xff]
  %v2567 = vld [vmem:[%s1008 + $0x10] sm:$0xff]
  %v2568 = vld [vmem:[%s1008 + $0x18] sm:$0xff]
  %2569 = vmatprep.subr.bf16.mxu0 %v2186
  %2570 = vmatpush1.bf16.msra.mxu0 %v2185
  %2571 = vmatprep.subr.bf16.mxu0 %v2182
  %2572 = vmatpush1.bf16.msra.mxu0 %v2181
  %2573 = vmatprep.subr.bf16.mxu0 %v2178
  %2574 = vmatpush1.bf16.msra.mxu0 %v2177
  %2575 = vmatprep.subr.bf16.mxu0 %v2174
  %2576 = vmatpush1.bf16.msra.mxu0 %v2173
  %2577 = vmatprep.subr.bf16.mxu0 %v2170
  %2578 = vmatpush1.bf16.msra.mxu0 %v2169
  %2579 = vmatprep.subr.bf16.mxu0 %v2166
  %2580 = vmatpush1.bf16.msra.mxu0 %v2165
  %2581 = vmatprep.subr.bf16.mxu0 %v2162
  %2582 = vmatpush1.bf16.msra.mxu0 %v2161
  %2583 = vmatprep.subr.bf16.mxu0 %v2158
  %2584 = vmatpush1.bf16.msra.mxu0 %v2157
  %2585 = vmatprep.subr.bf16.mxu0 0
  %2586 = vmatpush2.bf16.msra.mxu0 0
  %2587 = vmatprep.subr.bf16.mxu0 0
  %2588 = vmatpush2.bf16.msra.mxu0 0
  %2589 = vmatprep.subr.bf16.mxu0 0
  %2590 = vmatpush2.bf16.msra.mxu0 0
  %2591 = vmatprep.subr.bf16.mxu0 0
  %2592 = vmatpush2.bf16.msra.mxu0 0
  %2593 = vmatprep.subr.bf16.mxu0 0
  %2594 = vmatpush2.bf16.msra.mxu0 0
  %2595 = vmatprep.subr.bf16.mxu0 0
  %2596 = vmatpush2.bf16.msra.mxu0 0
  %2597 = vmatprep.subr.bf16.mxu0 0
  %2598 = vmatpush2.bf16.msra.mxu0 0
  %2599 = vmatprep.subr.bf16.mxu0 0
  %2600 = vmatpush2.bf16.msra.mxu0 0
  %2601 = vmatprep.mubr.bf16.mxu0 0
  %2602 = vmatmul.mubr.bf16.gmra.mxu0 %v2563
  %v2603 = vpop.f32.mrf.mxu0
  %v2604 = vadd.f32 0.0, %v2603
  %v2605 = vpop.f32.mrf.mxu0
  %v2606 = vadd.f32 0.0, %v2605
  %v2607 = vpop.f32.mrf.mxu0
  %v2608 = vpop.f32.mrf.mxu0
  %2609 = vdwg.mxu0
  %2610 = vmatprep.subr.bf16.mxu0 %v2188
  %2611 = vmatpush1.bf16.msra.mxu0 %v2187
  %2612 = vmatprep.subr.bf16.mxu0 %v2184
  %2613 = vmatpush1.bf16.msra.mxu0 %v2183
  %2614 = vmatprep.subr.bf16.mxu0 %v2180
  %2615 = vmatpush1.bf16.msra.mxu0 %v2179
  %2616 = vmatprep.subr.bf16.mxu0 %v2176
  %2617 = vmatpush1.bf16.msra.mxu0 %v2175
  %2618 = vmatprep.subr.bf16.mxu0 %v2172
  %2619 = vmatpush1.bf16.msra.mxu0 %v2171
  %2620 = vmatprep.subr.bf16.mxu0 %v2168
  %2621 = vmatpush1.bf16.msra.mxu0 %v2167
  %2622 = vmatprep.subr.bf16.mxu0 %v2164
  %2623 = vmatpush1.bf16.msra.mxu0 %v2163
  %2624 = vmatprep.subr.bf16.mxu0 %v2160
  %2625 = vmatpush1.bf16.msra.mxu0 %v2159
  %2626 = vmatprep.subr.bf16.mxu0 0
  %2627 = vmatpush2.bf16.msra.mxu0 0
  %2628 = vmatprep.subr.bf16.mxu0 0
  %2629 = vmatpush2.bf16.msra.mxu0 0
  %2630 = vmatprep.subr.bf16.mxu0 0
  %2631 = vmatpush2.bf16.msra.mxu0 0
  %2632 = vmatprep.subr.bf16.mxu0 0
  %2633 = vmatpush2.bf16.msra.mxu0 0
  %2634 = vmatprep.subr.bf16.mxu0 0
  %2635 = vmatpush2.bf16.msra.mxu0 0
  %2636 = vmatprep.subr.bf16.mxu0 0
  %2637 = vmatpush2.bf16.msra.mxu0 0
  %2638 = vmatprep.subr.bf16.mxu0 0
  %2639 = vmatpush2.bf16.msra.mxu0 0
  %2640 = vmatprep.subr.bf16.mxu0 0
  %2641 = vmatpush2.bf16.msra.mxu0 0
  %2642 = vmatprep.mubr.bf16.mxu0 0
  %2643 = vmatmul.mubr.bf16.gmra.mxu0 %v2563
  %v2644 = vpop.f32.mrf.mxu0
  %v2645 = vadd.f32 0.0, %v2644
  %v2646 = vpop.f32.mrf.mxu0
  %v2647 = vadd.f32 0.0, %v2646
  %v2648 = vpop.f32.mrf.mxu0
  %v2649 = vpop.f32.mrf.mxu0
  %2650 = vdwg.mxu0
  %v2651 = vadd.f32 %v2565, %v2604
  %v2652 = vadd.f32 %v2566, %v2606
  %v2653 = vadd.f32 %v2567, %v2645
  %v2654 = vadd.f32 %v2568, %v2647
  %v2655 = vxor.u32 %v2651, 2147483648
  %v2656 = vmul.f32 %v2655, 1.442695
  %v2657 = vpow.pop %v2656
  %v2658 = vadd.f32 %v2657, 1.0
  %v2659 = vrcp.pop %v2658
  %v2660 = vmul.f32 1.0, %v2659
  %v2661 = vxor.u32 %v2652, 2147483648
  %v2662 = vmul.f32 %v2661, 1.442695
  %v2663 = vpow.pop %v2662
  %v2664 = vadd.f32 %v2663, 1.0
  %v2665 = vrcp.pop %v2664
  %v2666 = vmul.f32 1.0, %v2665
  %v2667 = vtanh.pop %v2653
  %v2668 = vxor.u32 %v2654, 2147483648
  %v2669 = vmul.f32 %v2668, 1.442695
  %v2670 = vpow.pop %v2669
  %v2671 = vadd.f32 %v2670, 1.0
  %v2672 = vrcp.pop %v2671
  %v2673 = vmul.f32 1.0, %v2672
  %v2674 = vmul.f32 %v2666, %v2560
  %v2675 = vmul.f32 %v2660, %v2667
  %v2676 = vadd.f32 %v2674, %v2675
  %v2677 = vtanh.pop %v2676
  %v2678 = vmul.f32 %v2673, %v2677
  %v2679 = vpack.c.bf16 %v2678, %v2678
  %2680 = vst [vmem:[%s1124] sm:$0xf] %v2679
  %v2681 = vld [vmem:[%s1126] sm:$0xff]
  %v2682 = vld [vmem:[%s1126 + $0x8] sm:$0xff]
  %v2683 = vld [vmem:[%s1126 + $0x10] sm:$0xff]
  %v2684 = vld [vmem:[%s1126 + $0x18] sm:$0xff]
  %2685 = vmatprep.subr.bf16.mxu0 %v2186
  %2686 = vmatpush1.bf16.msra.mxu0 %v2185
  %2687 = vmatprep.subr.bf16.mxu0 %v2182
  %2688 = vmatpush1.bf16.msra.mxu0 %v2181
  %2689 = vmatprep.subr.bf16.mxu0 %v2178
  %2690 = vmatpush1.bf16.msra.mxu0 %v2177
  %2691 = vmatprep.subr.bf16.mxu0 %v2174
  %2692 = vmatpush1.bf16.msra.mxu0 %v2173
  %2693 = vmatprep.subr.bf16.mxu0 %v2170
  %2694 = vmatpush1.bf16.msra.mxu0 %v2169
  %2695 = vmatprep.subr.bf16.mxu0 %v2166
  %2696 = vmatpush1.bf16.msra.mxu0 %v2165
  %2697 = vmatprep.subr.bf16.mxu0 %v2162
  %2698 = vmatpush1.bf16.msra.mxu0 %v2161
  %2699 = vmatprep.subr.bf16.mxu0 %v2158
  %2700 = vmatpush1.bf16.msra.mxu0 %v2157
  %2701 = vmatprep.subr.bf16.mxu0 0
  %2702 = vmatpush2.bf16.msra.mxu0 0
  %2703 = vmatprep.subr.bf16.mxu0 0
  %2704 = vmatpush2.bf16.msra.mxu0 0
  %2705 = vmatprep.subr.bf16.mxu0 0
  %2706 = vmatpush2.bf16.msra.mxu0 0
  %2707 = vmatprep.subr.bf16.mxu0 0
  %2708 = vmatpush2.bf16.msra.mxu0 0
  %2709 = vmatprep.subr.bf16.mxu0 0
  %2710 = vmatpush2.bf16.msra.mxu0 0
  %2711 = vmatprep.subr.bf16.mxu0 0
  %2712 = vmatpush2.bf16.msra.mxu0 0
  %2713 = vmatprep.subr.bf16.mxu0 0
  %2714 = vmatpush2.bf16.msra.mxu0 0
  %2715 = vmatprep.subr.bf16.mxu0 0
  %2716 = vmatpush2.bf16.msra.mxu0 0
  %2717 = vmatprep.mubr.bf16.mxu0 0
  %2718 = vmatmul.mubr.bf16.gmra.mxu0 %v2679
  %v2719 = vpop.f32.mrf.mxu0
  %v2720 = vadd.f32 0.0, %v2719
  %v2721 = vpop.f32.mrf.mxu0
  %v2722 = vadd.f32 0.0, %v2721
  %v2723 = vpop.f32.mrf.mxu0
  %v2724 = vpop.f32.mrf.mxu0
  %2725 = vdwg.mxu0
  %2726 = vmatprep.subr.bf16.mxu0 %v2188
  %2727 = vmatpush1.bf16.msra.mxu0 %v2187
  %2728 = vmatprep.subr.bf16.mxu0 %v2184
  %2729 = vmatpush1.bf16.msra.mxu0 %v2183
  %2730 = vmatprep.subr.bf16.mxu0 %v2180
  %2731 = vmatpush1.bf16.msra.mxu0 %v2179
  %2732 = vmatprep.subr.bf16.mxu0 %v2176
  %2733 = vmatpush1.bf16.msra.mxu0 %v2175
  %2734 = vmatprep.subr.bf16.mxu0 %v2172
  %2735 = vmatpush1.bf16.msra.mxu0 %v2171
  %2736 = vmatprep.subr.bf16.mxu0 %v2168
  %2737 = vmatpush1.bf16.msra.mxu0 %v2167
  %2738 = vmatprep.subr.bf16.mxu0 %v2164
  %2739 = vmatpush1.bf16.msra.mxu0 %v2163
  %2740 = vmatprep.subr.bf16.mxu0 %v2160
  %2741 = vmatpush1.bf16.msra.mxu0 %v2159
  %2742 = vmatprep.subr.bf16.mxu0 0
  %2743 = vmatpush2.bf16.msra.mxu0 0
  %2744 = vmatprep.subr.bf16.mxu0 0
  %2745 = vmatpush2.bf16.msra.mxu0 0
  %2746 = vmatprep.subr.bf16.mxu0 0
  %2747 = vmatpush2.bf16.msra.mxu0 0
  %2748 = vmatprep.subr.bf16.mxu0 0
  %2749 = vmatpush2.bf16.msra.mxu0 0
  %2750 = vmatprep.subr.bf16.mxu0 0
  %2751 = vmatpush2.bf16.msra.mxu0 0
  %2752 = vmatprep.subr.bf16.mxu0 0
  %2753 = vmatpush2.bf16.msra.mxu0 0
  %2754 = vmatprep.subr.bf16.mxu0 0
  %2755 = vmatpush2.bf16.msra.mxu0 0
  %2756 = vmatprep.subr.bf16.mxu0 0
  %2757 = vmatpush2.bf16.msra.mxu0 0
  %2758 = vmatprep.mubr.bf16.mxu0 0
  %2759 = vmatmul.mubr.bf16.gmra.mxu0 %v2679
  %v2760 = vpop.f32.mrf.mxu0
  %v2761 = vadd.f32 0.0, %v2760
  %v2762 = vpop.f32.mrf.mxu0
  %v2763 = vadd.f32 0.0, %v2762
  %v2764 = vpop.f32.mrf.mxu0
  %v2765 = vpop.f32.mrf.mxu0
  %2766 = vdwg.mxu0
  %v2767 = vadd.f32 %v2681, %v2720
  %v2768 = vadd.f32 %v2682, %v2722
  %v2769 = vadd.f32 %v2683, %v2761
  %v2770 = vadd.f32 %v2684, %v2763
  %v2771 = vxor.u32 %v2767, 2147483648
  %v2772 = vmul.f32 %v2771, 1.442695
  %v2773 = vpow.pop %v2772
  %v2774 = vadd.f32 %v2773, 1.0
  %v2775 = vrcp.pop %v2774
  %v2776 = vmul.f32 1.0, %v2775
  %v2777 = vxor.u32 %v2768, 2147483648
  %v2778 = vmul.f32 %v2777, 1.442695
  %v2779 = vpow.pop %v2778
  %v2780 = vadd.f32 %v2779, 1.0
  %v2781 = vrcp.pop %v2780
  %v2782 = vmul.f32 1.0, %v2781
  %v2783 = vtanh.pop %v2769
  %v2784 = vxor.u32 %v2770, 2147483648
  %v2785 = vmul.f32 %v2784, 1.442695
  %v2786 = vpow.pop %v2785
  %v2787 = vadd.f32 %v2786, 1.0
  %v2788 = vrcp.pop %v2787
  %v2789 = vmul.f32 1.0, %v2788
  %v2790 = vmul.f32 %v2782, %v2676
  %v2791 = vmul.f32 %v2776, %v2783
  %v2792 = vadd.f32 %v2790, %v2791
  %v2793 = vtanh.pop %v2792
  %v2794 = vmul.f32 %v2789, %v2793
  %v2795 = vpack.c.bf16 %v2794, %v2794
  %2796 = vst [vmem:[%s1242] sm:$0xf] %v2795
  %v2797 = vld [vmem:[%s1244] sm:$0xff]
  %v2798 = vld [vmem:[%s1244 + $0x8] sm:$0xff]
  %v2799 = vld [vmem:[%s1244 + $0x10] sm:$0xff]
  %v2800 = vld [vmem:[%s1244 + $0x18] sm:$0xff]
  %2801 = vmatprep.subr.bf16.mxu0 %v2186
  %2802 = vmatpush1.bf16.msra.mxu0 %v2185
  %2803 = vmatprep.subr.bf16.mxu0 %v2182
  %2804 = vmatpush1.bf16.msra.mxu0 %v2181
  %2805 = vmatprep.subr.bf16.mxu0 %v2178
  %2806 = vmatpush1.bf16.msra.mxu0 %v2177
  %2807 = vmatprep.subr.bf16.mxu0 %v2174
  %2808 = vmatpush1.bf16.msra.mxu0 %v2173
  %2809 = vmatprep.subr.bf16.mxu0 %v2170
  %2810 = vmatpush1.bf16.msra.mxu0 %v2169
  %2811 = vmatprep.subr.bf16.mxu0 %v2166
  %2812 = vmatpush1.bf16.msra.mxu0 %v2165
  %2813 = vmatprep.subr.bf16.mxu0 %v2162
  %2814 = vmatpush1.bf16.msra.mxu0 %v2161
  %2815 = vmatprep.subr.bf16.mxu0 %v2158
  %2816 = vmatpush1.bf16.msra.mxu0 %v2157
  %2817 = vmatprep.subr.bf16.mxu0 0
  %2818 = vmatpush2.bf16.msra.mxu0 0
  %2819 = vmatprep.subr.bf16.mxu0 0
  %2820 = vmatpush2.bf16.msra.mxu0 0
  %2821 = vmatprep.subr.bf16.mxu0 0
  %2822 = vmatpush2.bf16.msra.mxu0 0
  %2823 = vmatprep.subr.bf16.mxu0 0
  %2824 = vmatpush2.bf16.msra.mxu0 0
  %2825 = vmatprep.subr.bf16.mxu0 0
  %2826 = vmatpush2.bf16.msra.mxu0 0
  %2827 = vmatprep.subr.bf16.mxu0 0
  %2828 = vmatpush2.bf16.msra.mxu0 0
  %2829 = vmatprep.subr.bf16.mxu0 0
  %2830 = vmatpush2.bf16.msra.mxu0 0
  %2831 = vmatprep.subr.bf16.mxu0 0
  %2832 = vmatpush2.bf16.msra.mxu0 0
  %2833 = vmatprep.mubr.bf16.mxu0 0
  %2834 = vmatmul.mubr.bf16.gmra.mxu0 %v2795
  %v2835 = vpop.f32.mrf.mxu0
  %v2836 = vadd.f32 0.0, %v2835
  %v2837 = vpop.f32.mrf.mxu0
  %v2838 = vadd.f32 0.0, %v2837
  %v2839 = vpop.f32.mrf.mxu0
  %v2840 = vpop.f32.mrf.mxu0
  %2841 = vdwg.mxu0
  %2842 = vmatprep.subr.bf16.mxu0 %v2188
  %2843 = vmatpush1.bf16.msra.mxu0 %v2187
  %2844 = vmatprep.subr.bf16.mxu0 %v2184
  %2845 = vmatpush1.bf16.msra.mxu0 %v2183
  %2846 = vmatprep.subr.bf16.mxu0 %v2180
  %2847 = vmatpush1.bf16.msra.mxu0 %v2179
  %2848 = vmatprep.subr.bf16.mxu0 %v2176
  %2849 = vmatpush1.bf16.msra.mxu0 %v2175
  %2850 = vmatprep.subr.bf16.mxu0 %v2172
  %2851 = vmatpush1.bf16.msra.mxu0 %v2171
  %2852 = vmatprep.subr.bf16.mxu0 %v2168
  %2853 = vmatpush1.bf16.msra.mxu0 %v2167
  %2854 = vmatprep.subr.bf16.mxu0 %v2164
  %2855 = vmatpush1.bf16.msra.mxu0 %v2163
  %2856 = vmatprep.subr.bf16.mxu0 %v2160
  %2857 = vmatpush1.bf16.msra.mxu0 %v2159
  %2858 = vmatprep.subr.bf16.mxu0 0
  %2859 = vmatpush2.bf16.msra.mxu0 0
  %2860 = vmatprep.subr.bf16.mxu0 0
  %2861 = vmatpush2.bf16.msra.mxu0 0
  %2862 = vmatprep.subr.bf16.mxu0 0
  %2863 = vmatpush2.bf16.msra.mxu0 0
  %2864 = vmatprep.subr.bf16.mxu0 0
  %2865 = vmatpush2.bf16.msra.mxu0 0
  %2866 = vmatprep.subr.bf16.mxu0 0
  %2867 = vmatpush2.bf16.msra.mxu0 0
  %2868 = vmatprep.subr.bf16.mxu0 0
  %2869 = vmatpush2.bf16.msra.mxu0 0
  %2870 = vmatprep.subr.bf16.mxu0 0
  %2871 = vmatpush2.bf16.msra.mxu0 0
  %2872 = vmatprep.subr.bf16.mxu0 0
  %2873 = vmatpush2.bf16.msra.mxu0 0
  %2874 = vmatprep.mubr.bf16.mxu0 0
  %2875 = vmatmul.mubr.bf16.gmra.mxu0 %v2795
  %v2876 = vpop.f32.mrf.mxu0
  %v2877 = vadd.f32 0.0, %v2876
  %v2878 = vpop.f32.mrf.mxu0
  %v2879 = vadd.f32 0.0, %v2878
  %v2880 = vpop.f32.mrf.mxu0
  %v2881 = vpop.f32.mrf.mxu0
  %2882 = vdwg.mxu0
  %v2883 = vadd.f32 %v2797, %v2836
  %v2884 = vadd.f32 %v2798, %v2838
  %v2885 = vadd.f32 %v2799, %v2877
  %v2886 = vadd.f32 %v2800, %v2879
  %v2887 = vxor.u32 %v2883, 2147483648
  %v2888 = vmul.f32 %v2887, 1.442695
  %v2889 = vpow.pop %v2888
  %v2890 = vadd.f32 %v2889, 1.0
  %v2891 = vrcp.pop %v2890
  %v2892 = vmul.f32 1.0, %v2891
  %v2893 = vxor.u32 %v2884, 2147483648
  %v2894 = vmul.f32 %v2893, 1.442695
  %v2895 = vpow.pop %v2894
  %v2896 = vadd.f32 %v2895, 1.0
  %v2897 = vrcp.pop %v2896
  %v2898 = vmul.f32 1.0, %v2897
  %v2899 = vtanh.pop %v2885
  %v2900 = vxor.u32 %v2886, 2147483648
  %v2901 = vmul.f32 %v2900, 1.442695
  %v2902 = vpow.pop %v2901
  %v2903 = vadd.f32 %v2902, 1.0
  %v2904 = vrcp.pop %v2903
  %v2905 = vmul.f32 1.0, %v2904
  %v2906 = vmul.f32 %v2898, %v2792
  %v2907 = vmul.f32 %v2892, %v2899
  %v2908 = vadd.f32 %v2906, %v2907
  %v2909 = vtanh.pop %v2908
  %v2910 = vmul.f32 %v2905, %v2909
  %v2911 = vpack.c.bf16 %v2910, %v2910
  %2912 = vst [vmem:[%s1360] sm:$0xf] %v2911
  %v2913 = vld [vmem:[%s1362] sm:$0xff]
  %v2914 = vld [vmem:[%s1362 + $0x8] sm:$0xff]
  %v2915 = vld [vmem:[%s1362 + $0x10] sm:$0xff]
  %v2916 = vld [vmem:[%s1362 + $0x18] sm:$0xff]
  %2917 = vmatprep.subr.bf16.mxu0 %v2186
  %2918 = vmatpush1.bf16.msra.mxu0 %v2185
  %2919 = vmatprep.subr.bf16.mxu0 %v2182
  %2920 = vmatpush1.bf16.msra.mxu0 %v2181
  %2921 = vmatprep.subr.bf16.mxu0 %v2178
  %2922 = vmatpush1.bf16.msra.mxu0 %v2177
  %2923 = vmatprep.subr.bf16.mxu0 %v2174
  %2924 = vmatpush1.bf16.msra.mxu0 %v2173
  %2925 = vmatprep.subr.bf16.mxu0 %v2170
  %2926 = vmatpush1.bf16.msra.mxu0 %v2169
  %2927 = vmatprep.subr.bf16.mxu0 %v2166
  %2928 = vmatpush1.bf16.msra.mxu0 %v2165
  %2929 = vmatprep.subr.bf16.mxu0 %v2162
  %2930 = vmatpush1.bf16.msra.mxu0 %v2161
  %2931 = vmatprep.subr.bf16.mxu0 %v2158
  %2932 = vmatpush1.bf16.msra.mxu0 %v2157
  %2933 = vmatprep.subr.bf16.mxu0 0
  %2934 = vmatpush2.bf16.msra.mxu0 0
  %2935 = vmatprep.subr.bf16.mxu0 0
  %2936 = vmatpush2.bf16.msra.mxu0 0
  %2937 = vmatprep.subr.bf16.mxu0 0
  %2938 = vmatpush2.bf16.msra.mxu0 0
  %2939 = vmatprep.subr.bf16.mxu0 0
  %2940 = vmatpush2.bf16.msra.mxu0 0
  %2941 = vmatprep.subr.bf16.mxu0 0
  %2942 = vmatpush2.bf16.msra.mxu0 0
  %2943 = vmatprep.subr.bf16.mxu0 0
  %2944 = vmatpush2.bf16.msra.mxu0 0
  %2945 = vmatprep.subr.bf16.mxu0 0
  %2946 = vmatpush2.bf16.msra.mxu0 0
  %2947 = vmatprep.subr.bf16.mxu0 0
  %2948 = vmatpush2.bf16.msra.mxu0 0
  %2949 = vmatprep.mubr.bf16.mxu0 0
  %2950 = vmatmul.mubr.bf16.gmra.mxu0 %v2911
  %v2951 = vpop.f32.mrf.mxu0
  %v2952 = vadd.f32 0.0, %v2951
  %v2953 = vpop.f32.mrf.mxu0
  %v2954 = vadd.f32 0.0, %v2953
  %v2955 = vpop.f32.mrf.mxu0
  %v2956 = vpop.f32.mrf.mxu0
  %2957 = vdwg.mxu0
  %2958 = vmatprep.subr.bf16.mxu0 %v2188
  %2959 = vmatpush1.bf16.msra.mxu0 %v2187
  %2960 = vmatprep.subr.bf16.mxu0 %v2184
  %2961 = vmatpush1.bf16.msra.mxu0 %v2183
  %2962 = vmatprep.subr.bf16.mxu0 %v2180
  %2963 = vmatpush1.bf16.msra.mxu0 %v2179
  %2964 = vmatprep.subr.bf16.mxu0 %v2176
  %2965 = vmatpush1.bf16.msra.mxu0 %v2175
  %2966 = vmatprep.subr.bf16.mxu0 %v2172
  %2967 = vmatpush1.bf16.msra.mxu0 %v2171
  %2968 = vmatprep.subr.bf16.mxu0 %v2168
  %2969 = vmatpush1.bf16.msra.mxu0 %v2167
  %2970 = vmatprep.subr.bf16.mxu0 %v2164
  %2971 = vmatpush1.bf16.msra.mxu0 %v2163
  %2972 = vmatprep.subr.bf16.mxu0 %v2160
  %2973 = vmatpush1.bf16.msra.mxu0 %v2159
  %2974 = vmatprep.subr.bf16.mxu0 0
  %2975 = vmatpush2.bf16.msra.mxu0 0
  %2976 = vmatprep.subr.bf16.mxu0 0
  %2977 = vmatpush2.bf16.msra.mxu0 0
  %2978 = vmatprep.subr.bf16.mxu0 0
  %2979 = vmatpush2.bf16.msra.mxu0 0
  %2980 = vmatprep.subr.bf16.mxu0 0
  %2981 = vmatpush2.bf16.msra.mxu0 0
  %2982 = vmatprep.subr.bf16.mxu0 0
  %2983 = vmatpush2.bf16.msra.mxu0 0
  %2984 = vmatprep.subr.bf16.mxu0 0
  %2985 = vmatpush2.bf16.msra.mxu0 0
  %2986 = vmatprep.subr.bf16.mxu0 0
  %2987 = vmatpush2.bf16.msra.mxu0 0
  %2988 = vmatprep.subr.bf16.mxu0 0
  %2989 = vmatpush2.bf16.msra.mxu0 0
  %2990 = vmatprep.mubr.bf16.mxu0 0
  %2991 = vmatmul.mubr.bf16.gmra.mxu0 %v2911
  %v2992 = vpop.f32.mrf.mxu0
  %v2993 = vadd.f32 0.0, %v2992
  %v2994 = vpop.f32.mrf.mxu0
  %v2995 = vadd.f32 0.0, %v2994
  %v2996 = vpop.f32.mrf.mxu0
  %v2997 = vpop.f32.mrf.mxu0
  %2998 = vdwg.mxu0
  %v2999 = vadd.f32 %v2913, %v2952
  %v3000 = vadd.f32 %v2914, %v2954
  %v3001 = vadd.f32 %v2915, %v2993
  %v3002 = vadd.f32 %v2916, %v2995
  %v3003 = vxor.u32 %v2999, 2147483648
  %v3004 = vmul.f32 %v3003, 1.442695
  %v3005 = vpow.pop %v3004
  %v3006 = vadd.f32 %v3005, 1.0
  %v3007 = vrcp.pop %v3006
  %v3008 = vmul.f32 1.0, %v3007
  %v3009 = vxor.u32 %v3000, 2147483648
  %v3010 = vmul.f32 %v3009, 1.442695
  %v3011 = vpow.pop %v3010
  %v3012 = vadd.f32 %v3011, 1.0
  %v3013 = vrcp.pop %v3012
  %v3014 = vmul.f32 1.0, %v3013
  %v3015 = vtanh.pop %v3001
  %v3016 = vxor.u32 %v3002, 2147483648
  %v3017 = vmul.f32 %v3016, 1.442695
  %v3018 = vpow.pop %v3017
  %v3019 = vadd.f32 %v3018, 1.0
  %v3020 = vrcp.pop %v3019
  %v3021 = vmul.f32 1.0, %v3020
  %v3022 = vmul.f32 %v3014, %v2908
  %v3023 = vmul.f32 %v3008, %v3015
  %v3024 = vadd.f32 %v3022, %v3023
  %v3025 = vtanh.pop %v3024
  %v3026 = vmul.f32 %v3021, %v3025
  %v3027 = vpack.c.bf16 %v3026, %v3026
  %3028 = vst [vmem:[%s1478] sm:$0xf] %v3027
  %v3029 = vld [vmem:[%s1480] sm:$0xff]
  %v3030 = vld [vmem:[%s1480 + $0x8] sm:$0xff]
  %v3031 = vld [vmem:[%s1480 + $0x10] sm:$0xff]
  %v3032 = vld [vmem:[%s1480 + $0x18] sm:$0xff]
  %3033 = vmatprep.subr.bf16.mxu0 %v2186
  %3034 = vmatpush1.bf16.msra.mxu0 %v2185
  %3035 = vmatprep.subr.bf16.mxu0 %v2182
  %3036 = vmatpush1.bf16.msra.mxu0 %v2181
  %3037 = vmatprep.subr.bf16.mxu0 %v2178
  %3038 = vmatpush1.bf16.msra.mxu0 %v2177
  %3039 = vmatprep.subr.bf16.mxu0 %v2174
  %3040 = vmatpush1.bf16.msra.mxu0 %v2173
  %3041 = vmatprep.subr.bf16.mxu0 %v2170
  %3042 = vmatpush1.bf16.msra.mxu0 %v2169
  %3043 = vmatprep.subr.bf16.mxu0 %v2166
  %3044 = vmatpush1.bf16.msra.mxu0 %v2165
  %3045 = vmatprep.subr.bf16.mxu0 %v2162
  %3046 = vmatpush1.bf16.msra.mxu0 %v2161
  %3047 = vmatprep.subr.bf16.mxu0 %v2158
  %3048 = vmatpush1.bf16.msra.mxu0 %v2157
  %3049 = vmatprep.subr.bf16.mxu0 0
  %3050 = vmatpush2.bf16.msra.mxu0 0
  %3051 = vmatprep.subr.bf16.mxu0 0
  %3052 = vmatpush2.bf16.msra.mxu0 0
  %3053 = vmatprep.subr.bf16.mxu0 0
  %3054 = vmatpush2.bf16.msra.mxu0 0
  %3055 = vmatprep.subr.bf16.mxu0 0
  %3056 = vmatpush2.bf16.msra.mxu0 0
  %3057 = vmatprep.subr.bf16.mxu0 0
  %3058 = vmatpush2.bf16.msra.mxu0 0
  %3059 = vmatprep.subr.bf16.mxu0 0
  %3060 = vmatpush2.bf16.msra.mxu0 0
  %3061 = vmatprep.subr.bf16.mxu0 0
  %3062 = vmatpush2.bf16.msra.mxu0 0
  %3063 = vmatprep.subr.bf16.mxu0 0
  %3064 = vmatpush2.bf16.msra.mxu0 0
  %3065 = vmatprep.mubr.bf16.mxu0 0
  %3066 = vmatmul.mubr.bf16.gmra.mxu0 %v3027
  %v3067 = vpop.f32.mrf.mxu0
  %v3068 = vadd.f32 0.0, %v3067
  %v3069 = vpop.f32.mrf.mxu0
  %v3070 = vadd.f32 0.0, %v3069
  %v3071 = vpop.f32.mrf.mxu0
  %v3072 = vpop.f32.mrf.mxu0
  %3073 = vdwg.mxu0
  %3074 = vmatprep.subr.bf16.mxu0 %v2188
  %3075 = vmatpush1.bf16.msra.mxu0 %v2187
  %3076 = vmatprep.subr.bf16.mxu0 %v2184
  %3077 = vmatpush1.bf16.msra.mxu0 %v2183
  %3078 = vmatprep.subr.bf16.mxu0 %v2180
  %3079 = vmatpush1.bf16.msra.mxu0 %v2179
  %3080 = vmatprep.subr.bf16.mxu0 %v2176
  %3081 = vmatpush1.bf16.msra.mxu0 %v2175
  %3082 = vmatprep.subr.bf16.mxu0 %v2172
  %3083 = vmatpush1.bf16.msra.mxu0 %v2171
  %3084 = vmatprep.subr.bf16.mxu0 %v2168
  %3085 = vmatpush1.bf16.msra.mxu0 %v2167
  %3086 = vmatprep.subr.bf16.mxu0 %v2164
  %3087 = vmatpush1.bf16.msra.mxu0 %v2163
  %3088 = vmatprep.subr.bf16.mxu0 %v2160
  %3089 = vmatpush1.bf16.msra.mxu0 %v2159
  %3090 = vmatprep.subr.bf16.mxu0 0
  %3091 = vmatpush2.bf16.msra.mxu0 0
  %3092 = vmatprep.subr.bf16.mxu0 0
  %3093 = vmatpush2.bf16.msra.mxu0 0
  %3094 = vmatprep.subr.bf16.mxu0 0
  %3095 = vmatpush2.bf16.msra.mxu0 0
  %3096 = vmatprep.subr.bf16.mxu0 0
  %3097 = vmatpush2.bf16.msra.mxu0 0
  %3098 = vmatprep.subr.bf16.mxu0 0
  %3099 = vmatpush2.bf16.msra.mxu0 0
  %3100 = vmatprep.subr.bf16.mxu0 0
  %3101 = vmatpush2.bf16.msra.mxu0 0
  %3102 = vmatprep.subr.bf16.mxu0 0
  %3103 = vmatpush2.bf16.msra.mxu0 0
  %3104 = vmatprep.subr.bf16.mxu0 0
  %3105 = vmatpush2.bf16.msra.mxu0 0
  %3106 = vmatprep.mubr.bf16.mxu0 0
  %3107 = vmatmul.mubr.bf16.gmra.mxu0 %v3027
  %v3108 = vpop.f32.mrf.mxu0
  %v3109 = vadd.f32 0.0, %v3108
  %v3110 = vpop.f32.mrf.mxu0
  %v3111 = vadd.f32 0.0, %v3110
  %v3112 = vpop.f32.mrf.mxu0
  %v3113 = vpop.f32.mrf.mxu0
  %3114 = vdwg.mxu0
  %v3115 = vadd.f32 %v3029, %v3068
  %v3116 = vadd.f32 %v3030, %v3070
  %v3117 = vadd.f32 %v3031, %v3109
  %v3118 = vadd.f32 %v3032, %v3111
  %v3119 = vxor.u32 %v3115, 2147483648
  %v3120 = vmul.f32 %v3119, 1.442695
  %v3121 = vpow.pop %v3120
  %v3122 = vadd.f32 %v3121, 1.0
  %v3123 = vrcp.pop %v3122
  %v3124 = vmul.f32 1.0, %v3123
  %v3125 = vxor.u32 %v3116, 2147483648
  %v3126 = vmul.f32 %v3125, 1.442695
  %v3127 = vpow.pop %v3126
  %v3128 = vadd.f32 %v3127, 1.0
  %v3129 = vrcp.pop %v3128
  %v3130 = vmul.f32 1.0, %v3129
  %v3131 = vtanh.pop %v3117
  %v3132 = vxor.u32 %v3118, 2147483648
  %v3133 = vmul.f32 %v3132, 1.442695
  %v3134 = vpow.pop %v3133
  %v3135 = vadd.f32 %v3134, 1.0
  %v3136 = vrcp.pop %v3135
  %v3137 = vmul.f32 1.0, %v3136
  %v3138 = vmul.f32 %v3130, %v3024
  %v3139 = vmul.f32 %v3124, %v3131
  %v3140 = vadd.f32 %v3138, %v3139
  %v3141 = vtanh.pop %v3140
  %v3142 = vmul.f32 %v3137, %v3141
  %v3143 = vpack.c.bf16 %v3142, %v3142
  %3144 = vst [vmem:[%s1596] sm:$0xf] %v3143
  %v3145 = vld [vmem:[#allocation2] sm:$0xf]
  %v3146 = vld [vmem:[#allocation2 + $0x4] sm:$0xf]
  %v3147 = vld [vmem:[#allocation2 + $0x8] sm:$0xf]
  %v3148 = vld [vmem:[#allocation2 + $0xc] sm:$0xf]
  %v3149 = vld [vmem:[#allocation2 + $0x10] sm:$0xf]
  %v3150 = vld [vmem:[#allocation2 + $0x14] sm:$0xf]
  %v3151 = vld [vmem:[#allocation2 + $0x18] sm:$0xf]
  %v3152 = vld [vmem:[#allocation2 + $0x1c] sm:$0xf]
  %s3153 = scalar_lea.vmem %s1, 512
  %v3154 = vld [vmem:[%s3153] sm:$0xff]
  %v3155 = vld [vmem:[%s3153 + $0x8] sm:$0xff]
  %v3156 = vld [vmem:[%s3153 + $0x10] sm:$0xff]
  %v3157 = vld [vmem:[%s3153 + $0x18] sm:$0xff]
  %v3158 = vld [vmem:[%s3153 + $0x20] sm:$0xff]
  %v3159 = vld [vmem:[%s3153 + $0x28] sm:$0xff]
  %v3160 = vld [vmem:[%s3153 + $0x30] sm:$0xff]
  %v3161 = vld [vmem:[%s3153 + $0x38] sm:$0xff]
  %v3162 = vld [vmem:[%s3153 + $0x40] sm:$0xff]
  %v3163 = vld [vmem:[%s3153 + $0x48] sm:$0xff]
  %v3164 = vld [vmem:[%s3153 + $0x50] sm:$0xff]
  %v3165 = vld [vmem:[%s3153 + $0x58] sm:$0xff]
  %v3166 = vld [vmem:[%s3153 + $0x60] sm:$0xff]
  %v3167 = vld [vmem:[%s3153 + $0x68] sm:$0xff]
  %v3168 = vld [vmem:[%s3153 + $0x70] sm:$0xff]
  %v3169 = vld [vmem:[%s3153 + $0x78] sm:$0xff]
  %v3170 = vld [vmem:[%s3153 + $0x80] sm:$0xff]
  %v3171 = vld [vmem:[%s3153 + $0x88] sm:$0xff]
  %v3172 = vld [vmem:[%s3153 + $0x90] sm:$0xff]
  %v3173 = vld [vmem:[%s3153 + $0x98] sm:$0xff]
  %v3174 = vld [vmem:[%s3153 + $0xa0] sm:$0xff]
  %v3175 = vld [vmem:[%s3153 + $0xa8] sm:$0xff]
  %v3176 = vld [vmem:[%s3153 + $0xb0] sm:$0xff]
  %v3177 = vld [vmem:[%s3153 + $0xb8] sm:$0xff]
  %v3178 = vld [vmem:[%s3153 + $0xc0] sm:$0xff]
  %v3179 = vld [vmem:[%s3153 + $0xc8] sm:$0xff]
  %v3180 = vld [vmem:[%s3153 + $0xd0] sm:$0xff]
  %v3181 = vld [vmem:[%s3153 + $0xd8] sm:$0xff]
  %v3182 = vld [vmem:[%s3153 + $0xe0] sm:$0xff]
  %v3183 = vld [vmem:[%s3153 + $0xe8] sm:$0xff]
  %v3184 = vld [vmem:[%s3153 + $0xf0] sm:$0xff]
  %v3185 = vld [vmem:[%s3153 + $0xf8] sm:$0xff]
  %s3186 = scalar_lea.vmem %s3, 8
  %v3187 = vld [vmem:[%s3186] sm:$0xf]
  %v3189 = vlaneseq
  %v3190 = vshrl.u32 %v3189, 7
  %v3191 = vsub.s32 0, %v3190
  %v3192 = vrot.slane %v3187, %v3191
  %v3193 = vlaneseq
  %v3194 = vshrl.u32 %v3193, 7
  %v3195 = vsub.s32 1, %v3194
  %v3196 = vrot.slane %v3187, %v3195
  %v3197 = vlaneseq
  %v3198 = vshrl.u32 %v3197, 7
  %v3199 = vsub.s32 2, %v3198
  %v3200 = vrot.slane %v3187, %v3199
  %v3201 = vlaneseq
  %v3202 = vshrl.u32 %v3201, 7
  %v3203 = vsub.s32 3, %v3202
  %v3204 = vrot.slane %v3187, %v3203
  %v3217 = vunpack.c.l.b16 %v3145
  %v3218 = vunpack.c.l.b16 %v3146
  %v3219 = vunpack.c.l.b16 %v3147
  %v3220 = vunpack.c.l.b16 %v3148
  %v3221 = vunpack.c.l.b16 %v3149
  %v3222 = vunpack.c.l.b16 %v3150
  %v3223 = vunpack.c.l.b16 %v3151
  %v3224 = vunpack.c.l.b16 %v3152
  %v3225 = vpack.c.b16 %v3218, %v3217
  %v3226 = vpack.c.b16 %v3220, %v3219
  %v3227 = vpack.c.b16 %v3222, %v3221
  %v3228 = vpack.c.b16 %v3224, %v3223
  %v3265 = vunpack.c.l.b16 %v3154
  %v3266 = vunpack.c.h.b16 %v3154
  %v3267 = vunpack.c.l.b16 %v3155
  %v3268 = vunpack.c.h.b16 %v3155
  %v3269 = vunpack.c.l.b16 %v3156
  %v3270 = vunpack.c.h.b16 %v3156
  %v3271 = vunpack.c.l.b16 %v3157
  %v3272 = vunpack.c.h.b16 %v3157
  %v3273 = vunpack.c.l.b16 %v3158
  %v3274 = vunpack.c.h.b16 %v3158
  %v3275 = vunpack.c.l.b16 %v3159
  %v3276 = vunpack.c.h.b16 %v3159
  %v3277 = vunpack.c.l.b16 %v3160
  %v3278 = vunpack.c.h.b16 %v3160
  %v3279 = vunpack.c.l.b16 %v3161
  %v3280 = vunpack.c.h.b16 %v3161
  %v3281 = vunpack.c.l.b16 %v3162
  %v3282 = vunpack.c.h.b16 %v3162
  %v3283 = vunpack.c.l.b16 %v3163
  %v3284 = vunpack.c.h.b16 %v3163
  %v3285 = vunpack.c.l.b16 %v3164
  %v3286 = vunpack.c.h.b16 %v3164
  %v3287 = vunpack.c.l.b16 %v3165
  %v3288 = vunpack.c.h.b16 %v3165
  %v3289 = vunpack.c.l.b16 %v3166
  %v3290 = vunpack.c.h.b16 %v3166
  %v3291 = vunpack.c.l.b16 %v3167
  %v3292 = vunpack.c.h.b16 %v3167
  %v3293 = vunpack.c.l.b16 %v3168
  %v3294 = vunpack.c.h.b16 %v3168
  %v3295 = vunpack.c.l.b16 %v3169
  %v3296 = vunpack.c.h.b16 %v3169
  %v3297 = vunpack.c.l.b16 %v3170
  %v3298 = vunpack.c.h.b16 %v3170
  %v3299 = vunpack.c.l.b16 %v3171
  %v3300 = vunpack.c.h.b16 %v3171
  %v3301 = vunpack.c.l.b16 %v3172
  %v3302 = vunpack.c.h.b16 %v3172
  %v3303 = vunpack.c.l.b16 %v3173
  %v3304 = vunpack.c.h.b16 %v3173
  %v3305 = vunpack.c.l.b16 %v3174
  %v3306 = vunpack.c.h.b16 %v3174
  %v3307 = vunpack.c.l.b16 %v3175
  %v3308 = vunpack.c.h.b16 %v3175
  %v3309 = vunpack.c.l.b16 %v3176
  %v3310 = vunpack.c.h.b16 %v3176
  %v3311 = vunpack.c.l.b16 %v3177
  %v3312 = vunpack.c.h.b16 %v3177
  %v3313 = vunpack.c.l.b16 %v3178
  %v3314 = vunpack.c.h.b16 %v3178
  %v3315 = vunpack.c.l.b16 %v3179
  %v3316 = vunpack.c.h.b16 %v3179
  %v3317 = vunpack.c.l.b16 %v3180
  %v3318 = vunpack.c.h.b16 %v3180
  %v3319 = vunpack.c.l.b16 %v3181
  %v3320 = vunpack.c.h.b16 %v3181
  %v3321 = vunpack.c.l.b16 %v3182
  %v3322 = vunpack.c.h.b16 %v3182
  %v3323 = vunpack.c.l.b16 %v3183
  %v3324 = vunpack.c.h.b16 %v3183
  %v3325 = vunpack.c.l.b16 %v3184
  %v3326 = vunpack.c.h.b16 %v3184
  %v3327 = vunpack.c.l.b16 %v3185
  %v3328 = vunpack.c.h.b16 %v3185
  %v3329 = vpack.c.b16 %v3269, %v3265
  %v3330 = vpack.c.b16 %v3270, %v3266
  %v3331 = vpack.c.b16 %v3271, %v3267
  %v3332 = vpack.c.b16 %v3272, %v3268
  %v3333 = vpack.c.b16 %v3277, %v3273
  %v3334 = vpack.c.b16 %v3278, %v3274
  %v3335 = vpack.c.b16 %v3279, %v3275
  %v3336 = vpack.c.b16 %v3280, %v3276
  %v3337 = vpack.c.b16 %v3285, %v3281
  %v3338 = vpack.c.b16 %v3286, %v3282
  %v3339 = vpack.c.b16 %v3287, %v3283
  %v3340 = vpack.c.b16 %v3288, %v3284
  %v3341 = vpack.c.b16 %v3293, %v3289
  %v3342 = vpack.c.b16 %v3294, %v3290
  %v3343 = vpack.c.b16 %v3295, %v3291
  %v3344 = vpack.c.b16 %v3296, %v3292
  %v3345 = vpack.c.b16 %v3301, %v3297
  %v3346 = vpack.c.b16 %v3302, %v3298
  %v3347 = vpack.c.b16 %v3303, %v3299
  %v3348 = vpack.c.b16 %v3304, %v3300
  %v3349 = vpack.c.b16 %v3309, %v3305
  %v3350 = vpack.c.b16 %v3310, %v3306
  %v3351 = vpack.c.b16 %v3311, %v3307
  %v3352 = vpack.c.b16 %v3312, %v3308
  %v3353 = vpack.c.b16 %v3317, %v3313
  %v3354 = vpack.c.b16 %v3318, %v3314
  %v3355 = vpack.c.b16 %v3319, %v3315
  %v3356 = vpack.c.b16 %v3320, %v3316
  %v3357 = vpack.c.b16 %v3325, %v3321
  %v3358 = vpack.c.b16 %v3326, %v3322
  %v3359 = vpack.c.b16 %v3327, %v3323
  %v3360 = vpack.c.b16 %v3328, %v3324
  %3393 = vmatprep.subr.bf16.mxu0 %v3358
  %3394 = vmatpush1.bf16.msra.mxu0 %v3357
  %3395 = vmatprep.subr.bf16.mxu0 %v3354
  %3396 = vmatpush1.bf16.msra.mxu0 %v3353
  %3397 = vmatprep.subr.bf16.mxu0 %v3350
  %3398 = vmatpush1.bf16.msra.mxu0 %v3349
  %3399 = vmatprep.subr.bf16.mxu0 %v3346
  %3400 = vmatpush1.bf16.msra.mxu0 %v3345
  %3401 = vmatprep.subr.bf16.mxu0 %v3342
  %3402 = vmatpush1.bf16.msra.mxu0 %v3341
  %3403 = vmatprep.subr.bf16.mxu0 %v3338
  %3404 = vmatpush1.bf16.msra.mxu0 %v3337
  %3405 = vmatprep.subr.bf16.mxu0 %v3334
  %3406 = vmatpush1.bf16.msra.mxu0 %v3333
  %3407 = vmatprep.subr.bf16.mxu0 %v3330
  %3408 = vmatpush1.bf16.msra.mxu0 %v3329
  %3409 = vmatprep.subr.bf16.mxu0 0
  %3410 = vmatpush2.bf16.msra.mxu0 0
  %3411 = vmatprep.subr.bf16.mxu0 0
  %3412 = vmatpush2.bf16.msra.mxu0 0
  %3413 = vmatprep.subr.bf16.mxu0 0
  %3414 = vmatpush2.bf16.msra.mxu0 0
  %3415 = vmatprep.subr.bf16.mxu0 0
  %3416 = vmatpush2.bf16.msra.mxu0 0
  %3417 = vmatprep.subr.bf16.mxu0 0
  %3418 = vmatpush2.bf16.msra.mxu0 0
  %3419 = vmatprep.subr.bf16.mxu0 0
  %3420 = vmatpush2.bf16.msra.mxu0 0
  %3421 = vmatprep.subr.bf16.mxu0 0
  %3422 = vmatpush2.bf16.msra.mxu0 0
  %3423 = vmatprep.subr.bf16.mxu0 0
  %3424 = vmatpush2.bf16.msra.mxu0 0
  %3425 = vmatprep.mubr.bf16.mxu0 0
  %3426 = vmatmul.mubr.bf16.gmra.mxu0 %v3225
  %v3427 = vpop.f32.mrf.mxu0
  %v3428 = vadd.f32 %v3192, %v3427
  %v3429 = vpop.f32.mrf.mxu0
  %v3430 = vadd.f32 %v3196, %v3429
  %v3431 = vpop.f32.mrf.mxu0
  %v3432 = vadd.f32 %v3192, %v3431
  %v3433 = vpop.f32.mrf.mxu0
  %v3434 = vadd.f32 %v3196, %v3433
  %3435 = vmatprep.mubr.bf16.mxu0 0
  %3436 = vmatmul.mubr.bf16.gmra.mxu0 %v3226
  %v3437 = vpop.f32.mrf.mxu0
  %v3438 = vadd.f32 %v3192, %v3437
  %v3439 = vpop.f32.mrf.mxu0
  %v3440 = vadd.f32 %v3196, %v3439
  %v3441 = vpop.f32.mrf.mxu0
  %v3442 = vadd.f32 %v3192, %v3441
  %v3443 = vpop.f32.mrf.mxu0
  %v3444 = vadd.f32 %v3196, %v3443
  %3445 = vmatprep.mubr.bf16.mxu0 0
  %3446 = vmatmul.mubr.bf16.gmra.mxu0 %v3227
  %v3447 = vpop.f32.mrf.mxu0
  %v3448 = vadd.f32 %v3192, %v3447
  %v3449 = vpop.f32.mrf.mxu0
  %v3450 = vadd.f32 %v3196, %v3449
  %v3451 = vpop.f32.mrf.mxu0
  %v3452 = vadd.f32 %v3192, %v3451
  %v3453 = vpop.f32.mrf.mxu0
  %v3454 = vadd.f32 %v3196, %v3453
  %3455 = vmatprep.mubr.bf16.mxu0 0
  %3456 = vmatmul.mubr.bf16.gmra.mxu0 %v3228
  %v3457 = vpop.f32.mrf.mxu0
  %v3458 = vadd.f32 %v3192, %v3457
  %v3459 = vpop.f32.mrf.mxu0
  %v3460 = vadd.f32 %v3196, %v3459
  %v3461 = vpop.f32.mrf.mxu0
  %v3462 = vadd.f32 %v3192, %v3461
  %v3463 = vpop.f32.mrf.mxu0
  %v3464 = vadd.f32 %v3196, %v3463
  %3465 = vdwg.mxu0
  %3466 = vmatprep.subr.bf16.mxu0 %v3360
  %3467 = vmatpush1.bf16.msra.mxu0 %v3359
  %3468 = vmatprep.subr.bf16.mxu0 %v3356
  %3469 = vmatpush1.bf16.msra.mxu0 %v3355
  %3470 = vmatprep.subr.bf16.mxu0 %v3352
  %3471 = vmatpush1.bf16.msra.mxu0 %v3351
  %3472 = vmatprep.subr.bf16.mxu0 %v3348
  %3473 = vmatpush1.bf16.msra.mxu0 %v3347
  %3474 = vmatprep.subr.bf16.mxu0 %v3344
  %3475 = vmatpush1.bf16.msra.mxu0 %v3343
  %3476 = vmatprep.subr.bf16.mxu0 %v3340
  %3477 = vmatpush1.bf16.msra.mxu0 %v3339
  %3478 = vmatprep.subr.bf16.mxu0 %v3336
  %3479 = vmatpush1.bf16.msra.mxu0 %v3335
  %3480 = vmatprep.subr.bf16.mxu0 %v3332
  %3481 = vmatpush1.bf16.msra.mxu0 %v3331
  %3482 = vmatprep.subr.bf16.mxu0 0
  %3483 = vmatpush2.bf16.msra.mxu0 0
  %3484 = vmatprep.subr.bf16.mxu0 0
  %3485 = vmatpush2.bf16.msra.mxu0 0
  %3486 = vmatprep.subr.bf16.mxu0 0
  %3487 = vmatpush2.bf16.msra.mxu0 0
  %3488 = vmatprep.subr.bf16.mxu0 0
  %3489 = vmatpush2.bf16.msra.mxu0 0
  %3490 = vmatprep.subr.bf16.mxu0 0
  %3491 = vmatpush2.bf16.msra.mxu0 0
  %3492 = vmatprep.subr.bf16.mxu0 0
  %3493 = vmatpush2.bf16.msra.mxu0 0
  %3494 = vmatprep.subr.bf16.mxu0 0
  %3495 = vmatpush2.bf16.msra.mxu0 0
  %3496 = vmatprep.subr.bf16.mxu0 0
  %3497 = vmatpush2.bf16.msra.mxu0 0
  %3498 = vmatprep.mubr.bf16.mxu0 0
  %3499 = vmatmul.mubr.bf16.gmra.mxu0 %v3225
  %v3500 = vpop.f32.mrf.mxu0
  %v3501 = vadd.f32 %v3200, %v3500
  %v3502 = vpop.f32.mrf.mxu0
  %v3503 = vadd.f32 %v3204, %v3502
  %v3504 = vpop.f32.mrf.mxu0
  %v3505 = vadd.f32 %v3200, %v3504
  %v3506 = vpop.f32.mrf.mxu0
  %v3507 = vadd.f32 %v3204, %v3506
  %3508 = vmatprep.mubr.bf16.mxu0 0
  %3509 = vmatmul.mubr.bf16.gmra.mxu0 %v3226
  %v3510 = vpop.f32.mrf.mxu0
  %v3511 = vadd.f32 %v3200, %v3510
  %v3512 = vpop.f32.mrf.mxu0
  %v3513 = vadd.f32 %v3204, %v3512
  %v3514 = vpop.f32.mrf.mxu0
  %v3515 = vadd.f32 %v3200, %v3514
  %v3516 = vpop.f32.mrf.mxu0
  %v3517 = vadd.f32 %v3204, %v3516
  %3518 = vmatprep.mubr.bf16.mxu0 0
  %3519 = vmatmul.mubr.bf16.gmra.mxu0 %v3227
  %v3520 = vpop.f32.mrf.mxu0
  %v3521 = vadd.f32 %v3200, %v3520
  %v3522 = vpop.f32.mrf.mxu0
  %v3523 = vadd.f32 %v3204, %v3522
  %v3524 = vpop.f32.mrf.mxu0
  %v3525 = vadd.f32 %v3200, %v3524
  %v3526 = vpop.f32.mrf.mxu0
  %v3527 = vadd.f32 %v3204, %v3526
  %3528 = vmatprep.mubr.bf16.mxu0 0
  %3529 = vmatmul.mubr.bf16.gmra.mxu0 %v3228
  %v3530 = vpop.f32.mrf.mxu0
  %v3531 = vadd.f32 %v3200, %v3530
  %v3532 = vpop.f32.mrf.mxu0
  %v3533 = vadd.f32 %v3204, %v3532
  %v3534 = vpop.f32.mrf.mxu0
  %v3535 = vadd.f32 %v3200, %v3534
  %v3536 = vpop.f32.mrf.mxu0
  %v3537 = vadd.f32 %v3204, %v3536
  %3538 = vdwg.mxu0
  %3539 = vst [vmem:[#allocation3] sm:$0xff] %v3428
  %3540 = vst [vmem:[#allocation3 + $0x8] sm:$0xff] %v3430
  %3541 = vst [vmem:[#allocation3 + $0x10] sm:$0xff] %v3501
  %3542 = vst [vmem:[#allocation3 + $0x18] sm:$0xff] %v3503
  %3543 = vst [vmem:[#allocation3 + $0x20] sm:$0xff] %v3432
  %3544 = vst [vmem:[#allocation3 + $0x28] sm:$0xff] %v3434
  %3545 = vst [vmem:[#allocation3 + $0x30] sm:$0xff] %v3505
  %3546 = vst [vmem:[#allocation3 + $0x38] sm:$0xff] %v3507
  %3547 = vst [vmem:[#allocation3 + $0x40] sm:$0xff] %v3438
  %3548 = vst [vmem:[#allocation3 + $0x48] sm:$0xff] %v3440
  %3549 = vst [vmem:[#allocation3 + $0x50] sm:$0xff] %v3511
  %3550 = vst [vmem:[#allocation3 + $0x58] sm:$0xff] %v3513
  %3551 = vst [vmem:[#allocation3 + $0x60] sm:$0xff] %v3442
  %3552 = vst [vmem:[#allocation3 + $0x68] sm:$0xff] %v3444
  %3553 = vst [vmem:[#allocation3 + $0x70] sm:$0xff] %v3515
  %3554 = vst [vmem:[#allocation3 + $0x78] sm:$0xff] %v3517
  %3555 = vst [vmem:[#allocation3 + $0x80] sm:$0xff] %v3448
  %3556 = vst [vmem:[#allocation3 + $0x88] sm:$0xff] %v3450
  %3557 = vst [vmem:[#allocation3 + $0x90] sm:$0xff] %v3521
  %3558 = vst [vmem:[#allocation3 + $0x98] sm:$0xff] %v3523
  %3559 = vst [vmem:[#allocation3 + $0xa0] sm:$0xff] %v3452
  %3560 = vst [vmem:[#allocation3 + $0xa8] sm:$0xff] %v3454
  %3561 = vst [vmem:[#allocation3 + $0xb0] sm:$0xff] %v3525
  %3562 = vst [vmem:[#allocation3 + $0xb8] sm:$0xff] %v3527
  %3563 = vst [vmem:[#allocation3 + $0xc0] sm:$0xff] %v3458
  %3564 = vst [vmem:[#allocation3 + $0xc8] sm:$0xff] %v3460
  %3565 = vst [vmem:[#allocation3 + $0xd0] sm:$0xff] %v3531
  %3566 = vst [vmem:[#allocation3 + $0xd8] sm:$0xff] %v3533
  %3567 = vst [vmem:[#allocation3 + $0xe0] sm:$0xff] %v3462
  %3568 = vst [vmem:[#allocation3 + $0xe8] sm:$0xff] %v3464
  %3569 = vst [vmem:[#allocation3 + $0xf0] sm:$0xff] %v3535
  %3570 = vst [vmem:[#allocation3 + $0xf8] sm:$0xff] %v3537
  %s3571 = scalar_lea.vmem %s2, 512
  %v3572 = vld [vmem:[%s3571] sm:$0xff]
  %v3573 = vld [vmem:[%s3571 + $0x8] sm:$0xff]
  %v3574 = vld [vmem:[%s3571 + $0x10] sm:$0xff]
  %v3575 = vld [vmem:[%s3571 + $0x18] sm:$0xff]
  %v3576 = vld [vmem:[%s3571 + $0x20] sm:$0xff]
  %v3577 = vld [vmem:[%s3571 + $0x28] sm:$0xff]
  %v3578 = vld [vmem:[%s3571 + $0x30] sm:$0xff]
  %v3579 = vld [vmem:[%s3571 + $0x38] sm:$0xff]
  %v3580 = vld [vmem:[%s3571 + $0x40] sm:$0xff]
  %v3581 = vld [vmem:[%s3571 + $0x48] sm:$0xff]
  %v3582 = vld [vmem:[%s3571 + $0x50] sm:$0xff]
  %v3583 = vld [vmem:[%s3571 + $0x58] sm:$0xff]
  %v3584 = vld [vmem:[%s3571 + $0x60] sm:$0xff]
  %v3585 = vld [vmem:[%s3571 + $0x68] sm:$0xff]
  %v3586 = vld [vmem:[%s3571 + $0x70] sm:$0xff]
  %v3587 = vld [vmem:[%s3571 + $0x78] sm:$0xff]
  %v3588 = vld [vmem:[%s3571 + $0x80] sm:$0xff]
  %v3589 = vld [vmem:[%s3571 + $0x88] sm:$0xff]
  %v3590 = vld [vmem:[%s3571 + $0x90] sm:$0xff]
  %v3591 = vld [vmem:[%s3571 + $0x98] sm:$0xff]
  %v3592 = vld [vmem:[%s3571 + $0xa0] sm:$0xff]
  %v3593 = vld [vmem:[%s3571 + $0xa8] sm:$0xff]
  %v3594 = vld [vmem:[%s3571 + $0xb0] sm:$0xff]
  %v3595 = vld [vmem:[%s3571 + $0xb8] sm:$0xff]
  %v3596 = vld [vmem:[%s3571 + $0xc0] sm:$0xff]
  %v3597 = vld [vmem:[%s3571 + $0xc8] sm:$0xff]
  %v3598 = vld [vmem:[%s3571 + $0xd0] sm:$0xff]
  %v3599 = vld [vmem:[%s3571 + $0xd8] sm:$0xff]
  %v3600 = vld [vmem:[%s3571 + $0xe0] sm:$0xff]
  %v3601 = vld [vmem:[%s3571 + $0xe8] sm:$0xff]
  %v3602 = vld [vmem:[%s3571 + $0xf0] sm:$0xff]
  %v3603 = vld [vmem:[%s3571 + $0xf8] sm:$0xff]
  %v3604 = vld [vmem:[#allocation3] sm:$0xff]
  %v3605 = vld [vmem:[#allocation3 + $0x8] sm:$0xff]
  %v3606 = vld [vmem:[#allocation3 + $0x10] sm:$0xff]
  %v3607 = vld [vmem:[#allocation3 + $0x18] sm:$0xff]
  %v3640 = vunpack.c.l.b16 %v3572
  %v3641 = vunpack.c.h.b16 %v3572
  %v3642 = vunpack.c.l.b16 %v3573
  %v3643 = vunpack.c.h.b16 %v3573
  %v3644 = vunpack.c.l.b16 %v3574
  %v3645 = vunpack.c.h.b16 %v3574
  %v3646 = vunpack.c.l.b16 %v3575
  %v3647 = vunpack.c.h.b16 %v3575
  %v3648 = vunpack.c.l.b16 %v3576
  %v3649 = vunpack.c.h.b16 %v3576
  %v3650 = vunpack.c.l.b16 %v3577
  %v3651 = vunpack.c.h.b16 %v3577
  %v3652 = vunpack.c.l.b16 %v3578
  %v3653 = vunpack.c.h.b16 %v3578
  %v3654 = vunpack.c.l.b16 %v3579
  %v3655 = vunpack.c.h.b16 %v3579
  %v3656 = vunpack.c.l.b16 %v3580
  %v3657 = vunpack.c.h.b16 %v3580
  %v3658 = vunpack.c.l.b16 %v3581
  %v3659 = vunpack.c.h.b16 %v3581
  %v3660 = vunpack.c.l.b16 %v3582
  %v3661 = vunpack.c.h.b16 %v3582
  %v3662 = vunpack.c.l.b16 %v3583
  %v3663 = vunpack.c.h.b16 %v3583
  %v3664 = vunpack.c.l.b16 %v3584
  %v3665 = vunpack.c.h.b16 %v3584
  %v3666 = vunpack.c.l.b16 %v3585
  %v3667 = vunpack.c.h.b16 %v3585
  %v3668 = vunpack.c.l.b16 %v3586
  %v3669 = vunpack.c.h.b16 %v3586
  %v3670 = vunpack.c.l.b16 %v3587
  %v3671 = vunpack.c.h.b16 %v3587
  %v3672 = vunpack.c.l.b16 %v3588
  %v3673 = vunpack.c.h.b16 %v3588
  %v3674 = vunpack.c.l.b16 %v3589
  %v3675 = vunpack.c.h.b16 %v3589
  %v3676 = vunpack.c.l.b16 %v3590
  %v3677 = vunpack.c.h.b16 %v3590
  %v3678 = vunpack.c.l.b16 %v3591
  %v3679 = vunpack.c.h.b16 %v3591
  %v3680 = vunpack.c.l.b16 %v3592
  %v3681 = vunpack.c.h.b16 %v3592
  %v3682 = vunpack.c.l.b16 %v3593
  %v3683 = vunpack.c.h.b16 %v3593
  %v3684 = vunpack.c.l.b16 %v3594
  %v3685 = vunpack.c.h.b16 %v3594
  %v3686 = vunpack.c.l.b16 %v3595
  %v3687 = vunpack.c.h.b16 %v3595
  %v3688 = vunpack.c.l.b16 %v3596
  %v3689 = vunpack.c.h.b16 %v3596
  %v3690 = vunpack.c.l.b16 %v3597
  %v3691 = vunpack.c.h.b16 %v3597
  %v3692 = vunpack.c.l.b16 %v3598
  %v3693 = vunpack.c.h.b16 %v3598
  %v3694 = vunpack.c.l.b16 %v3599
  %v3695 = vunpack.c.h.b16 %v3599
  %v3696 = vunpack.c.l.b16 %v3600
  %v3697 = vunpack.c.h.b16 %v3600
  %v3698 = vunpack.c.l.b16 %v3601
  %v3699 = vunpack.c.h.b16 %v3601
  %v3700 = vunpack.c.l.b16 %v3602
  %v3701 = vunpack.c.h.b16 %v3602
  %v3702 = vunpack.c.l.b16 %v3603
  %v3703 = vunpack.c.h.b16 %v3603
  %v3704 = vpack.c.b16 %v3644, %v3640
  %v3705 = vpack.c.b16 %v3645, %v3641
  %v3706 = vpack.c.b16 %v3646, %v3642
  %v3707 = vpack.c.b16 %v3647, %v3643
  %v3708 = vpack.c.b16 %v3652, %v3648
  %v3709 = vpack.c.b16 %v3653, %v3649
  %v3710 = vpack.c.b16 %v3654, %v3650
  %v3711 = vpack.c.b16 %v3655, %v3651
  %v3712 = vpack.c.b16 %v3660, %v3656
  %v3713 = vpack.c.b16 %v3661, %v3657
  %v3714 = vpack.c.b16 %v3662, %v3658
  %v3715 = vpack.c.b16 %v3663, %v3659
  %v3716 = vpack.c.b16 %v3668, %v3664
  %v3717 = vpack.c.b16 %v3669, %v3665
  %v3718 = vpack.c.b16 %v3670, %v3666
  %v3719 = vpack.c.b16 %v3671, %v3667
  %v3720 = vpack.c.b16 %v3676, %v3672
  %v3721 = vpack.c.b16 %v3677, %v3673
  %v3722 = vpack.c.b16 %v3678, %v3674
  %v3723 = vpack.c.b16 %v3679, %v3675
  %v3724 = vpack.c.b16 %v3684, %v3680
  %v3725 = vpack.c.b16 %v3685, %v3681
  %v3726 = vpack.c.b16 %v3686, %v3682
  %v3727 = vpack.c.b16 %v3687, %v3683
  %v3728 = vpack.c.b16 %v3692, %v3688
  %v3729 = vpack.c.b16 %v3693, %v3689
  %v3730 = vpack.c.b16 %v3694, %v3690
  %v3731 = vpack.c.b16 %v3695, %v3691
  %v3732 = vpack.c.b16 %v3700, %v3696
  %v3733 = vpack.c.b16 %v3701, %v3697
  %v3734 = vpack.c.b16 %v3702, %v3698
  %v3735 = vpack.c.b16 %v3703, %v3699
  %3768 = vmatprep.subr.bf16.mxu0 %v3733
  %3769 = vmatpush1.bf16.msra.mxu0 %v3732
  %3770 = vmatprep.subr.bf16.mxu0 %v3729
  %3771 = vmatpush1.bf16.msra.mxu0 %v3728
  %3772 = vmatprep.subr.bf16.mxu0 %v3725
  %3773 = vmatpush1.bf16.msra.mxu0 %v3724
  %3774 = vmatprep.subr.bf16.mxu0 %v3721
  %3775 = vmatpush1.bf16.msra.mxu0 %v3720
  %3776 = vmatprep.subr.bf16.mxu0 %v3717
  %3777 = vmatpush1.bf16.msra.mxu0 %v3716
  %3778 = vmatprep.subr.bf16.mxu0 %v3713
  %3779 = vmatpush1.bf16.msra.mxu0 %v3712
  %3780 = vmatprep.subr.bf16.mxu0 %v3709
  %3781 = vmatpush1.bf16.msra.mxu0 %v3708
  %3782 = vmatprep.subr.bf16.mxu0 %v3705
  %3783 = vmatpush1.bf16.msra.mxu0 %v3704
  %3784 = vmatprep.subr.bf16.mxu0 0
  %3785 = vmatpush2.bf16.msra.mxu0 0
  %3786 = vmatprep.subr.bf16.mxu0 0
  %3787 = vmatpush2.bf16.msra.mxu0 0
  %3788 = vmatprep.subr.bf16.mxu0 0
  %3789 = vmatpush2.bf16.msra.mxu0 0
  %3790 = vmatprep.subr.bf16.mxu0 0
  %3791 = vmatpush2.bf16.msra.mxu0 0
  %3792 = vmatprep.subr.bf16.mxu0 0
  %3793 = vmatpush2.bf16.msra.mxu0 0
  %3794 = vmatprep.subr.bf16.mxu0 0
  %3795 = vmatpush2.bf16.msra.mxu0 0
  %3796 = vmatprep.subr.bf16.mxu0 0
  %3797 = vmatpush2.bf16.msra.mxu0 0
  %3798 = vmatprep.subr.bf16.mxu0 0
  %3799 = vmatpush2.bf16.msra.mxu0 0
  %3800 = vmatprep.mubr.bf16.mxu0 0
  %3801 = vmatmul.mubr.bf16.gmra.mxu0 0
  %v3802 = vpop.f32.mrf.mxu0
  %v3803 = vadd.f32 0.0, %v3802
  %v3804 = vpop.f32.mrf.mxu0
  %v3805 = vadd.f32 0.0, %v3804
  %v3806 = vpop.f32.mrf.mxu0
  %v3807 = vpop.f32.mrf.mxu0
  %3808 = vdwg.mxu0
  %3809 = vmatprep.subr.bf16.mxu0 %v3735
  %3810 = vmatpush1.bf16.msra.mxu0 %v3734
  %3811 = vmatprep.subr.bf16.mxu0 %v3731
  %3812 = vmatpush1.bf16.msra.mxu0 %v3730
  %3813 = vmatprep.subr.bf16.mxu0 %v3727
  %3814 = vmatpush1.bf16.msra.mxu0 %v3726
  %3815 = vmatprep.subr.bf16.mxu0 %v3723
  %3816 = vmatpush1.bf16.msra.mxu0 %v3722
  %3817 = vmatprep.subr.bf16.mxu0 %v3719
  %3818 = vmatpush1.bf16.msra.mxu0 %v3718
  %3819 = vmatprep.subr.bf16.mxu0 %v3715
  %3820 = vmatpush1.bf16.msra.mxu0 %v3714
  %3821 = vmatprep.subr.bf16.mxu0 %v3711
  %3822 = vmatpush1.bf16.msra.mxu0 %v3710
  %3823 = vmatprep.subr.bf16.mxu0 %v3707
  %3824 = vmatpush1.bf16.msra.mxu0 %v3706
  %3825 = vmatprep.subr.bf16.mxu0 0
  %3826 = vmatpush2.bf16.msra.mxu0 0
  %3827 = vmatprep.subr.bf16.mxu0 0
  %3828 = vmatpush2.bf16.msra.mxu0 0
  %3829 = vmatprep.subr.bf16.mxu0 0
  %3830 = vmatpush2.bf16.msra.mxu0 0
  %3831 = vmatprep.subr.bf16.mxu0 0
  %3832 = vmatpush2.bf16.msra.mxu0 0
  %3833 = vmatprep.subr.bf16.mxu0 0
  %3834 = vmatpush2.bf16.msra.mxu0 0
  %3835 = vmatprep.subr.bf16.mxu0 0
  %3836 = vmatpush2.bf16.msra.mxu0 0
  %3837 = vmatprep.subr.bf16.mxu0 0
  %3838 = vmatpush2.bf16.msra.mxu0 0
  %3839 = vmatprep.subr.bf16.mxu0 0
  %3840 = vmatpush2.bf16.msra.mxu0 0
  %3841 = vmatprep.mubr.bf16.mxu0 0
  %3842 = vmatmul.mubr.bf16.gmra.mxu0 0
  %v3843 = vpop.f32.mrf.mxu0
  %v3844 = vadd.f32 0.0, %v3843
  %v3845 = vpop.f32.mrf.mxu0
  %v3846 = vadd.f32 0.0, %v3845
  %v3847 = vpop.f32.mrf.mxu0
  %v3848 = vpop.f32.mrf.mxu0
  %3849 = vdwg.mxu0
  %v3850 = vadd.f32 %v3604, %v3803
  %v3851 = vadd.f32 %v3605, %v3805
  %v3852 = vadd.f32 %v3606, %v3844
  %v3853 = vadd.f32 %v3607, %v3846
  %v3854 = vxor.u32 %v3850, 2147483648
  %v3855 = vmul.f32 %v3854, 1.442695
  %v3856 = vpow.pop %v3855
  %v3857 = vadd.f32 %v3856, 1.0
  %v3858 = vrcp.pop %v3857
  %v3859 = vmul.f32 1.0, %v3858
  %v3860 = vxor.u32 %v3851, 2147483648
  %v3861 = vmul.f32 %v3860, 1.442695
  %v3862 = vpow.pop %v3861
  %v3863 = vadd.f32 %v3862, 1.0
  %v3864 = vrcp.pop %v3863
  %v3865 = vmul.f32 1.0, %v3864
  %v3866 = vtanh.pop %v3852
  %v3867 = vxor.u32 %v3853, 2147483648
  %v3868 = vmul.f32 %v3867, 1.442695
  %v3869 = vpow.pop %v3868
  %v3870 = vadd.f32 %v3869, 1.0
  %v3871 = vrcp.pop %v3870
  %v3872 = vmul.f32 1.0, %v3871
  %v3873 = vmul.f32 %v3865, 0.0
  %v3874 = vmul.f32 %v3859, %v3866
  %v3875 = vadd.f32 %v3873, %v3874
  %v3876 = vtanh.pop %v3875
  %v3877 = vmul.f32 %v3872, %v3876
  %v3878 = vpack.c.bf16 %v3877, %v3877
  %3879 = vst [vmem:[#allocation2] sm:$0xf] %v3878
  %v3880 = vld [vmem:[%s772] sm:$0xff]
  %v3881 = vld [vmem:[%s772 + $0x8] sm:$0xff]
  %v3882 = vld [vmem:[%s772 + $0x10] sm:$0xff]
  %v3883 = vld [vmem:[%s772 + $0x18] sm:$0xff]
  %3884 = vmatprep.subr.bf16.mxu0 %v3733
  %3885 = vmatpush1.bf16.msra.mxu0 %v3732
  %3886 = vmatprep.subr.bf16.mxu0 %v3729
  %3887 = vmatpush1.bf16.msra.mxu0 %v3728
  %3888 = vmatprep.subr.bf16.mxu0 %v3725
  %3889 = vmatpush1.bf16.msra.mxu0 %v3724
  %3890 = vmatprep.subr.bf16.mxu0 %v3721
  %3891 = vmatpush1.bf16.msra.mxu0 %v3720
  %3892 = vmatprep.subr.bf16.mxu0 %v3717
  %3893 = vmatpush1.bf16.msra.mxu0 %v3716
  %3894 = vmatprep.subr.bf16.mxu0 %v3713
  %3895 = vmatpush1.bf16.msra.mxu0 %v3712
  %3896 = vmatprep.subr.bf16.mxu0 %v3709
  %3897 = vmatpush1.bf16.msra.mxu0 %v3708
  %3898 = vmatprep.subr.bf16.mxu0 %v3705
  %3899 = vmatpush1.bf16.msra.mxu0 %v3704
  %3900 = vmatprep.subr.bf16.mxu0 0
  %3901 = vmatpush2.bf16.msra.mxu0 0
  %3902 = vmatprep.subr.bf16.mxu0 0
  %3903 = vmatpush2.bf16.msra.mxu0 0
  %3904 = vmatprep.subr.bf16.mxu0 0
  %3905 = vmatpush2.bf16.msra.mxu0 0
  %3906 = vmatprep.subr.bf16.mxu0 0
  %3907 = vmatpush2.bf16.msra.mxu0 0
  %3908 = vmatprep.subr.bf16.mxu0 0
  %3909 = vmatpush2.bf16.msra.mxu0 0
  %3910 = vmatprep.subr.bf16.mxu0 0
  %3911 = vmatpush2.bf16.msra.mxu0 0
  %3912 = vmatprep.subr.bf16.mxu0 0
  %3913 = vmatpush2.bf16.msra.mxu0 0
  %3914 = vmatprep.subr.bf16.mxu0 0
  %3915 = vmatpush2.bf16.msra.mxu0 0
  %3916 = vmatprep.mubr.bf16.mxu0 0
  %3917 = vmatmul.mubr.bf16.gmra.mxu0 %v3878
  %v3918 = vpop.f32.mrf.mxu0
  %v3919 = vadd.f32 0.0, %v3918
  %v3920 = vpop.f32.mrf.mxu0
  %v3921 = vadd.f32 0.0, %v3920
  %v3922 = vpop.f32.mrf.mxu0
  %v3923 = vpop.f32.mrf.mxu0
  %3924 = vdwg.mxu0
  %3925 = vmatprep.subr.bf16.mxu0 %v3735
  %3926 = vmatpush1.bf16.msra.mxu0 %v3734
  %3927 = vmatprep.subr.bf16.mxu0 %v3731
  %3928 = vmatpush1.bf16.msra.mxu0 %v3730
  %3929 = vmatprep.subr.bf16.mxu0 %v3727
  %3930 = vmatpush1.bf16.msra.mxu0 %v3726
  %3931 = vmatprep.subr.bf16.mxu0 %v3723
  %3932 = vmatpush1.bf16.msra.mxu0 %v3722
  %3933 = vmatprep.subr.bf16.mxu0 %v3719
  %3934 = vmatpush1.bf16.msra.mxu0 %v3718
  %3935 = vmatprep.subr.bf16.mxu0 %v3715
  %3936 = vmatpush1.bf16.msra.mxu0 %v3714
  %3937 = vmatprep.subr.bf16.mxu0 %v3711
  %3938 = vmatpush1.bf16.msra.mxu0 %v3710
  %3939 = vmatprep.subr.bf16.mxu0 %v3707
  %3940 = vmatpush1.bf16.msra.mxu0 %v3706
  %3941 = vmatprep.subr.bf16.mxu0 0
  %3942 = vmatpush2.bf16.msra.mxu0 0
  %3943 = vmatprep.subr.bf16.mxu0 0
  %3944 = vmatpush2.bf16.msra.mxu0 0
  %3945 = vmatprep.subr.bf16.mxu0 0
  %3946 = vmatpush2.bf16.msra.mxu0 0
  %3947 = vmatprep.subr.bf16.mxu0 0
  %3948 = vmatpush2.bf16.msra.mxu0 0
  %3949 = vmatprep.subr.bf16.mxu0 0
  %3950 = vmatpush2.bf16.msra.mxu0 0
  %3951 = vmatprep.subr.bf16.mxu0 0
  %3952 = vmatpush2.bf16.msra.mxu0 0
  %3953 = vmatprep.subr.bf16.mxu0 0
  %3954 = vmatpush2.bf16.msra.mxu0 0
  %3955 = vmatprep.subr.bf16.mxu0 0
  %3956 = vmatpush2.bf16.msra.mxu0 0
  %3957 = vmatprep.mubr.bf16.mxu0 0
  %3958 = vmatmul.mubr.bf16.gmra.mxu0 %v3878
  %v3959 = vpop.f32.mrf.mxu0
  %v3960 = vadd.f32 0.0, %v3959
  %v3961 = vpop.f32.mrf.mxu0
  %v3962 = vadd.f32 0.0, %v3961
  %v3963 = vpop.f32.mrf.mxu0
  %v3964 = vpop.f32.mrf.mxu0
  %3965 = vdwg.mxu0
  %v3966 = vadd.f32 %v3880, %v3919
  %v3967 = vadd.f32 %v3881, %v3921
  %v3968 = vadd.f32 %v3882, %v3960
  %v3969 = vadd.f32 %v3883, %v3962
  %v3970 = vxor.u32 %v3966, 2147483648
  %v3971 = vmul.f32 %v3970, 1.442695
  %v3972 = vpow.pop %v3971
  %v3973 = vadd.f32 %v3972, 1.0
  %v3974 = vrcp.pop %v3973
  %v3975 = vmul.f32 1.0, %v3974
  %v3976 = vxor.u32 %v3967, 2147483648
  %v3977 = vmul.f32 %v3976, 1.442695
  %v3978 = vpow.pop %v3977
  %v3979 = vadd.f32 %v3978, 1.0
  %v3980 = vrcp.pop %v3979
  %v3981 = vmul.f32 1.0, %v3980
  %v3982 = vtanh.pop %v3968
  %v3983 = vxor.u32 %v3969, 2147483648
  %v3984 = vmul.f32 %v3983, 1.442695
  %v3985 = vpow.pop %v3984
  %v3986 = vadd.f32 %v3985, 1.0
  %v3987 = vrcp.pop %v3986
  %v3988 = vmul.f32 1.0, %v3987
  %v3989 = vmul.f32 %v3981, %v3875
  %v3990 = vmul.f32 %v3975, %v3982
  %v3991 = vadd.f32 %v3989, %v3990
  %v3992 = vtanh.pop %v3991
  %v3993 = vmul.f32 %v3988, %v3992
  %v3994 = vpack.c.bf16 %v3993, %v3993
  %3995 = vst [vmem:[%s888] sm:$0xf] %v3994
  %v3996 = vld [vmem:[%s890] sm:$0xff]
  %v3997 = vld [vmem:[%s890 + $0x8] sm:$0xff]
  %v3998 = vld [vmem:[%s890 + $0x10] sm:$0xff]
  %v3999 = vld [vmem:[%s890 + $0x18] sm:$0xff]
  %4000 = vmatprep.subr.bf16.mxu0 %v3733
  %4001 = vmatpush1.bf16.msra.mxu0 %v3732
  %4002 = vmatprep.subr.bf16.mxu0 %v3729
  %4003 = vmatpush1.bf16.msra.mxu0 %v3728
  %4004 = vmatprep.subr.bf16.mxu0 %v3725
  %4005 = vmatpush1.bf16.msra.mxu0 %v3724
  %4006 = vmatprep.subr.bf16.mxu0 %v3721
  %4007 = vmatpush1.bf16.msra.mxu0 %v3720
  %4008 = vmatprep.subr.bf16.mxu0 %v3717
  %4009 = vmatpush1.bf16.msra.mxu0 %v3716
  %4010 = vmatprep.subr.bf16.mxu0 %v3713
  %4011 = vmatpush1.bf16.msra.mxu0 %v3712
  %4012 = vmatprep.subr.bf16.mxu0 %v3709
  %4013 = vmatpush1.bf16.msra.mxu0 %v3708
  %4014 = vmatprep.subr.bf16.mxu0 %v3705
  %4015 = vmatpush1.bf16.msra.mxu0 %v3704
  %4016 = vmatprep.subr.bf16.mxu0 0
  %4017 = vmatpush2.bf16.msra.mxu0 0
  %4018 = vmatprep.subr.bf16.mxu0 0
  %4019 = vmatpush2.bf16.msra.mxu0 0
  %4020 = vmatprep.subr.bf16.mxu0 0
  %4021 = vmatpush2.bf16.msra.mxu0 0
  %4022 = vmatprep.subr.bf16.mxu0 0
  %4023 = vmatpush2.bf16.msra.mxu0 0
  %4024 = vmatprep.subr.bf16.mxu0 0
  %4025 = vmatpush2.bf16.msra.mxu0 0
  %4026 = vmatprep.subr.bf16.mxu0 0
  %4027 = vmatpush2.bf16.msra.mxu0 0
  %4028 = vmatprep.subr.bf16.mxu0 0
  %4029 = vmatpush2.bf16.msra.mxu0 0
  %4030 = vmatprep.subr.bf16.mxu0 0
  %4031 = vmatpush2.bf16.msra.mxu0 0
  %4032 = vmatprep.mubr.bf16.mxu0 0
  %4033 = vmatmul.mubr.bf16.gmra.mxu0 %v3994
  %v4034 = vpop.f32.mrf.mxu0
  %v4035 = vadd.f32 0.0, %v4034
  %v4036 = vpop.f32.mrf.mxu0
  %v4037 = vadd.f32 0.0, %v4036
  %v4038 = vpop.f32.mrf.mxu0
  %v4039 = vpop.f32.mrf.mxu0
  %4040 = vdwg.mxu0
  %4041 = vmatprep.subr.bf16.mxu0 %v3735
  %4042 = vmatpush1.bf16.msra.mxu0 %v3734
  %4043 = vmatprep.subr.bf16.mxu0 %v3731
  %4044 = vmatpush1.bf16.msra.mxu0 %v3730
  %4045 = vmatprep.subr.bf16.mxu0 %v3727
  %4046 = vmatpush1.bf16.msra.mxu0 %v3726
  %4047 = vmatprep.subr.bf16.mxu0 %v3723
  %4048 = vmatpush1.bf16.msra.mxu0 %v3722
  %4049 = vmatprep.subr.bf16.mxu0 %v3719
  %4050 = vmatpush1.bf16.msra.mxu0 %v3718
  %4051 = vmatprep.subr.bf16.mxu0 %v3715
  %4052 = vmatpush1.bf16.msra.mxu0 %v3714
  %4053 = vmatprep.subr.bf16.mxu0 %v3711
  %4054 = vmatpush1.bf16.msra.mxu0 %v3710
  %4055 = vmatprep.subr.bf16.mxu0 %v3707
  %4056 = vmatpush1.bf16.msra.mxu0 %v3706
  %4057 = vmatprep.subr.bf16.mxu0 0
  %4058 = vmatpush2.bf16.msra.mxu0 0
  %4059 = vmatprep.subr.bf16.mxu0 0
  %4060 = vmatpush2.bf16.msra.mxu0 0
  %4061 = vmatprep.subr.bf16.mxu0 0
  %4062 = vmatpush2.bf16.msra.mxu0 0
  %4063 = vmatprep.subr.bf16.mxu0 0
  %4064 = vmatpush2.bf16.msra.mxu0 0
  %4065 = vmatprep.subr.bf16.mxu0 0
  %4066 = vmatpush2.bf16.msra.mxu0 0
  %4067 = vmatprep.subr.bf16.mxu0 0
  %4068 = vmatpush2.bf16.msra.mxu0 0
  %4069 = vmatprep.subr.bf16.mxu0 0
  %4070 = vmatpush2.bf16.msra.mxu0 0
  %4071 = vmatprep.subr.bf16.mxu0 0
  %4072 = vmatpush2.bf16.msra.mxu0 0
  %4073 = vmatprep.mubr.bf16.mxu0 0
  %4074 = vmatmul.mubr.bf16.gmra.mxu0 %v3994
  %v4075 = vpop.f32.mrf.mxu0
  %v4076 = vadd.f32 0.0, %v4075
  %v4077 = vpop.f32.mrf.mxu0
  %v4078 = vadd.f32 0.0, %v4077
  %v4079 = vpop.f32.mrf.mxu0
  %v4080 = vpop.f32.mrf.mxu0
  %4081 = vdwg.mxu0
  %v4082 = vadd.f32 %v3996, %v4035
  %v4083 = vadd.f32 %v3997, %v4037
  %v4084 = vadd.f32 %v3998, %v4076
  %v4085 = vadd.f32 %v3999, %v4078
  %v4086 = vxor.u32 %v4082, 2147483648
  %v4087 = vmul.f32 %v4086, 1.442695
  %v4088 = vpow.pop %v4087
  %v4089 = vadd.f32 %v4088, 1.0
  %v4090 = vrcp.pop %v4089
  %v4091 = vmul.f32 1.0, %v4090
  %v4092 = vxor.u32 %v4083, 2147483648
  %v4093 = vmul.f32 %v4092, 1.442695
  %v4094 = vpow.pop %v4093
  %v4095 = vadd.f32 %v4094, 1.0
  %v4096 = vrcp.pop %v4095
  %v4097 = vmul.f32 1.0, %v4096
  %v4098 = vtanh.pop %v4084
  %v4099 = vxor.u32 %v4085, 2147483648
  %v4100 = vmul.f32 %v4099, 1.442695
  %v4101 = vpow.pop %v4100
  %v4102 = vadd.f32 %v4101, 1.0
  %v4103 = vrcp.pop %v4102
  %v4104 = vmul.f32 1.0, %v4103
  %v4105 = vmul.f32 %v4097, %v3991
  %v4106 = vmul.f32 %v4091, %v4098
  %v4107 = vadd.f32 %v4105, %v4106
  %v4108 = vtanh.pop %v4107
  %v4109 = vmul.f32 %v4104, %v4108
  %v4110 = vpack.c.bf16 %v4109, %v4109
  %4111 = vst [vmem:[%s1006] sm:$0xf] %v4110
  %v4112 = vld [vmem:[%s1008] sm:$0xff]
  %v4113 = vld [vmem:[%s1008 + $0x8] sm:$0xff]
  %v4114 = vld [vmem:[%s1008 + $0x10] sm:$0xff]
  %v4115 = vld [vmem:[%s1008 + $0x18] sm:$0xff]
  %4116 = vmatprep.subr.bf16.mxu0 %v3733
  %4117 = vmatpush1.bf16.msra.mxu0 %v3732
  %4118 = vmatprep.subr.bf16.mxu0 %v3729
  %4119 = vmatpush1.bf16.msra.mxu0 %v3728
  %4120 = vmatprep.subr.bf16.mxu0 %v3725
  %4121 = vmatpush1.bf16.msra.mxu0 %v3724
  %4122 = vmatprep.subr.bf16.mxu0 %v3721
  %4123 = vmatpush1.bf16.msra.mxu0 %v3720
  %4124 = vmatprep.subr.bf16.mxu0 %v3717
  %4125 = vmatpush1.bf16.msra.mxu0 %v3716
  %4126 = vmatprep.subr.bf16.mxu0 %v3713
  %4127 = vmatpush1.bf16.msra.mxu0 %v3712
  %4128 = vmatprep.subr.bf16.mxu0 %v3709
  %4129 = vmatpush1.bf16.msra.mxu0 %v3708
  %4130 = vmatprep.subr.bf16.mxu0 %v3705
  %4131 = vmatpush1.bf16.msra.mxu0 %v3704
  %4132 = vmatprep.subr.bf16.mxu0 0
  %4133 = vmatpush2.bf16.msra.mxu0 0
  %4134 = vmatprep.subr.bf16.mxu0 0
  %4135 = vmatpush2.bf16.msra.mxu0 0
  %4136 = vmatprep.subr.bf16.mxu0 0
  %4137 = vmatpush2.bf16.msra.mxu0 0
  %4138 = vmatprep.subr.bf16.mxu0 0
  %4139 = vmatpush2.bf16.msra.mxu0 0
  %4140 = vmatprep.subr.bf16.mxu0 0
  %4141 = vmatpush2.bf16.msra.mxu0 0
  %4142 = vmatprep.subr.bf16.mxu0 0
  %4143 = vmatpush2.bf16.msra.mxu0 0
  %4144 = vmatprep.subr.bf16.mxu0 0
  %4145 = vmatpush2.bf16.msra.mxu0 0
  %4146 = vmatprep.subr.bf16.mxu0 0
  %4147 = vmatpush2.bf16.msra.mxu0 0
  %4148 = vmatprep.mubr.bf16.mxu0 0
  %4149 = vmatmul.mubr.bf16.gmra.mxu0 %v4110
  %v4150 = vpop.f32.mrf.mxu0
  %v4151 = vadd.f32 0.0, %v4150
  %v4152 = vpop.f32.mrf.mxu0
  %v4153 = vadd.f32 0.0, %v4152
  %v4154 = vpop.f32.mrf.mxu0
  %v4155 = vpop.f32.mrf.mxu0
  %4156 = vdwg.mxu0
  %4157 = vmatprep.subr.bf16.mxu0 %v3735
  %4158 = vmatpush1.bf16.msra.mxu0 %v3734
  %4159 = vmatprep.subr.bf16.mxu0 %v3731
  %4160 = vmatpush1.bf16.msra.mxu0 %v3730
  %4161 = vmatprep.subr.bf16.mxu0 %v3727
  %4162 = vmatpush1.bf16.msra.mxu0 %v3726
  %4163 = vmatprep.subr.bf16.mxu0 %v3723
  %4164 = vmatpush1.bf16.msra.mxu0 %v3722
  %4165 = vmatprep.subr.bf16.mxu0 %v3719
  %4166 = vmatpush1.bf16.msra.mxu0 %v3718
  %4167 = vmatprep.subr.bf16.mxu0 %v3715
  %4168 = vmatpush1.bf16.msra.mxu0 %v3714
  %4169 = vmatprep.subr.bf16.mxu0 %v3711
  %4170 = vmatpush1.bf16.msra.mxu0 %v3710
  %4171 = vmatprep.subr.bf16.mxu0 %v3707
  %4172 = vmatpush1.bf16.msra.mxu0 %v3706
  %4173 = vmatprep.subr.bf16.mxu0 0
  %4174 = vmatpush2.bf16.msra.mxu0 0
  %4175 = vmatprep.subr.bf16.mxu0 0
  %4176 = vmatpush2.bf16.msra.mxu0 0
  %4177 = vmatprep.subr.bf16.mxu0 0
  %4178 = vmatpush2.bf16.msra.mxu0 0
  %4179 = vmatprep.subr.bf16.mxu0 0
  %4180 = vmatpush2.bf16.msra.mxu0 0
  %4181 = vmatprep.subr.bf16.mxu0 0
  %4182 = vmatpush2.bf16.msra.mxu0 0
  %4183 = vmatprep.subr.bf16.mxu0 0
  %4184 = vmatpush2.bf16.msra.mxu0 0
  %4185 = vmatprep.subr.bf16.mxu0 0
  %4186 = vmatpush2.bf16.msra.mxu0 0
  %4187 = vmatprep.subr.bf16.mxu0 0
  %4188 = vmatpush2.bf16.msra.mxu0 0
  %4189 = vmatprep.mubr.bf16.mxu0 0
  %4190 = vmatmul.mubr.bf16.gmra.mxu0 %v4110
  %v4191 = vpop.f32.mrf.mxu0
  %v4192 = vadd.f32 0.0, %v4191
  %v4193 = vpop.f32.mrf.mxu0
  %v4194 = vadd.f32 0.0, %v4193
  %v4195 = vpop.f32.mrf.mxu0
  %v4196 = vpop.f32.mrf.mxu0
  %4197 = vdwg.mxu0
  %v4198 = vadd.f32 %v4112, %v4151
  %v4199 = vadd.f32 %v4113, %v4153
  %v4200 = vadd.f32 %v4114, %v4192
  %v4201 = vadd.f32 %v4115, %v4194
  %v4202 = vxor.u32 %v4198, 2147483648
  %v4203 = vmul.f32 %v4202, 1.442695
  %v4204 = vpow.pop %v4203
  %v4205 = vadd.f32 %v4204, 1.0
  %v4206 = vrcp.pop %v4205
  %v4207 = vmul.f32 1.0, %v4206
  %v4208 = vxor.u32 %v4199, 2147483648
  %v4209 = vmul.f32 %v4208, 1.442695
  %v4210 = vpow.pop %v4209
  %v4211 = vadd.f32 %v4210, 1.0
  %v4212 = vrcp.pop %v4211
  %v4213 = vmul.f32 1.0, %v4212
  %v4214 = vtanh.pop %v4200
  %v4215 = vxor.u32 %v4201, 2147483648
  %v4216 = vmul.f32 %v4215, 1.442695
  %v4217 = vpow.pop %v4216
  %v4218 = vadd.f32 %v4217, 1.0
  %v4219 = vrcp.pop %v4218
  %v4220 = vmul.f32 1.0, %v4219
  %v4221 = vmul.f32 %v4213, %v4107
  %v4222 = vmul.f32 %v4207, %v4214
  %v4223 = vadd.f32 %v4221, %v4222
  %v4224 = vtanh.pop %v4223
  %v4225 = vmul.f32 %v4220, %v4224
  %v4226 = vpack.c.bf16 %v4225, %v4225
  %4227 = vst [vmem:[%s1124] sm:$0xf] %v4226
  %v4228 = vld [vmem:[%s1126] sm:$0xff]
  %v4229 = vld [vmem:[%s1126 + $0x8] sm:$0xff]
  %v4230 = vld [vmem:[%s1126 + $0x10] sm:$0xff]
  %v4231 = vld [vmem:[%s1126 + $0x18] sm:$0xff]
  %4232 = vmatprep.subr.bf16.mxu0 %v3733
  %4233 = vmatpush1.bf16.msra.mxu0 %v3732
  %4234 = vmatprep.subr.bf16.mxu0 %v3729
  %4235 = vmatpush1.bf16.msra.mxu0 %v3728
  %4236 = vmatprep.subr.bf16.mxu0 %v3725
  %4237 = vmatpush1.bf16.msra.mxu0 %v3724
  %4238 = vmatprep.subr.bf16.mxu0 %v3721
  %4239 = vmatpush1.bf16.msra.mxu0 %v3720
  %4240 = vmatprep.subr.bf16.mxu0 %v3717
  %4241 = vmatpush1.bf16.msra.mxu0 %v3716
  %4242 = vmatprep.subr.bf16.mxu0 %v3713
  %4243 = vmatpush1.bf16.msra.mxu0 %v3712
  %4244 = vmatprep.subr.bf16.mxu0 %v3709
  %4245 = vmatpush1.bf16.msra.mxu0 %v3708
  %4246 = vmatprep.subr.bf16.mxu0 %v3705
  %4247 = vmatpush1.bf16.msra.mxu0 %v3704
  %4248 = vmatprep.subr.bf16.mxu0 0
  %4249 = vmatpush2.bf16.msra.mxu0 0
  %4250 = vmatprep.subr.bf16.mxu0 0
  %4251 = vmatpush2.bf16.msra.mxu0 0
  %4252 = vmatprep.subr.bf16.mxu0 0
  %4253 = vmatpush2.bf16.msra.mxu0 0
  %4254 = vmatprep.subr.bf16.mxu0 0
  %4255 = vmatpush2.bf16.msra.mxu0 0
  %4256 = vmatprep.subr.bf16.mxu0 0
  %4257 = vmatpush2.bf16.msra.mxu0 0
  %4258 = vmatprep.subr.bf16.mxu0 0
  %4259 = vmatpush2.bf16.msra.mxu0 0
  %4260 = vmatprep.subr.bf16.mxu0 0
  %4261 = vmatpush2.bf16.msra.mxu0 0
  %4262 = vmatprep.subr.bf16.mxu0 0
  %4263 = vmatpush2.bf16.msra.mxu0 0
  %4264 = vmatprep.mubr.bf16.mxu0 0
  %4265 = vmatmul.mubr.bf16.gmra.mxu0 %v4226
  %v4266 = vpop.f32.mrf.mxu0
  %v4267 = vadd.f32 0.0, %v4266
  %v4268 = vpop.f32.mrf.mxu0
  %v4269 = vadd.f32 0.0, %v4268
  %v4270 = vpop.f32.mrf.mxu0
  %v4271 = vpop.f32.mrf.mxu0
  %4272 = vdwg.mxu0
  %4273 = vmatprep.subr.bf16.mxu0 %v3735
  %4274 = vmatpush1.bf16.msra.mxu0 %v3734
  %4275 = vmatprep.subr.bf16.mxu0 %v3731
  %4276 = vmatpush1.bf16.msra.mxu0 %v3730
  %4277 = vmatprep.subr.bf16.mxu0 %v3727
  %4278 = vmatpush1.bf16.msra.mxu0 %v3726
  %4279 = vmatprep.subr.bf16.mxu0 %v3723
  %4280 = vmatpush1.bf16.msra.mxu0 %v3722
  %4281 = vmatprep.subr.bf16.mxu0 %v3719
  %4282 = vmatpush1.bf16.msra.mxu0 %v3718
  %4283 = vmatprep.subr.bf16.mxu0 %v3715
  %4284 = vmatpush1.bf16.msra.mxu0 %v3714
  %4285 = vmatprep.subr.bf16.mxu0 %v3711
  %4286 = vmatpush1.bf16.msra.mxu0 %v3710
  %4287 = vmatprep.subr.bf16.mxu0 %v3707
  %4288 = vmatpush1.bf16.msra.mxu0 %v3706
  %4289 = vmatprep.subr.bf16.mxu0 0
  %4290 = vmatpush2.bf16.msra.mxu0 0
  %4291 = vmatprep.subr.bf16.mxu0 0
  %4292 = vmatpush2.bf16.msra.mxu0 0
  %4293 = vmatprep.subr.bf16.mxu0 0
  %4294 = vmatpush2.bf16.msra.mxu0 0
  %4295 = vmatprep.subr.bf16.mxu0 0
  %4296 = vmatpush2.bf16.msra.mxu0 0
  %4297 = vmatprep.subr.bf16.mxu0 0
  %4298 = vmatpush2.bf16.msra.mxu0 0
  %4299 = vmatprep.subr.bf16.mxu0 0
  %4300 = vmatpush2.bf16.msra.mxu0 0
  %4301 = vmatprep.subr.bf16.mxu0 0
  %4302 = vmatpush2.bf16.msra.mxu0 0
  %4303 = vmatprep.subr.bf16.mxu0 0
  %4304 = vmatpush2.bf16.msra.mxu0 0
  %4305 = vmatprep.mubr.bf16.mxu0 0
  %4306 = vmatmul.mubr.bf16.gmra.mxu0 %v4226
  %v4307 = vpop.f32.mrf.mxu0
  %v4308 = vadd.f32 0.0, %v4307
  %v4309 = vpop.f32.mrf.mxu0
  %v4310 = vadd.f32 0.0, %v4309
  %v4311 = vpop.f32.mrf.mxu0
  %v4312 = vpop.f32.mrf.mxu0
  %4313 = vdwg.mxu0
  %v4314 = vadd.f32 %v4228, %v4267
  %v4315 = vadd.f32 %v4229, %v4269
  %v4316 = vadd.f32 %v4230, %v4308
  %v4317 = vadd.f32 %v4231, %v4310
  %v4318 = vxor.u32 %v4314, 2147483648
  %v4319 = vmul.f32 %v4318, 1.442695
  %v4320 = vpow.pop %v4319
  %v4321 = vadd.f32 %v4320, 1.0
  %v4322 = vrcp.pop %v4321
  %v4323 = vmul.f32 1.0, %v4322
  %v4324 = vxor.u32 %v4315, 2147483648
  %v4325 = vmul.f32 %v4324, 1.442695
  %v4326 = vpow.pop %v4325
  %v4327 = vadd.f32 %v4326, 1.0
  %v4328 = vrcp.pop %v4327
  %v4329 = vmul.f32 1.0, %v4328
  %v4330 = vtanh.pop %v4316
  %v4331 = vxor.u32 %v4317, 2147483648
  %v4332 = vmul.f32 %v4331, 1.442695
  %v4333 = vpow.pop %v4332
  %v4334 = vadd.f32 %v4333, 1.0
  %v4335 = vrcp.pop %v4334
  %v4336 = vmul.f32 1.0, %v4335
  %v4337 = vmul.f32 %v4329, %v4223
  %v4338 = vmul.f32 %v4323, %v4330
  %v4339 = vadd.f32 %v4337, %v4338
  %v4340 = vtanh.pop %v4339
  %v4341 = vmul.f32 %v4336, %v4340
  %v4342 = vpack.c.bf16 %v4341, %v4341
  %4343 = vst [vmem:[%s1242] sm:$0xf] %v4342
  %v4344 = vld [vmem:[%s1244] sm:$0xff]
  %v4345 = vld [vmem:[%s1244 + $0x8] sm:$0xff]
  %v4346 = vld [vmem:[%s1244 + $0x10] sm:$0xff]
  %v4347 = vld [vmem:[%s1244 + $0x18] sm:$0xff]
  %4348 = vmatprep.subr.bf16.mxu0 %v3733
  %4349 = vmatpush1.bf16.msra.mxu0 %v3732
  %4350 = vmatprep.subr.bf16.mxu0 %v3729
  %4351 = vmatpush1.bf16.msra.mxu0 %v3728
  %4352 = vmatprep.subr.bf16.mxu0 %v3725
  %4353 = vmatpush1.bf16.msra.mxu0 %v3724
  %4354 = vmatprep.subr.bf16.mxu0 %v3721
  %4355 = vmatpush1.bf16.msra.mxu0 %v3720
  %4356 = vmatprep.subr.bf16.mxu0 %v3717
  %4357 = vmatpush1.bf16.msra.mxu0 %v3716
  %4358 = vmatprep.subr.bf16.mxu0 %v3713
  %4359 = vmatpush1.bf16.msra.mxu0 %v3712
  %4360 = vmatprep.subr.bf16.mxu0 %v3709
  %4361 = vmatpush1.bf16.msra.mxu0 %v3708
  %4362 = vmatprep.subr.bf16.mxu0 %v3705
  %4363 = vmatpush1.bf16.msra.mxu0 %v3704
  %4364 = vmatprep.subr.bf16.mxu0 0
  %4365 = vmatpush2.bf16.msra.mxu0 0
  %4366 = vmatprep.subr.bf16.mxu0 0
  %4367 = vmatpush2.bf16.msra.mxu0 0
  %4368 = vmatprep.subr.bf16.mxu0 0
  %4369 = vmatpush2.bf16.msra.mxu0 0
  %4370 = vmatprep.subr.bf16.mxu0 0
  %4371 = vmatpush2.bf16.msra.mxu0 0
  %4372 = vmatprep.subr.bf16.mxu0 0
  %4373 = vmatpush2.bf16.msra.mxu0 0
  %4374 = vmatprep.subr.bf16.mxu0 0
  %4375 = vmatpush2.bf16.msra.mxu0 0
  %4376 = vmatprep.subr.bf16.mxu0 0
  %4377 = vmatpush2.bf16.msra.mxu0 0
  %4378 = vmatprep.subr.bf16.mxu0 0
  %4379 = vmatpush2.bf16.msra.mxu0 0
  %4380 = vmatprep.mubr.bf16.mxu0 0
  %4381 = vmatmul.mubr.bf16.gmra.mxu0 %v4342
  %v4382 = vpop.f32.mrf.mxu0
  %v4383 = vadd.f32 0.0, %v4382
  %v4384 = vpop.f32.mrf.mxu0
  %v4385 = vadd.f32 0.0, %v4384
  %v4386 = vpop.f32.mrf.mxu0
  %v4387 = vpop.f32.mrf.mxu0
  %4388 = vdwg.mxu0
  %4389 = vmatprep.subr.bf16.mxu0 %v3735
  %4390 = vmatpush1.bf16.msra.mxu0 %v3734
  %4391 = vmatprep.subr.bf16.mxu0 %v3731
  %4392 = vmatpush1.bf16.msra.mxu0 %v3730
  %4393 = vmatprep.subr.bf16.mxu0 %v3727
  %4394 = vmatpush1.bf16.msra.mxu0 %v3726
  %4395 = vmatprep.subr.bf16.mxu0 %v3723
  %4396 = vmatpush1.bf16.msra.mxu0 %v3722
  %4397 = vmatprep.subr.bf16.mxu0 %v3719
  %4398 = vmatpush1.bf16.msra.mxu0 %v3718
  %4399 = vmatprep.subr.bf16.mxu0 %v3715
  %4400 = vmatpush1.bf16.msra.mxu0 %v3714
  %4401 = vmatprep.subr.bf16.mxu0 %v3711
  %4402 = vmatpush1.bf16.msra.mxu0 %v3710
  %4403 = vmatprep.subr.bf16.mxu0 %v3707
  %4404 = vmatpush1.bf16.msra.mxu0 %v3706
  %4405 = vmatprep.subr.bf16.mxu0 0
  %4406 = vmatpush2.bf16.msra.mxu0 0
  %4407 = vmatprep.subr.bf16.mxu0 0
  %4408 = vmatpush2.bf16.msra.mxu0 0
  %4409 = vmatprep.subr.bf16.mxu0 0
  %4410 = vmatpush2.bf16.msra.mxu0 0
  %4411 = vmatprep.subr.bf16.mxu0 0
  %4412 = vmatpush2.bf16.msra.mxu0 0
  %4413 = vmatprep.subr.bf16.mxu0 0
  %4414 = vmatpush2.bf16.msra.mxu0 0
  %4415 = vmatprep.subr.bf16.mxu0 0
  %4416 = vmatpush2.bf16.msra.mxu0 0
  %4417 = vmatprep.subr.bf16.mxu0 0
  %4418 = vmatpush2.bf16.msra.mxu0 0
  %4419 = vmatprep.subr.bf16.mxu0 0
  %4420 = vmatpush2.bf16.msra.mxu0 0
  %4421 = vmatprep.mubr.bf16.mxu0 0
  %4422 = vmatmul.mubr.bf16.gmra.mxu0 %v4342
  %v4423 = vpop.f32.mrf.mxu0
  %v4424 = vadd.f32 0.0, %v4423
  %v4425 = vpop.f32.mrf.mxu0
  %v4426 = vadd.f32 0.0, %v4425
  %v4427 = vpop.f32.mrf.mxu0
  %v4428 = vpop.f32.mrf.mxu0
  %4429 = vdwg.mxu0
  %v4430 = vadd.f32 %v4344, %v4383
  %v4431 = vadd.f32 %v4345, %v4385
  %v4432 = vadd.f32 %v4346, %v4424
  %v4433 = vadd.f32 %v4347, %v4426
  %v4434 = vxor.u32 %v4430, 2147483648
  %v4435 = vmul.f32 %v4434, 1.442695
  %v4436 = vpow.pop %v4435
  %v4437 = vadd.f32 %v4436, 1.0
  %v4438 = vrcp.pop %v4437
  %v4439 = vmul.f32 1.0, %v4438
  %v4440 = vxor.u32 %v4431, 2147483648
  %v4441 = vmul.f32 %v4440, 1.442695
  %v4442 = vpow.pop %v4441
  %v4443 = vadd.f32 %v4442, 1.0
  %v4444 = vrcp.pop %v4443
  %v4445 = vmul.f32 1.0, %v4444
  %v4446 = vtanh.pop %v4432
  %v4447 = vxor.u32 %v4433, 2147483648
  %v4448 = vmul.f32 %v4447, 1.442695
  %v4449 = vpow.pop %v4448
  %v4450 = vadd.f32 %v4449, 1.0
  %v4451 = vrcp.pop %v4450
  %v4452 = vmul.f32 1.0, %v4451
  %v4453 = vmul.f32 %v4445, %v4339
  %v4454 = vmul.f32 %v4439, %v4446
  %v4455 = vadd.f32 %v4453, %v4454
  %v4456 = vtanh.pop %v4455
  %v4457 = vmul.f32 %v4452, %v4456
  %v4458 = vpack.c.bf16 %v4457, %v4457
  %4459 = vst [vmem:[%s1360] sm:$0xf] %v4458
  %v4460 = vld [vmem:[%s1362] sm:$0xff]
  %v4461 = vld [vmem:[%s1362 + $0x8] sm:$0xff]
  %v4462 = vld [vmem:[%s1362 + $0x10] sm:$0xff]
  %v4463 = vld [vmem:[%s1362 + $0x18] sm:$0xff]
  %4464 = vmatprep.subr.bf16.mxu0 %v3733
  %4465 = vmatpush1.bf16.msra.mxu0 %v3732
  %4466 = vmatprep.subr.bf16.mxu0 %v3729
  %4467 = vmatpush1.bf16.msra.mxu0 %v3728
  %4468 = vmatprep.subr.bf16.mxu0 %v3725
  %4469 = vmatpush1.bf16.msra.mxu0 %v3724
  %4470 = vmatprep.subr.bf16.mxu0 %v3721
  %4471 = vmatpush1.bf16.msra.mxu0 %v3720
  %4472 = vmatprep.subr.bf16.mxu0 %v3717
  %4473 = vmatpush1.bf16.msra.mxu0 %v3716
  %4474 = vmatprep.subr.bf16.mxu0 %v3713
  %4475 = vmatpush1.bf16.msra.mxu0 %v3712
  %4476 = vmatprep.subr.bf16.mxu0 %v3709
  %4477 = vmatpush1.bf16.msra.mxu0 %v3708
  %4478 = vmatprep.subr.bf16.mxu0 %v3705
  %4479 = vmatpush1.bf16.msra.mxu0 %v3704
  %4480 = vmatprep.subr.bf16.mxu0 0
  %4481 = vmatpush2.bf16.msra.mxu0 0
  %4482 = vmatprep.subr.bf16.mxu0 0
  %4483 = vmatpush2.bf16.msra.mxu0 0
  %4484 = vmatprep.subr.bf16.mxu0 0
  %4485 = vmatpush2.bf16.msra.mxu0 0
  %4486 = vmatprep.subr.bf16.mxu0 0
  %4487 = vmatpush2.bf16.msra.mxu0 0
  %4488 = vmatprep.subr.bf16.mxu0 0
  %4489 = vmatpush2.bf16.msra.mxu0 0
  %4490 = vmatprep.subr.bf16.mxu0 0
  %4491 = vmatpush2.bf16.msra.mxu0 0
  %4492 = vmatprep.subr.bf16.mxu0 0
  %4493 = vmatpush2.bf16.msra.mxu0 0
  %4494 = vmatprep.subr.bf16.mxu0 0
  %4495 = vmatpush2.bf16.msra.mxu0 0
  %4496 = vmatprep.mubr.bf16.mxu0 0
  %4497 = vmatmul.mubr.bf16.gmra.mxu0 %v4458
  %v4498 = vpop.f32.mrf.mxu0
  %v4499 = vadd.f32 0.0, %v4498
  %v4500 = vpop.f32.mrf.mxu0
  %v4501 = vadd.f32 0.0, %v4500
  %v4502 = vpop.f32.mrf.mxu0
  %v4503 = vpop.f32.mrf.mxu0
  %4504 = vdwg.mxu0
  %4505 = vmatprep.subr.bf16.mxu0 %v3735
  %4506 = vmatpush1.bf16.msra.mxu0 %v3734
  %4507 = vmatprep.subr.bf16.mxu0 %v3731
  %4508 = vmatpush1.bf16.msra.mxu0 %v3730
  %4509 = vmatprep.subr.bf16.mxu0 %v3727
  %4510 = vmatpush1.bf16.msra.mxu0 %v3726
  %4511 = vmatprep.subr.bf16.mxu0 %v3723
  %4512 = vmatpush1.bf16.msra.mxu0 %v3722
  %4513 = vmatprep.subr.bf16.mxu0 %v3719
  %4514 = vmatpush1.bf16.msra.mxu0 %v3718
  %4515 = vmatprep.subr.bf16.mxu0 %v3715
  %4516 = vmatpush1.bf16.msra.mxu0 %v3714
  %4517 = vmatprep.subr.bf16.mxu0 %v3711
  %4518 = vmatpush1.bf16.msra.mxu0 %v3710
  %4519 = vmatprep.subr.bf16.mxu0 %v3707
  %4520 = vmatpush1.bf16.msra.mxu0 %v3706
  %4521 = vmatprep.subr.bf16.mxu0 0
  %4522 = vmatpush2.bf16.msra.mxu0 0
  %4523 = vmatprep.subr.bf16.mxu0 0
  %4524 = vmatpush2.bf16.msra.mxu0 0
  %4525 = vmatprep.subr.bf16.mxu0 0
  %4526 = vmatpush2.bf16.msra.mxu0 0
  %4527 = vmatprep.subr.bf16.mxu0 0
  %4528 = vmatpush2.bf16.msra.mxu0 0
  %4529 = vmatprep.subr.bf16.mxu0 0
  %4530 = vmatpush2.bf16.msra.mxu0 0
  %4531 = vmatprep.subr.bf16.mxu0 0
  %4532 = vmatpush2.bf16.msra.mxu0 0
  %4533 = vmatprep.subr.bf16.mxu0 0
  %4534 = vmatpush2.bf16.msra.mxu0 0
  %4535 = vmatprep.subr.bf16.mxu0 0
  %4536 = vmatpush2.bf16.msra.mxu0 0
  %4537 = vmatprep.mubr.bf16.mxu0 0
  %4538 = vmatmul.mubr.bf16.gmra.mxu0 %v4458
  %v4539 = vpop.f32.mrf.mxu0
  %v4540 = vadd.f32 0.0, %v4539
  %v4541 = vpop.f32.mrf.mxu0
  %v4542 = vadd.f32 0.0, %v4541
  %v4543 = vpop.f32.mrf.mxu0
  %v4544 = vpop.f32.mrf.mxu0
  %4545 = vdwg.mxu0
  %v4546 = vadd.f32 %v4460, %v4499
  %v4547 = vadd.f32 %v4461, %v4501
  %v4548 = vadd.f32 %v4462, %v4540
  %v4549 = vadd.f32 %v4463, %v4542
  %v4550 = vxor.u32 %v4546, 2147483648
  %v4551 = vmul.f32 %v4550, 1.442695
  %v4552 = vpow.pop %v4551
  %v4553 = vadd.f32 %v4552, 1.0
  %v4554 = vrcp.pop %v4553
  %v4555 = vmul.f32 1.0, %v4554
  %v4556 = vxor.u32 %v4547, 2147483648
  %v4557 = vmul.f32 %v4556, 1.442695
  %v4558 = vpow.pop %v4557
  %v4559 = vadd.f32 %v4558, 1.0
  %v4560 = vrcp.pop %v4559
  %v4561 = vmul.f32 1.0, %v4560
  %v4562 = vtanh.pop %v4548
  %v4563 = vxor.u32 %v4549, 2147483648
  %v4564 = vmul.f32 %v4563, 1.442695
  %v4565 = vpow.pop %v4564
  %v4566 = vadd.f32 %v4565, 1.0
  %v4567 = vrcp.pop %v4566
  %v4568 = vmul.f32 1.0, %v4567
  %v4569 = vmul.f32 %v4561, %v4455
  %v4570 = vmul.f32 %v4555, %v4562
  %v4571 = vadd.f32 %v4569, %v4570
  %v4572 = vtanh.pop %v4571
  %v4573 = vmul.f32 %v4568, %v4572
  %v4574 = vpack.c.bf16 %v4573, %v4573
  %4575 = vst [vmem:[%s1478] sm:$0xf] %v4574
  %v4576 = vld [vmem:[%s1480] sm:$0xff]
  %v4577 = vld [vmem:[%s1480 + $0x8] sm:$0xff]
  %v4578 = vld [vmem:[%s1480 + $0x10] sm:$0xff]
  %v4579 = vld [vmem:[%s1480 + $0x18] sm:$0xff]
  %4580 = vmatprep.subr.bf16.mxu0 %v3733
  %4581 = vmatpush1.bf16.msra.mxu0 %v3732
  %4582 = vmatprep.subr.bf16.mxu0 %v3729
  %4583 = vmatpush1.bf16.msra.mxu0 %v3728
  %4584 = vmatprep.subr.bf16.mxu0 %v3725
  %4585 = vmatpush1.bf16.msra.mxu0 %v3724
  %4586 = vmatprep.subr.bf16.mxu0 %v3721
  %4587 = vmatpush1.bf16.msra.mxu0 %v3720
  %4588 = vmatprep.subr.bf16.mxu0 %v3717
  %4589 = vmatpush1.bf16.msra.mxu0 %v3716
  %4590 = vmatprep.subr.bf16.mxu0 %v3713
  %4591 = vmatpush1.bf16.msra.mxu0 %v3712
  %4592 = vmatprep.subr.bf16.mxu0 %v3709
  %4593 = vmatpush1.bf16.msra.mxu0 %v3708
  %4594 = vmatprep.subr.bf16.mxu0 %v3705
  %4595 = vmatpush1.bf16.msra.mxu0 %v3704
  %4596 = vmatprep.subr.bf16.mxu0 0
  %4597 = vmatpush2.bf16.msra.mxu0 0
  %4598 = vmatprep.subr.bf16.mxu0 0
  %4599 = vmatpush2.bf16.msra.mxu0 0
  %4600 = vmatprep.subr.bf16.mxu0 0
  %4601 = vmatpush2.bf16.msra.mxu0 0
  %4602 = vmatprep.subr.bf16.mxu0 0
  %4603 = vmatpush2.bf16.msra.mxu0 0
  %4604 = vmatprep.subr.bf16.mxu0 0
  %4605 = vmatpush2.bf16.msra.mxu0 0
  %4606 = vmatprep.subr.bf16.mxu0 0
  %4607 = vmatpush2.bf16.msra.mxu0 0
  %4608 = vmatprep.subr.bf16.mxu0 0
  %4609 = vmatpush2.bf16.msra.mxu0 0
  %4610 = vmatprep.subr.bf16.mxu0 0
  %4611 = vmatpush2.bf16.msra.mxu0 0
  %4612 = vmatprep.mubr.bf16.mxu0 0
  %4613 = vmatmul.mubr.bf16.gmra.mxu0 %v4574
  %v4614 = vpop.f32.mrf.mxu0
  %v4615 = vadd.f32 0.0, %v4614
  %v4616 = vpop.f32.mrf.mxu0
  %v4617 = vadd.f32 0.0, %v4616
  %v4618 = vpop.f32.mrf.mxu0
  %v4619 = vpop.f32.mrf.mxu0
  %4620 = vdwg.mxu0
  %4621 = vmatprep.subr.bf16.mxu0 %v3735
  %4622 = vmatpush1.bf16.msra.mxu0 %v3734
  %4623 = vmatprep.subr.bf16.mxu0 %v3731
  %4624 = vmatpush1.bf16.msra.mxu0 %v3730
  %4625 = vmatprep.subr.bf16.mxu0 %v3727
  %4626 = vmatpush1.bf16.msra.mxu0 %v3726
  %4627 = vmatprep.subr.bf16.mxu0 %v3723
  %4628 = vmatpush1.bf16.msra.mxu0 %v3722
  %4629 = vmatprep.subr.bf16.mxu0 %v3719
  %4630 = vmatpush1.bf16.msra.mxu0 %v3718
  %4631 = vmatprep.subr.bf16.mxu0 %v3715
  %4632 = vmatpush1.bf16.msra.mxu0 %v3714
  %4633 = vmatprep.subr.bf16.mxu0 %v3711
  %4634 = vmatpush1.bf16.msra.mxu0 %v3710
  %4635 = vmatprep.subr.bf16.mxu0 %v3707
  %4636 = vmatpush1.bf16.msra.mxu0 %v3706
  %4637 = vmatprep.subr.bf16.mxu0 0
  %4638 = vmatpush2.bf16.msra.mxu0 0
  %4639 = vmatprep.subr.bf16.mxu0 0
  %4640 = vmatpush2.bf16.msra.mxu0 0
  %4641 = vmatprep.subr.bf16.mxu0 0
  %4642 = vmatpush2.bf16.msra.mxu0 0
  %4643 = vmatprep.subr.bf16.mxu0 0
  %4644 = vmatpush2.bf16.msra.mxu0 0
  %4645 = vmatprep.subr.bf16.mxu0 0
  %4646 = vmatpush2.bf16.msra.mxu0 0
  %4647 = vmatprep.subr.bf16.mxu0 0
  %4648 = vmatpush2.bf16.msra.mxu0 0
  %4649 = vmatprep.subr.bf16.mxu0 0
  %4650 = vmatpush2.bf16.msra.mxu0 0
  %4651 = vmatprep.subr.bf16.mxu0 0
  %4652 = vmatpush2.bf16.msra.mxu0 0
  %4653 = vmatprep.mubr.bf16.mxu0 0
  %4654 = vmatmul.mubr.bf16.gmra.mxu0 %v4574
  %v4655 = vpop.f32.mrf.mxu0
  %v4656 = vadd.f32 0.0, %v4655
  %v4657 = vpop.f32.mrf.mxu0
  %v4658 = vadd.f32 0.0, %v4657
  %v4659 = vpop.f32.mrf.mxu0
  %v4660 = vpop.f32.mrf.mxu0
  %4661 = vdwg.mxu0
  %v4662 = vadd.f32 %v4576, %v4615
  %v4663 = vadd.f32 %v4577, %v4617
  %v4664 = vadd.f32 %v4578, %v4656
  %v4665 = vadd.f32 %v4579, %v4658
  %v4666 = vxor.u32 %v4662, 2147483648
  %v4667 = vmul.f32 %v4666, 1.442695
  %v4668 = vpow.pop %v4667
  %v4669 = vadd.f32 %v4668, 1.0
  %v4670 = vrcp.pop %v4669
  %v4671 = vmul.f32 1.0, %v4670
  %v4672 = vxor.u32 %v4663, 2147483648
  %v4673 = vmul.f32 %v4672, 1.442695
  %v4674 = vpow.pop %v4673
  %v4675 = vadd.f32 %v4674, 1.0
  %v4676 = vrcp.pop %v4675
  %v4677 = vmul.f32 1.0, %v4676
  %v4678 = vtanh.pop %v4664
  %v4679 = vxor.u32 %v4665, 2147483648
  %v4680 = vmul.f32 %v4679, 1.442695
  %v4681 = vpow.pop %v4680
  %v4682 = vadd.f32 %v4681, 1.0
  %v4683 = vrcp.pop %v4682
  %v4684 = vmul.f32 1.0, %v4683
  %v4685 = vmul.f32 %v4677, %v4571
  %v4686 = vmul.f32 %v4671, %v4678
  %v4687 = vadd.f32 %v4685, %v4686
  %v4688 = vtanh.pop %v4687
  %v4689 = vmul.f32 %v4684, %v4688
  %v4690 = vpack.c.bf16 %v4689, %v4689
  %4691 = vst [vmem:[%s1596] sm:$0xf] %v4690
  %v4692 = vld [vmem:[#allocation2] sm:$0xf]
  %v4693 = vld [vmem:[#allocation2 + $0x4] sm:$0xf]
  %v4694 = vld [vmem:[#allocation2 + $0x8] sm:$0xf]
  %v4695 = vld [vmem:[#allocation2 + $0xc] sm:$0xf]
  %v4696 = vld [vmem:[#allocation2 + $0x10] sm:$0xf]
  %v4697 = vld [vmem:[#allocation2 + $0x14] sm:$0xf]
  %v4698 = vld [vmem:[#allocation2 + $0x18] sm:$0xf]
  %v4699 = vld [vmem:[#allocation2 + $0x1c] sm:$0xf]
  %v4700 = vld [vmem:[%s4] sm:$0xf]
  %v4701 = vld [vmem:[%s4 + $0x4] sm:$0xf]
  %v4702 = vld [vmem:[%s4 + $0x8] sm:$0xf]
  %v4703 = vld [vmem:[%s4 + $0xc] sm:$0xf]
  %v4704 = vld [vmem:[%s4 + $0x10] sm:$0xf]
  %v4705 = vld [vmem:[%s4 + $0x14] sm:$0xf]
  %v4706 = vld [vmem:[%s4 + $0x18] sm:$0xf]
  %v4707 = vld [vmem:[%s4 + $0x1c] sm:$0xf]
  %v4708 = vld [vmem:[%s4 + $0x20] sm:$0xf]
  %v4709 = vld [vmem:[%s4 + $0x24] sm:$0xf]
  %v4710 = vld [vmem:[%s4 + $0x28] sm:$0xf]
  %v4711 = vld [vmem:[%s4 + $0x2c] sm:$0xf]
  %v4712 = vld [vmem:[%s4 + $0x30] sm:$0xf]
  %v4713 = vld [vmem:[%s4 + $0x34] sm:$0xf]
  %v4714 = vld [vmem:[%s4 + $0x38] sm:$0xf]
  %v4715 = vld [vmem:[%s4 + $0x3c] sm:$0xf]
  %v4716 = vld [vmem:[%s5] sm:$0x1]
  %v4718 = vlaneseq
  %v4719 = vshrl.u32 %v4718, 7
  %v4720 = vsub.s32 0, %v4719
  %v4721 = vrot.slane %v4716, %v4720
  %v4731 = vunpack.c.l.b16 %v4692
  %v4732 = vunpack.c.l.b16 %v4693
  %v4733 = vunpack.c.l.b16 %v4694
  %v4734 = vunpack.c.l.b16 %v4695
  %v4735 = vunpack.c.l.b16 %v4696
  %v4736 = vunpack.c.l.b16 %v4697
  %v4737 = vunpack.c.l.b16 %v4698
  %v4738 = vunpack.c.l.b16 %v4699
  %v4739 = vpack.c.b16 %v4732, %v4731
  %v4740 = vpack.c.b16 %v4734, %v4733
  %v4741 = vpack.c.b16 %v4736, %v4735
  %v4742 = vpack.c.b16 %v4738, %v4737
  %v4763 = vunpack.c.l.b16 %v4700
  %v4764 = vunpack.c.l.b16 %v4701
  %v4765 = vunpack.c.l.b16 %v4702
  %v4766 = vunpack.c.l.b16 %v4703
  %v4767 = vunpack.c.l.b16 %v4704
  %v4768 = vunpack.c.l.b16 %v4705
  %v4769 = vunpack.c.l.b16 %v4706
  %v4770 = vunpack.c.l.b16 %v4707
  %v4771 = vunpack.c.l.b16 %v4708
  %v4772 = vunpack.c.l.b16 %v4709
  %v4773 = vunpack.c.l.b16 %v4710
  %v4774 = vunpack.c.l.b16 %v4711
  %v4775 = vunpack.c.l.b16 %v4712
  %v4776 = vunpack.c.l.b16 %v4713
  %v4777 = vunpack.c.l.b16 %v4714
  %v4778 = vunpack.c.l.b16 %v4715
  %v4779 = vpack.c.b16 %v4764, %v4763
  %v4780 = vpack.c.b16 %v4766, %v4765
  %v4781 = vpack.c.b16 %v4768, %v4767
  %v4782 = vpack.c.b16 %v4770, %v4769
  %v4783 = vpack.c.b16 %v4772, %v4771
  %v4784 = vpack.c.b16 %v4774, %v4773
  %v4785 = vpack.c.b16 %v4776, %v4775
  %v4786 = vpack.c.b16 %v4778, %v4777
  %4795 = vmatprep.subr.bf16.mxu0 0
  %4796 = vmatpush1.bf16.msra.mxu0 %v4786
  %4797 = vmatprep.subr.bf16.mxu0 0
  %4798 = vmatpush1.bf16.msra.mxu0 %v4785
  %4799 = vmatprep.subr.bf16.mxu0 0
  %4800 = vmatpush1.bf16.msra.mxu0 %v4784
  %4801 = vmatprep.subr.bf16.mxu0 0
  %4802 = vmatpush1.bf16.msra.mxu0 %v4783
  %4803 = vmatprep.subr.bf16.mxu0 0
  %4804 = vmatpush1.bf16.msra.mxu0 %v4782
  %4805 = vmatprep.subr.bf16.mxu0 0
  %4806 = vmatpush1.bf16.msra.mxu0 %v4781
  %4807 = vmatprep.subr.bf16.mxu0 0
  %4808 = vmatpush1.bf16.msra.mxu0 %v4780
  %4809 = vmatprep.subr.bf16.mxu0 0
  %4810 = vmatpush1.bf16.msra.mxu0 %v4779
  %4811 = vmatprep.subr.bf16.mxu0 0
  %4812 = vmatpush2.bf16.msra.mxu0 0
  %4813 = vmatprep.subr.bf16.mxu0 0
  %4814 = vmatpush2.bf16.msra.mxu0 0
  %4815 = vmatprep.subr.bf16.mxu0 0
  %4816 = vmatpush2.bf16.msra.mxu0 0
  %4817 = vmatprep.subr.bf16.mxu0 0
  %4818 = vmatpush2.bf16.msra.mxu0 0
  %4819 = vmatprep.subr.bf16.mxu0 0
  %4820 = vmatpush2.bf16.msra.mxu0 0
  %4821 = vmatprep.subr.bf16.mxu0 0
  %4822 = vmatpush2.bf16.msra.mxu0 0
  %4823 = vmatprep.subr.bf16.mxu0 0
  %4824 = vmatpush2.bf16.msra.mxu0 0
  %4825 = vmatprep.subr.bf16.mxu0 0
  %4826 = vmatpush2.bf16.msra.mxu0 0
  %4827 = vmatprep.mubr.bf16.mxu0 0
  %4828 = vmatmul.mubr.bf16.gmra.mxu0 %v4739
  %v4829 = vpop.f32.mrf.mxu0
  %v4830 = vadd.f32 %v4721, %v4829
  %v4831 = vpop.f32.mrf.mxu0
  %v4832 = vpop.f32.mrf.mxu0
  %v4833 = vadd.f32 %v4721, %v4832
  %v4834 = vpop.f32.mrf.mxu0
  %4835 = vmatprep.mubr.bf16.mxu0 0
  %4836 = vmatmul.mubr.bf16.gmra.mxu0 %v4740
  %v4837 = vpop.f32.mrf.mxu0
  %v4838 = vadd.f32 %v4721, %v4837
  %v4839 = vpop.f32.mrf.mxu0
  %v4840 = vpop.f32.mrf.mxu0
  %v4841 = vadd.f32 %v4721, %v4840
  %v4842 = vpop.f32.mrf.mxu0
  %4843 = vmatprep.mubr.bf16.mxu0 0
  %4844 = vmatmul.mubr.bf16.gmra.mxu0 %v4741
  %v4845 = vpop.f32.mrf.mxu0
  %v4846 = vadd.f32 %v4721, %v4845
  %v4847 = vpop.f32.mrf.mxu0
  %v4848 = vpop.f32.mrf.mxu0
  %v4849 = vadd.f32 %v4721, %v4848
  %v4850 = vpop.f32.mrf.mxu0
  %4851 = vmatprep.mubr.bf16.mxu0 0
  %4852 = vmatmul.mubr.bf16.gmra.mxu0 %v4742
  %v4853 = vpop.f32.mrf.mxu0
  %v4854 = vadd.f32 %v4721, %v4853
  %v4855 = vpop.f32.mrf.mxu0
  %v4856 = vpop.f32.mrf.mxu0
  %v4857 = vadd.f32 %v4721, %v4856
  %v4858 = vpop.f32.mrf.mxu0
  %4859 = vdwg.mxu0
  %4860 = vst [vmem:[%s6] sm:$0xff] %v4830
  %4861 = vst [vmem:[%s6 + $0x8] sm:$0xff] %v4833
  %4862 = vst [vmem:[%s6 + $0x10] sm:$0xff] %v4838
  %4863 = vst [vmem:[%s6 + $0x18] sm:$0xff] %v4841
  %4864 = vst [vmem:[%s6 + $0x20] sm:$0xff] %v4846
  %4865 = vst [vmem:[%s6 + $0x28] sm:$0xff] %v4849
  %4866 = vst [vmem:[%s6 + $0x30] sm:$0xff] %v4854
  %4867 = vst [vmem:[%s6 + $0x38] sm:$0xff] %v4857
  // Predicated region
  $region26: #{rnn_lm_forward.1} parent=0 // pred_check
    _
  $region27: #{rnn_lm_forward.1} parent=0 // pred_check_branch
    %4869 = sbr.rel (0) target = $region29
  $region28: #{rnn_lm_forward.1} parent=0 // pred_region
    _
  $region29: #{rnn_lm_forward.1} parent=0 // pred_fallthru
    _
  // Predicated region
  $region30: #{rnn_lm_forward.1} parent=0 // pred_check
    _
  $region31: #{rnn_lm_forward.1} parent=0 // pred_check_branch
    %4871 = sbr.rel (0) target = $region33
  $region32: #{rnn_lm_forward.1} parent=0 // pred_region
    _
  $region33: #{rnn_lm_forward.1} parent=0 // pred_fallthru
    _

</llo_original>
